<compile_context>
chip_gen: v6e
topology: v6e:2x2x1
jax: 0.10.0
libtpu: 0.0.40
codegen_flags: <defaults>
</compile_context>

<pallas_src>
import functools

import jax
import jax.numpy as jnp
from jax import lax
from jax.experimental import pallas as pl
from jax.experimental.pallas import tpu as pltpu

L = 8        # sequence length (N == 1 per module forward)
E = 32       # embedding / model dim
VOCAB = 32   # vocabulary size
TB = 32      # sequences per grid step -> TB*L = 256 rows per MXU pass


def _fused_kernel(ids_ref,      # VMEM : (TB*L, 1) int32 token ids (this step)
                  table_ref,    # VMEM : (VOCAB, E) embedding table       (resident)
                  wqkv_ref,     # VMEM : (E, 3E)  [wq.T*scale | wk.T | wv.T]
                  bqkv_ref,     # VMEM : (1, 3E)  [bq*scale   | bk   | bv  ]
                  wot_ref,      # VMEM : (E, E)   wo.T
                  bo_ref,       # VMEM : (1, E)
                  lb_ref,       # VMEM : (1, TB*L) final linear bias tiled TB times
                  mask_ref,     # VMEM : (TB*L, TB*L) block-diagonal additive mask
                  out_ref):     # VMEM : (1, 1, TB*L) lane-dense output row
    tbl = ids_ref.shape[0]      # TB * L (static)

    # ---- embedding gather: vectorized one-hot + one MXU matmul ---------------
    vocab_iota = lax.broadcasted_iota(jnp.int32, (tbl, VOCAB), 1)
    onehot = (vocab_iota == ids_ref[...]).astype(jnp.float32)          # (TBL, VOCAB)
    e = jnp.dot(onehot, table_ref[...],
                preferred_element_type=jnp.float32)                    # (TBL, E)

    # ---- fused q/k/v projection: single (TBL,E) x (E,3E) MXU pass ------------
    qkv = jnp.dot(e, wqkv_ref[...],
                  preferred_element_type=jnp.float32) + bqkv_ref[...]  # (TBL, 3E)
    q = qkv[:, 0 * E:1 * E]     # already scaled by 1/sqrt(E)
    k = qkv[:, 1 * E:2 * E]
    v = qkv[:, 2 * E:3 * E]

    # ---- one big scores matmul + block-diagonal mask (per-sequence attention) -
    s = lax.dot_general(q, k, (((1,), (1,)), ((), ())),
                        preferred_element_type=jnp.float32)            # (TBL, TBL)
    s = s + mask_ref[...]                                              # -1e30 off-block

    # row softmax; off-block entries underflow to exactly 0
    m = jnp.max(s, axis=-1, keepdims=True)
    p = jnp.exp(s - m)
    denom = jnp.sum(p, axis=-1, keepdims=True)
    w = p * pl.reciprocal(denom, approx=True)                          # (TBL, TBL)

    ctx = jnp.dot(w, v, preferred_element_type=jnp.float32)            # (TBL, E)
    attn = jnp.dot(ctx, wot_ref[...],
                   preferred_element_type=jnp.float32) + bo_ref[...]   # (TBL, E)

    # AdaptiveAvgPool1d(1) + Flatten -> per-position mean over E
    flat = jnp.mean(attn, axis=-1, keepdims=True)                      # (TBL, 1)

    # self.linear.weight = flatten(weights.permute(1,2,0)) == w (per sequence, N==1)
    # out[j] = sum_i w[j, i] * flat[i] + bias[j]; block-diagonal w keeps it per-seq.
    out_col = jnp.dot(w, flat, preferred_element_type=jnp.float32)     # (TBL, 1)
    # single XLU transpose per step -> lane-dense (1, TBL) store
    out_ref[...] = (out_col.T + lb_ref[...])[None]                     # (1, 1, TBL)


def prepare_operands(params, tb=TB):
    """One-time layout plumbing (NOT in the per-call jitted path)."""
    scale = float(E) ** -0.5
    tbl = tb * L
    w_qkv = jnp.concatenate(
        [params["wq"].T * scale, params["wk"].T, params["wv"].T], axis=1)  # (E, 3E)
    b_qkv = jnp.concatenate(
        [params["bq"] * scale, params["bk"], params["bv"]], axis=1)        # (1, 3E)
    # block-diagonal additive mask: 0 within each per-sequence LxL block, -1e30 off
    r = lax.broadcasted_iota(jnp.int32, (tbl, tbl), 0) // L
    c = lax.broadcasted_iota(jnp.int32, (tbl, tbl), 1) // L
    mask = jnp.where(r == c, 0.0, -1e30).astype(jnp.float32)               # (TBL, TBL)
    return {
        "table": params["emb_table"],
        "w_qkv": w_qkv,
        "b_qkv": b_qkv,
        "wo_t": params["wo"].T,
        "bo": params["bo"],
        "lb_tiled": jnp.tile(params["linear_bias"], (1, tb)),              # (1, TBL)
        "mask": mask,
    }


@functools.partial(jax.jit, static_argnames=("tb",))
def custom_attention(x, ops, tb=TB):
    """Batched CustomAttention forward.

    x   : int32 token ids of shape (B, L) -- B independent (N=1, L) module calls.
    ops : output of prepare_operands(params).
    Returns float32 (B, L); row b is the module output for sequence b.
    """
    B = x.shape[0]
    tbl = tb * L
    num_steps = pl.cdiv(B, tb)
    padded_b = num_steps * tb

    ids = x.astype(jnp.int32)
    if padded_b != B:
        ids = jnp.concatenate(
            [ids, jnp.zeros((padded_b - B, L), jnp.int32)], axis=0)
    ids_col = ids.reshape(padded_b * L, 1)                # (num_steps*TBL, 1)

    grid_spec = pltpu.PrefetchScalarGridSpec(
        num_scalar_prefetch=0,
        grid=(num_steps,),
        in_specs=[
            pl.BlockSpec((tbl, 1), lambda s: (s, 0)),          # token ids (per step)
            pl.BlockSpec((VOCAB, E), lambda s: (0, 0)),        # table     (resident)
            pl.BlockSpec((E, 3 * E), lambda s: (0, 0)),        # fused qkv weights
            pl.BlockSpec((1, 3 * E), lambda s: (0, 0)),        # fused qkv biases
            pl.BlockSpec((E, E), lambda s: (0, 0)),            # wo.T
            pl.BlockSpec((1, E), lambda s: (0, 0)),            # bo
            pl.BlockSpec((1, tbl), lambda s: (0, 0)),          # tiled final bias
            pl.BlockSpec((tbl, tbl), lambda s: (0, 0)),        # block-diag mask
        ],
        out_specs=pl.BlockSpec((1, 1, tbl), lambda s: (s, 0, 0)),
    )

    out = pl.pallas_call(
        _fused_kernel,
        out_shape=jax.ShapeDtypeStruct((num_steps, 1, tbl), jnp.float32),
        grid_spec=grid_spec,
        compiler_params=pltpu.CompilerParams(
            dimension_semantics=("parallel",)),   # 2-TC sharding on v7x
    )(ids_col, ops["table"], ops["w_qkv"], ops["b_qkv"], ops["wo_t"],
      ops["bo"], ops["lb_tiled"], ops["mask"])

    return out.reshape(padded_b, L)[:B]


def _reference_single(ids, params):
    """Pure-JAX reproduction of the PyTorch forward for one (N=1, L) sequence."""
    emb = params["emb_table"][ids]                              # (L, E)
    q = emb @ params["wq"].T + params["bq"][0]
    k = emb @ params["wk"].T + params["bk"][0]
    v = emb @ params["wv"].T + params["bv"][0]
    s = (q @ k.T) * (float(E) ** -0.5)
    w = jax.nn.softmax(s, axis=-1)
    attn = (w @ v) @ params["wo"].T + params["bo"][0]
    flat = jnp.mean(attn, axis=-1)                              # (L,)
    return w @ flat + params["linear_bias"][0]                  # (L,)


def reference(x, params):
    return jax.vmap(lambda ids: _reference_single(ids, params))(x)


if __name__ == "__main__":
    key = jax.random.PRNGKey(0)
    ks = jax.random.split(key, 12)
    B = 64   # batch of independent forward calls amortizing dispatch/DMA cost

    params = {
        "emb_table": 0.1 * jax.random.normal(ks[0], (VOCAB, E), jnp.float32),
        "wq": 0.1 * jax.random.normal(ks[1], (E, E), jnp.float32),
        "wk": 0.1 * jax.random.normal(ks[2], (E, E), jnp.float32),
        "wv": 0.1 * jax.random.normal(ks[3], (E, E), jnp.float32),
        "wo": 0.1 * jax.random.normal(ks[4], (E, E), jnp.float32),
        "bq": 0.01 * jax.random.normal(ks[5], (1, E), jnp.float32),
        "bk": 0.01 * jax.random.normal(ks[6], (1, E), jnp.float32),
        "bv": 0.01 * jax.random.normal(ks[7], (1, E), jnp.float32),
        "bo": 0.01 * jax.random.normal(ks[8], (1, E), jnp.float32),
        "linear_bias": 0.01 * jax.random.normal(ks[9], (1, L), jnp.float32),
    }
    x = jax.random.randint(ks[10], (B, L), 0, VOCAB, dtype=jnp.int32)

    ops = prepare_operands(params)            # one-time weight fusion / mask build
    out = custom_attention(x, ops)
    jax.block_until_ready(out)

    ref = reference(x, params)
    assert out.shape == (B, L), out.shape
    # 1e-3 tolerance: the in-kernel softmax uses the EUP approximate reciprocal.
    assert jnp.allclose(out, ref, atol=1e-3, rtol=1e-3), (out, ref)
    print("KERNEL_OK")
</pallas_src>

<mosaic_0001>
module attributes {stable_mosaic.version = 11 : i64} {
  func.func @_fused_kernel(%arg0: i32, %arg1: memref<256x1xi32, #tpu.memory_space<vmem>>, %arg2: memref<32x32xf32, #tpu.memory_space<vmem>>, %arg3: memref<32x96xf32, #tpu.memory_space<vmem>>, %arg4: memref<1x96xf32, #tpu.memory_space<vmem>>, %arg5: memref<32x32xf32, #tpu.memory_space<vmem>>, %arg6: memref<1x32xf32, #tpu.memory_space<vmem>>, %arg7: memref<1x256xf32, #tpu.memory_space<vmem>>, %arg8: memref<256x256xf32, #tpu.memory_space<vmem>>, %arg9: memref<1x1x256xf32, #tpu.memory_space<vmem>>) attributes {dimension_semantics = [#tpu.dimension_semantics<parallel>], iteration_bounds = array<i64: 2>, scalar_prefetch = 0 : i64, scratch_operands = 0 : i64, tpu.core_type = #tpu.core_type<tc>, window_params = [{transform_indices = @transform_0, window_bounds = array<i64: 256, 1>}, {pipeline_mode = #tpu.pipeline_mode<synchronous>, transform_indices = @transform_1, window_bounds = array<i64: 32, 32>}, {pipeline_mode = #tpu.pipeline_mode<synchronous>, transform_indices = @transform_2, window_bounds = array<i64: 32, 96>}, {pipeline_mode = #tpu.pipeline_mode<synchronous>, transform_indices = @transform_3, window_bounds = array<i64: 1, 96>}, {pipeline_mode = #tpu.pipeline_mode<synchronous>, transform_indices = @transform_4, window_bounds = array<i64: 32, 32>}, {pipeline_mode = #tpu.pipeline_mode<synchronous>, transform_indices = @transform_5, window_bounds = array<i64: 1, 32>}, {pipeline_mode = #tpu.pipeline_mode<synchronous>, transform_indices = @transform_6, window_bounds = array<i64: 1, 256>}, {pipeline_mode = #tpu.pipeline_mode<synchronous>, transform_indices = @transform_7, window_bounds = array<i64: 256, 256>}, {transform_indices = @transform_8, window_bounds = array<i64: 1, 1, 256>}]} {
    %0 = tpu.iota {dimensions = array<i32: 1>} : vector<256x32xi32>
    %c0 = arith.constant 0 : index
    %c0_0 = arith.constant 0 : index
    %1 = vector.load %arg1[%c0, %c0_0] : memref<256x1xi32, #tpu.memory_space<vmem>>, vector<256x1xi32>
    %2 = vector.broadcast %1 : vector<256x1xi32> to vector<256x32xi32>
    %3 = arith.cmpi eq, %0, %2 : vector<256x32xi32>
    %4 = arith.extui %3 : vector<256x32xi1> to vector<256x32xi32>
    %5 = arith.sitofp %4 : vector<256x32xi32> to vector<256x32xf32>
    %c0_1 = arith.constant 0 : index
    %c0_2 = arith.constant 0 : index
    %6 = vector.load %arg2[%c0_1, %c0_2] : memref<32x32xf32, #tpu.memory_space<vmem>>, vector<32x32xf32>
    %cst = arith.constant dense<0.000000e+00> : vector<256x32xf32>
    %7 = tpu.matmul %5, %6, %cst {dimension_numbers = #tpu.dot_dimension_numbers<[1], [0], [0], [1], [0, 0, 1, 1], [], []>} : vector<256x32xf32>, vector<32x32xf32>, vector<256x32xf32> -> vector<256x32xf32>
    %c0_3 = arith.constant 0 : index
    %c0_4 = arith.constant 0 : index
    %8 = vector.load %arg3[%c0_3, %c0_4] : memref<32x96xf32, #tpu.memory_space<vmem>>, vector<32x96xf32>
    %cst_5 = arith.constant dense<0.000000e+00> : vector<256x96xf32>
    %9 = tpu.matmul %7, %8, %cst_5 {dimension_numbers = #tpu.dot_dimension_numbers<[1], [0], [0], [1], [0, 0, 1, 1], [], []>} : vector<256x32xf32>, vector<32x96xf32>, vector<256x96xf32> -> vector<256x96xf32>
    %c0_6 = arith.constant 0 : index
    %c0_7 = arith.constant 0 : index
    %10 = vector.load %arg4[%c0_6, %c0_7] : memref<1x96xf32, #tpu.memory_space<vmem>>, vector<1x96xf32>
    %11 = vector.broadcast %10 : vector<1x96xf32> to vector<256x96xf32>
    %12 = arith.addf %9, %11 : vector<256x96xf32>
    %13 = vector.extract_strided_slice %12 {offsets = [0, 0], sizes = [256, 32], strides = [1, 1]} : vector<256x96xf32> to vector<256x32xf32>
    %14 = vector.extract_strided_slice %12 {offsets = [0, 32], sizes = [256, 32], strides = [1, 1]} : vector<256x96xf32> to vector<256x32xf32>
    %15 = vector.extract_strided_slice %12 {offsets = [0, 64], sizes = [256, 32], strides = [1, 1]} : vector<256x96xf32> to vector<256x32xf32>
    %cst_8 = arith.constant dense<0.000000e+00> : vector<256x256xf32>
    %16 = tpu.matmul %13, %14, %cst_8 {dimension_numbers = #tpu.dot_dimension_numbers<[1], [1], [0], [0], [0, 0, 1, 0], [], []>} : vector<256x32xf32>, vector<256x32xf32>, vector<256x256xf32> -> vector<256x256xf32>
    %c0_9 = arith.constant 0 : index
    %c0_10 = arith.constant 0 : index
    %17 = vector.load %arg8[%c0_9, %c0_10] : memref<256x256xf32, #tpu.memory_space<vmem>>, vector<256x256xf32>
    %18 = arith.addf %16, %17 : vector<256x256xf32>
    %cst_11 = arith.constant dense<0xFF800000> : vector<256xf32>
    %19 = vector.multi_reduction <maximumf>, %18, %cst_11 [1] : vector<256x256xf32> to vector<256xf32>
    %20 = vector.shape_cast %19 : vector<256xf32> to vector<256x1xf32>
    %21 = vector.broadcast %20 : vector<256x1xf32> to vector<256x256xf32>
    %22 = arith.subf %18, %21 : vector<256x256xf32>
    %23 = math.exp %22 : vector<256x256xf32>
    %cst_12 = arith.constant dense<0.000000e+00> : vector<256xf32>
    %24 = vector.multi_reduction <add>, %23, %cst_12 [1] : vector<256x256xf32> to vector<256xf32>
    %25 = vector.shape_cast %24 : vector<256xf32> to vector<256x1xf32>
    %26 = tpu.reciprocal %25 {approx = true} : vector<256x1xf32> -> vector<256x1xf32>
    %27 = vector.broadcast %26 : vector<256x1xf32> to vector<256x256xf32>
    %28 = arith.mulf %23, %27 : vector<256x256xf32>
    %cst_13 = arith.constant dense<0.000000e+00> : vector<256x32xf32>
    %29 = tpu.matmul %28, %15, %cst_13 {dimension_numbers = #tpu.dot_dimension_numbers<[1], [0], [0], [1], [0, 0, 1, 1], [], []>} : vector<256x256xf32>, vector<256x32xf32>, vector<256x32xf32> -> vector<256x32xf32>
    %c0_14 = arith.constant 0 : index
    %c0_15 = arith.constant 0 : index
    %30 = vector.load %arg5[%c0_14, %c0_15] : memref<32x32xf32, #tpu.memory_space<vmem>>, vector<32x32xf32>
    %cst_16 = arith.constant dense<0.000000e+00> : vector<256x32xf32>
    %31 = tpu.matmul %29, %30, %cst_16 {dimension_numbers = #tpu.dot_dimension_numbers<[1], [0], [0], [1], [0, 0, 1, 1], [], []>} : vector<256x32xf32>, vector<32x32xf32>, vector<256x32xf32> -> vector<256x32xf32>
    %c0_17 = arith.constant 0 : index
    %c0_18 = arith.constant 0 : index
    %32 = vector.load %arg6[%c0_17, %c0_18] : memref<1x32xf32, #tpu.memory_space<vmem>>, vector<1x32xf32>
    %33 = vector.broadcast %32 : vector<1x32xf32> to vector<256x32xf32>
    %34 = arith.addf %31, %33 : vector<256x32xf32>
    %cst_19 = arith.constant dense<0.000000e+00> : vector<256xf32>
    %35 = vector.multi_reduction <add>, %34, %cst_19 [1] : vector<256x32xf32> to vector<256xf32>
    %36 = vector.shape_cast %35 : vector<256xf32> to vector<256x1xf32>
    %cst_20 = arith.constant 3.200000e+01 : f32
    %37 = vector.broadcast %cst_20 : f32 to vector<256x1xf32>
    %38 = arith.divf %36, %37 : vector<256x1xf32>
    %cst_21 = arith.constant dense<0.000000e+00> : vector<256x1xf32>
    %39 = tpu.matmul %28, %38, %cst_21 {dimension_numbers = #tpu.dot_dimension_numbers<[1], [0], [0], [1], [0, 0, 1, 1], [], []>} : vector<256x256xf32>, vector<256x1xf32>, vector<256x1xf32> -> vector<256x1xf32>
    %40 = tpu.transpose %39, [1, 0] : vector<256x1xf32> -> vector<1x256xf32>
    %c0_22 = arith.constant 0 : index
    %c0_23 = arith.constant 0 : index
    %41 = vector.load %arg7[%c0_22, %c0_23] : memref<1x256xf32, #tpu.memory_space<vmem>>, vector<1x256xf32>
    %42 = arith.addf %40, %41 : vector<1x256xf32>
    %43 = vector.shape_cast %42 : vector<1x256xf32> to vector<1x1x256xf32>
    %c0_24 = arith.constant 0 : index
    %c0_25 = arith.constant 0 : index
    %c0_26 = arith.constant 0 : index
    %44 = vector.load %arg9[%c0_24, %c0_25, %c0_26] : memref<1x1x256xf32, #tpu.memory_space<vmem>>, vector<1x1x256xf32>
    tpu.vector_store %arg9[%c0_24, %c0_25, %c0_26], %43 {strides = array<i32>} : memref<1x1x256xf32, #tpu.memory_space<vmem>>, vector<1x1x256xf32>,
    return
  }
  func.func @transform_0(%arg0: i32) -> (i32, i32) {
    %c0_i32 = arith.constant 0 : i32
    %c0_i32_0 = arith.constant 0 : i32
    return %arg0, %c0_i32 : i32, i32
  }
  func.func @transform_1(%arg0: i32) -> (i32, i32) {
    %c0_i32 = arith.constant 0 : i32
    %c0_i32_0 = arith.constant 0 : i32
    %c0_i32_1 = arith.constant 0 : i32
    return %c0_i32, %c0_i32_0 : i32, i32
  }
  func.func @transform_2(%arg0: i32) -> (i32, i32) {
    %c0_i32 = arith.constant 0 : i32
    %c0_i32_0 = arith.constant 0 : i32
    %c0_i32_1 = arith.constant 0 : i32
    return %c0_i32, %c0_i32_0 : i32, i32
  }
  func.func @transform_3(%arg0: i32) -> (i32, i32) {
    %c0_i32 = arith.constant 0 : i32
    %c0_i32_0 = arith.constant 0 : i32
    %c0_i32_1 = arith.constant 0 : i32
    return %c0_i32, %c0_i32_0 : i32, i32
  }
  func.func @transform_4(%arg0: i32) -> (i32, i32) {
    %c0_i32 = arith.constant 0 : i32
    %c0_i32_0 = arith.constant 0 : i32
    %c0_i32_1 = arith.constant 0 : i32
    return %c0_i32, %c0_i32_0 : i32, i32
  }
  func.func @transform_5(%arg0: i32) -> (i32, i32) {
    %c0_i32 = arith.constant 0 : i32
    %c0_i32_0 = arith.constant 0 : i32
    %c0_i32_1 = arith.constant 0 : i32
    return %c0_i32, %c0_i32_0 : i32, i32
  }
  func.func @transform_6(%arg0: i32) -> (i32, i32) {
    %c0_i32 = arith.constant 0 : i32
    %c0_i32_0 = arith.constant 0 : i32
    %c0_i32_1 = arith.constant 0 : i32
    return %c0_i32, %c0_i32_0 : i32, i32
  }
  func.func @transform_7(%arg0: i32) -> (i32, i32) {
    %c0_i32 = arith.constant 0 : i32
    %c0_i32_0 = arith.constant 0 : i32
    %c0_i32_1 = arith.constant 0 : i32
    return %c0_i32, %c0_i32_0 : i32, i32
  }
  func.func @transform_8(%arg0: i32) -> (i32, i32, i32) {
    %c0_i32 = arith.constant 0 : i32
    %c0_i32_0 = arith.constant 0 : i32
    %c0_i32_1 = arith.constant 0 : i32
    return %arg0, %c0_i32, %c0_i32_0 : i32, i32, i32
  }
}

</mosaic_0001>

<llo_original>
// kernel: custom_attention.1
$region0: #{custom_attention.1}
  #allocation0 [shape = 'u32[]', space=smem, size = 0x4, offset = 0x4, fixed_abs, tag = 'smem constant byte address 0x4 - core index']
  #allocation1 [shape = 'u32[144,128]{1,0:T(1,128)}', space=vmem, size = 0x12000, scoped, tag = 'internal scratch']
  %s0 = inlined_call_operand.vmem [shape: s32[512,1], index: 0, kind: input, shape index: {}]
  %s1 = inlined_call_operand.vmem [shape: f32[32,32], index: 1, kind: input, shape index: {}]
  %s2 = inlined_call_operand.vmem [shape: f32[32,96], index: 2, kind: input, shape index: {}]
  %s3 = inlined_call_operand.vmem [shape: f32[1,96], index: 3, kind: input, shape index: {}]
  %s4 = inlined_call_operand.vmem [shape: f32[32,32], index: 4, kind: input, shape index: {}]
  %s5 = inlined_call_operand.vmem [shape: f32[1,32], index: 5, kind: input, shape index: {}]
  %s6 = inlined_call_operand.vmem [shape: f32[1,256], index: 6, kind: input, shape index: {}]
  %s7 = inlined_call_operand.vmem [shape: f32[256,256], index: 7, kind: input, shape index: {}]
  %s8 = inlined_call_operand.vmem [shape: f32[2,1,256], index: 8, kind: output, shape index: {}]
  %s9 = sld [smem:[#allocation0]]
  $region65: #{custom_attention.1} parent=0
    _
  %s11 = ssub.s32 1, %s9
  %s12 = scalar_select 0, %s11, %s9
  loop: start=0, step=1, limit=4
  $region2: #{custom_attention.1} parent=0 // loop_pre_header
    _
  $region3: #{custom_attention.1} parent=0 // loop_header
    %s14 = sphi 0, %s18
    %p15 = scmp.ge.s32.totalorder %s14, 4
    %s24 = sphi 0, %s26
    %s27 = sphi 0, %s24
    %s28 = sphi 0, %s27
    %s44 = sphi 0, %s28
    %s48 = sphi 0, %s48
    %s50 = sphi 0, %s48
    %s51 = sphi 0, %s50
    %s65 = sphi 0, %s51
    %s69 = sphi 0, %s69
    %s71 = sphi 0, %s69
    %s72 = sphi 0, %s71
    %s86 = sphi 0, %s72
    %s90 = sphi 0, %s90
    %s92 = sphi 0, %s90
    %s93 = sphi 0, %s92
    %s107 = sphi 0, %s93
    %s111 = sphi 0, %s111
    %s113 = sphi 0, %s111
    %s114 = sphi 0, %s113
    %s128 = sphi 0, %s114
    %s132 = sphi 0, %s132
    %s134 = sphi 0, %s132
    %s135 = sphi 0, %s134
    %s149 = sphi 0, %s135
    %s153 = sphi 0, %s153
    %s155 = sphi 0, %s153
    %s156 = sphi 0, %s155
    %s170 = sphi 0, %s156
    %s174 = sphi 0, %s174
    %s176 = sphi 0, %s174
    %s177 = sphi 0, %s176
    %s191 = sphi 0, %s177
    %s197 = sphi 0, %s199
    %s200 = sphi 0, %s197
    %s201 = sphi 0, %s200
    %s217 = sphi 0, %s201
  $region4: #{custom_attention.1} parent=0 // loop_header_branch
    %17 = sbr.rel (%p15) target = $region8
  $region5: #{custom_attention.1} parent=0 // loop_body
    %s19 = ssub.s32 %s14, 1
    %s20 = ssub.s32 %s14, 2
    %s21 = sadd.s32 %s14, 1
    %s22 = ssub.s32 %s14, %s21
    %p23 = scmp.eq.s32.totalorder %s22, 0
    %s25 = sadd.s32 %s24, 1
    %s26 = scalar_select %p23, %s24, %s25
    %p29 = pneg %p23
    %p30 = scmp.eq.s32.totalorder %s14, 1
    %p31 = por %p29, %p30
    %p32 = scmp.ne.s32.totalorder %s24, %s27
    %p33 = scmp.eq.s32.totalorder %s14, 0
    %p34 = por %p32, %p33
    %p35 = scmp.ne.s32.totalorder %s24, %s27
    %p36 = scmp.eq.s32.totalorder %s19, 1
    %p37 = por %p35, %p36
    %p38 = scmp.ne.s32.totalorder %s27, %s28
    %p39 = scmp.eq.s32.totalorder %s19, 0
    %p40 = por %p38, %p39
    %p41 = scmp.ne.s32.totalorder %s27, %s28
    %p42 = scmp.eq.s32.totalorder %s20, 1
    %p43 = por %p41, %p42
    %p45 = scmp.ne.s32.totalorder %s28, %s44
    %p46 = scmp.eq.s32.totalorder %s20, 0
    %p47 = por %p45, %p46
    %s49 = sadd.s32 %s48, 1
    %p52 = scmp.eq.s32.totalorder %s14, 1
    %p53 = scmp.ne.s32.totalorder %s48, %s50
    %p54 = scmp.eq.s32.totalorder %s14, 0
    %p55 = por %p53, %p54
    %p56 = scmp.ne.s32.totalorder %s48, %s50
    %p57 = scmp.eq.s32.totalorder %s19, 1
    %p58 = por %p56, %p57
    %p59 = scmp.ne.s32.totalorder %s50, %s51
    %p60 = scmp.eq.s32.totalorder %s19, 0
    %p61 = por %p59, %p60
    %p62 = scmp.ne.s32.totalorder %s50, %s51
    %p63 = scmp.eq.s32.totalorder %s20, 1
    %p64 = por %p62, %p63
    %p66 = scmp.ne.s32.totalorder %s51, %s65
    %p67 = scmp.eq.s32.totalorder %s20, 0
    %p68 = por %p66, %p67
    %s70 = sadd.s32 %s69, 1
    %p73 = scmp.eq.s32.totalorder %s14, 1
    %p74 = scmp.ne.s32.totalorder %s69, %s71
    %p75 = scmp.eq.s32.totalorder %s14, 0
    %p76 = por %p74, %p75
    %p77 = scmp.ne.s32.totalorder %s69, %s71
    %p78 = scmp.eq.s32.totalorder %s19, 1
    %p79 = por %p77, %p78
    %p80 = scmp.ne.s32.totalorder %s71, %s72
    %p81 = scmp.eq.s32.totalorder %s19, 0
    %p82 = por %p80, %p81
    %p83 = scmp.ne.s32.totalorder %s71, %s72
    %p84 = scmp.eq.s32.totalorder %s20, 1
    %p85 = por %p83, %p84
    %p87 = scmp.ne.s32.totalorder %s72, %s86
    %p88 = scmp.eq.s32.totalorder %s20, 0
    %p89 = por %p87, %p88
    %s91 = sadd.s32 %s90, 1
    %p94 = scmp.eq.s32.totalorder %s14, 1
    %p95 = scmp.ne.s32.totalorder %s90, %s92
    %p96 = scmp.eq.s32.totalorder %s14, 0
    %p97 = por %p95, %p96
    %p98 = scmp.ne.s32.totalorder %s90, %s92
    %p99 = scmp.eq.s32.totalorder %s19, 1
    %p100 = por %p98, %p99
    %p101 = scmp.ne.s32.totalorder %s92, %s93
    %p102 = scmp.eq.s32.totalorder %s19, 0
    %p103 = por %p101, %p102
    %p104 = scmp.ne.s32.totalorder %s92, %s93
    %p105 = scmp.eq.s32.totalorder %s20, 1
    %p106 = por %p104, %p105
    %p108 = scmp.ne.s32.totalorder %s93, %s107
    %p109 = scmp.eq.s32.totalorder %s20, 0
    %p110 = por %p108, %p109
    %s112 = sadd.s32 %s111, 1
    %p115 = scmp.eq.s32.totalorder %s14, 1
    %p116 = scmp.ne.s32.totalorder %s111, %s113
    %p117 = scmp.eq.s32.totalorder %s14, 0
    %p118 = por %p116, %p117
    %p119 = scmp.ne.s32.totalorder %s111, %s113
    %p120 = scmp.eq.s32.totalorder %s19, 1
    %p121 = por %p119, %p120
    %p122 = scmp.ne.s32.totalorder %s113, %s114
    %p123 = scmp.eq.s32.totalorder %s19, 0
    %p124 = por %p122, %p123
    %p125 = scmp.ne.s32.totalorder %s113, %s114
    %p126 = scmp.eq.s32.totalorder %s20, 1
    %p127 = por %p125, %p126
    %p129 = scmp.ne.s32.totalorder %s114, %s128
    %p130 = scmp.eq.s32.totalorder %s20, 0
    %p131 = por %p129, %p130
    %s133 = sadd.s32 %s132, 1
    %p136 = scmp.eq.s32.totalorder %s14, 1
    %p137 = scmp.ne.s32.totalorder %s132, %s134
    %p138 = scmp.eq.s32.totalorder %s14, 0
    %p139 = por %p137, %p138
    %p140 = scmp.ne.s32.totalorder %s132, %s134
    %p141 = scmp.eq.s32.totalorder %s19, 1
    %p142 = por %p140, %p141
    %p143 = scmp.ne.s32.totalorder %s134, %s135
    %p144 = scmp.eq.s32.totalorder %s19, 0
    %p145 = por %p143, %p144
    %p146 = scmp.ne.s32.totalorder %s134, %s135
    %p147 = scmp.eq.s32.totalorder %s20, 1
    %p148 = por %p146, %p147
    %p150 = scmp.ne.s32.totalorder %s135, %s149
    %p151 = scmp.eq.s32.totalorder %s20, 0
    %p152 = por %p150, %p151
    %s154 = sadd.s32 %s153, 1
    %p157 = scmp.eq.s32.totalorder %s14, 1
    %p158 = scmp.ne.s32.totalorder %s153, %s155
    %p159 = scmp.eq.s32.totalorder %s14, 0
    %p160 = por %p158, %p159
    %p161 = scmp.ne.s32.totalorder %s153, %s155
    %p162 = scmp.eq.s32.totalorder %s19, 1
    %p163 = por %p161, %p162
    %p164 = scmp.ne.s32.totalorder %s155, %s156
    %p165 = scmp.eq.s32.totalorder %s19, 0
    %p166 = por %p164, %p165
    %p167 = scmp.ne.s32.totalorder %s155, %s156
    %p168 = scmp.eq.s32.totalorder %s20, 1
    %p169 = por %p167, %p168
    %p171 = scmp.ne.s32.totalorder %s156, %s170
    %p172 = scmp.eq.s32.totalorder %s20, 0
    %p173 = por %p171, %p172
    %s175 = sadd.s32 %s174, 1
    %p178 = scmp.eq.s32.totalorder %s14, 1
    %p179 = scmp.ne.s32.totalorder %s174, %s176
    %p180 = scmp.eq.s32.totalorder %s14, 0
    %p181 = por %p179, %p180
    %p182 = scmp.ne.s32.totalorder %s174, %s176
    %p183 = scmp.eq.s32.totalorder %s19, 1
    %p184 = por %p182, %p183
    %p185 = scmp.ne.s32.totalorder %s176, %s177
    %p186 = scmp.eq.s32.totalorder %s19, 0
    %p187 = por %p185, %p186
    %p188 = scmp.ne.s32.totalorder %s176, %s177
    %p189 = scmp.eq.s32.totalorder %s20, 1
    %p190 = por %p188, %p189
    %p192 = scmp.ne.s32.totalorder %s177, %s191
    %p193 = scmp.eq.s32.totalorder %s20, 0
    %p194 = por %p192, %p193
    %s195 = ssub.s32 %s14, %s21
    %p196 = scmp.eq.s32.totalorder %s195, 0
    %s198 = sadd.s32 %s197, 1
    %s199 = scalar_select %p196, %s197, %s198
    %p202 = pneg %p196
    %p203 = scmp.eq.s32.totalorder %s14, 1
    %p204 = por %p202, %p203
    %p205 = scmp.ne.s32.totalorder %s197, %s200
    %p206 = scmp.eq.s32.totalorder %s14, 0
    %p207 = por %p205, %p206
    %p208 = scmp.ne.s32.totalorder %s197, %s200
    %p209 = scmp.eq.s32.totalorder %s19, 1
    %p210 = por %p208, %p209
    %p211 = scmp.ne.s32.totalorder %s200, %s201
    %p212 = scmp.eq.s32.totalorder %s19, 0
    %p213 = por %p211, %p212
    %p214 = scmp.ne.s32.totalorder %s200, %s201
    %p215 = scmp.eq.s32.totalorder %s20, 1
    %p216 = por %p214, %p215
    %p218 = scmp.ne.s32.totalorder %s201, %s217
    %p219 = scmp.eq.s32.totalorder %s20, 0
    %p220 = por %p218, %p219
    %p221 = scmp.le.s32.totalorder 1, %s14
    %p222 = scmp.lt.s32.totalorder %s14, 3
    %p223 = pnand %p221, %p222
    %p224 = pneg %p223
    // Predicated region
    $region9: #{custom_attention.1} parent=5 // pred_check
      _
    $region10: #{custom_attention.1} parent=5 // pred_check_branch
      %226 = sbr.rel (%p223) target = $region12
    $region11: #{custom_attention.1} parent=5 // pred_region
      %s227 = ssub.s32 %s14, 1
      // Predicated region
      $region13: #{custom_attention.1} parent=11 // pred_check
        %p228 = pneg %p61
      $region14: #{custom_attention.1} parent=11 // pred_check_branch
        %230 = sbr.rel (%p228) target = $region16
      $region15: #{custom_attention.1} parent=11 // pred_region
        _
      $region16: #{custom_attention.1} parent=11 // pred_fallthru
        _
      // Predicated region
      $region17: #{custom_attention.1} parent=11 // pred_check
        %p231 = pneg %p82
      $region18: #{custom_attention.1} parent=11 // pred_check_branch
        %233 = sbr.rel (%p231) target = $region20
      $region19: #{custom_attention.1} parent=11 // pred_region
        _
      $region20: #{custom_attention.1} parent=11 // pred_fallthru
        _
      // Predicated region
      $region21: #{custom_attention.1} parent=11 // pred_check
        %p234 = pneg %p103
      $region22: #{custom_attention.1} parent=11 // pred_check_branch
        %236 = sbr.rel (%p234) target = $region24
      $region23: #{custom_attention.1} parent=11 // pred_region
        _
      $region24: #{custom_attention.1} parent=11 // pred_fallthru
        _
      // Predicated region
      $region25: #{custom_attention.1} parent=11 // pred_check
        %p237 = pneg %p124
      $region26: #{custom_attention.1} parent=11 // pred_check_branch
        %239 = sbr.rel (%p237) target = $region28
      $region27: #{custom_attention.1} parent=11 // pred_region
        _
      $region28: #{custom_attention.1} parent=11 // pred_fallthru
        _
      // Predicated region
      $region29: #{custom_attention.1} parent=11 // pred_check
        %p240 = pneg %p145
      $region30: #{custom_attention.1} parent=11 // pred_check_branch
        %242 = sbr.rel (%p240) target = $region32
      $region31: #{custom_attention.1} parent=11 // pred_region
        _
      $region32: #{custom_attention.1} parent=11 // pred_fallthru
        _
      // Predicated region
      $region33: #{custom_attention.1} parent=11 // pred_check
        %p243 = pneg %p166
      $region34: #{custom_attention.1} parent=11 // pred_check_branch
        %245 = sbr.rel (%p243) target = $region36
      $region35: #{custom_attention.1} parent=11 // pred_region
        _
      $region36: #{custom_attention.1} parent=11 // pred_fallthru
        _
      // Predicated region
      $region37: #{custom_attention.1} parent=11 // pred_check
        %p246 = pneg %p187
      $region38: #{custom_attention.1} parent=11 // pred_check_branch
        %248 = sbr.rel (%p246) target = $region40
      $region39: #{custom_attention.1} parent=11 // pred_region
        _
      $region40: #{custom_attention.1} parent=11 // pred_fallthru
        _
    $region12: #{custom_attention.1} parent=5 // pred_fallthru
      _
    %p249 = scmp.lt.s32.totalorder %s14, 2
    // Predicated region
    $region41: #{custom_attention.1} parent=5 // pred_check
      %p250 = pneg %p249
    $region42: #{custom_attention.1} parent=5 // pred_check_branch
      %252 = sbr.rel (%p250) target = $region44
    $region43: #{custom_attention.1} parent=5 // pred_region
      // Predicated region
      $region45: #{custom_attention.1} parent=43 // pred_check
        %p253 = pneg %p34
      $region46: #{custom_attention.1} parent=43 // pred_check_branch
        %255 = sbr.rel (%p253) target = $region48
      $region47: #{custom_attention.1} parent=43 // pred_region
        %s256 = smul.u32 32, %s14
        %p257 = scmp.lt.s32.totalorder %s256, 63
        %s258 = scalar_select %p257, %s256, 63
        %s259 = smul.addr %s258, 8
        %s260 = scalar_lea.vmem %s0, %s259
        %s261 = smul.u32 32, %s14
      $region48: #{custom_attention.1} parent=43 // pred_fallthru
        _
    $region44: #{custom_attention.1} parent=5 // pred_fallthru
      _
    %p262 = scmp.le.s32.totalorder 1, %s14
    %p263 = scmp.lt.s32.totalorder %s14, 3
    %p264 = pnand %p262, %p263
    %p265 = pneg %p264
    // Predicated region
    $region49: #{custom_attention.1} parent=5 // pred_check
      _
    $region50: #{custom_attention.1} parent=5 // pred_check_branch
      %267 = sbr.rel (%p264) target = $region52
    $region51: #{custom_attention.1} parent=5 // pred_region
      %s268 = ssub.s32 %s14, 1
      %s269 = smul.u32 32, %s19
      %p270 = scmp.lt.s32.totalorder %s269, 63
      %s271 = scalar_select %p270, %s269, 63
      %s272 = smul.addr %s271, 8
      %s273 = scalar_lea.vmem %s0, %s272
      %p274 = pneg %p40
      %p275 = pneg %p37
      %p276 = pneg %p61
      %p277 = pneg %p58
      %p278 = pneg %p82
      %p279 = pneg %p79
      %p280 = pneg %p103
      %p281 = pneg %p100
      %p282 = pneg %p124
      %p283 = pneg %p121
      %p284 = pneg %p145
      %p285 = pneg %p142
      %p286 = pneg %p166
      %p287 = pneg %p163
      %p288 = pneg %p187
      %p289 = pneg %p184
      %p290 = pneg %p213
      %p291 = pneg %p210
      %p292 = scmp.lt.s32.totalorder %s19, 1
      %s293 = scalar_select %p292, %s19, 1
      %s294 = smul.addr %s293, 2
      %s295 = scalar_lea.vmem %s8, %s294
      %s296 = smul.u32 32, %s19
      %p297 = scmp.lt.s32.totalorder %s296, 63
      %s298 = scalar_select %p297, %s296, 63
      %s299 = smul.addr %s298, 8
      %s300 = scalar_lea.vmem %s0, %s299
      %s301 = smul.u32 32, %s19
      %p302 = scmp.lt.s32.totalorder %s19, 1
      %s303 = scalar_select %p302, %s19, 1
      %s304 = smul.addr %s303, 2
      %s305 = scalar_lea.vmem %s8, %s304
      %v306 = vlaneseq
      %v307 = vand.u32 %v306, 127
      %v308 = vld [vmem:[%s300] sm:$0xff]
      %v309 = vld [vmem:[%s300 + $0x8] sm:$0xff]
      %v310 = vld [vmem:[%s300 + $0x10] sm:$0xff]
      %v311 = vld [vmem:[%s300 + $0x18] sm:$0xff]
      %v312 = vld [vmem:[%s300 + $0x20] sm:$0xff]
      %v313 = vld [vmem:[%s300 + $0x28] sm:$0xff]
      %v314 = vld [vmem:[%s300 + $0x30] sm:$0xff]
      %v315 = vld [vmem:[%s300 + $0x38] sm:$0xff]
      %v316 = vld [vmem:[%s300 + $0x40] sm:$0xff]
      %v317 = vld [vmem:[%s300 + $0x48] sm:$0xff]
      %v318 = vld [vmem:[%s300 + $0x50] sm:$0xff]
      %v319 = vld [vmem:[%s300 + $0x58] sm:$0xff]
      %v320 = vld [vmem:[%s300 + $0x60] sm:$0xff]
      %v321 = vld [vmem:[%s300 + $0x68] sm:$0xff]
      %v322 = vld [vmem:[%s300 + $0x70] sm:$0xff]
      %v323 = vld [vmem:[%s300 + $0x78] sm:$0xff]
      %v324 = vld [vmem:[%s300 + $0x80] sm:$0xff]
      %v325 = vld [vmem:[%s300 + $0x88] sm:$0xff]
      %v326 = vld [vmem:[%s300 + $0x90] sm:$0xff]
      %v327 = vld [vmem:[%s300 + $0x98] sm:$0xff]
      %v328 = vld [vmem:[%s300 + $0xa0] sm:$0xff]
      %v329 = vld [vmem:[%s300 + $0xa8] sm:$0xff]
      %v330 = vld [vmem:[%s300 + $0xb0] sm:$0xff]
      %v331 = vld [vmem:[%s300 + $0xb8] sm:$0xff]
      %v332 = vld [vmem:[%s300 + $0xc0] sm:$0xff]
      %v333 = vld [vmem:[%s300 + $0xc8] sm:$0xff]
      %v334 = vld [vmem:[%s300 + $0xd0] sm:$0xff]
      %v335 = vld [vmem:[%s300 + $0xd8] sm:$0xff]
      %v336 = vld [vmem:[%s300 + $0xe0] sm:$0xff]
      %v337 = vld [vmem:[%s300 + $0xe8] sm:$0xff]
      %v338 = vld [vmem:[%s300 + $0xf0] sm:$0xff]
      %v339 = vld [vmem:[%s300 + $0xf8] sm:$0xff]
      %340 = vset.pattern.permute.xlu0 0
      %341 = vperm.xlu0 %340, %v308
      %v342 = vpop.permute.xlu0 %341
      %343 = vset.pattern.permute.xlu0 0
      %344 = vperm.xlu0 %343, %v309
      %v345 = vpop.permute.xlu0 %344
      %346 = vset.pattern.permute.xlu0 0
      %347 = vperm.xlu0 %346, %v310
      %v348 = vpop.permute.xlu0 %347
      %349 = vset.pattern.permute.xlu0 0
      %350 = vperm.xlu0 %349, %v311
      %v351 = vpop.permute.xlu0 %350
      %352 = vset.pattern.permute.xlu0 0
      %353 = vperm.xlu0 %352, %v312
      %v354 = vpop.permute.xlu0 %353
      %355 = vset.pattern.permute.xlu0 0
      %356 = vperm.xlu0 %355, %v313
      %v357 = vpop.permute.xlu0 %356
      %358 = vset.pattern.permute.xlu0 0
      %359 = vperm.xlu0 %358, %v314
      %v360 = vpop.permute.xlu0 %359
      %361 = vset.pattern.permute.xlu0 0
      %362 = vperm.xlu0 %361, %v315
      %v363 = vpop.permute.xlu0 %362
      %364 = vset.pattern.permute.xlu0 0
      %365 = vperm.xlu0 %364, %v316
      %v366 = vpop.permute.xlu0 %365
      %367 = vset.pattern.permute.xlu0 0
      %368 = vperm.xlu0 %367, %v317
      %v369 = vpop.permute.xlu0 %368
      %370 = vset.pattern.permute.xlu0 0
      %371 = vperm.xlu0 %370, %v318
      %v372 = vpop.permute.xlu0 %371
      %373 = vset.pattern.permute.xlu0 0
      %374 = vperm.xlu0 %373, %v319
      %v375 = vpop.permute.xlu0 %374
      %376 = vset.pattern.permute.xlu0 0
      %377 = vperm.xlu0 %376, %v320
      %v378 = vpop.permute.xlu0 %377
      %379 = vset.pattern.permute.xlu0 0
      %380 = vperm.xlu0 %379, %v321
      %v381 = vpop.permute.xlu0 %380
      %382 = vset.pattern.permute.xlu0 0
      %383 = vperm.xlu0 %382, %v322
      %v384 = vpop.permute.xlu0 %383
      %385 = vset.pattern.permute.xlu0 0
      %386 = vperm.xlu0 %385, %v323
      %v387 = vpop.permute.xlu0 %386
      %388 = vset.pattern.permute.xlu0 0
      %389 = vperm.xlu0 %388, %v324
      %v390 = vpop.permute.xlu0 %389
      %391 = vset.pattern.permute.xlu0 0
      %392 = vperm.xlu0 %391, %v325
      %v393 = vpop.permute.xlu0 %392
      %394 = vset.pattern.permute.xlu0 0
      %395 = vperm.xlu0 %394, %v326
      %v396 = vpop.permute.xlu0 %395
      %397 = vset.pattern.permute.xlu0 0
      %398 = vperm.xlu0 %397, %v327
      %v399 = vpop.permute.xlu0 %398
      %400 = vset.pattern.permute.xlu0 0
      %401 = vperm.xlu0 %400, %v328
      %v402 = vpop.permute.xlu0 %401
      %403 = vset.pattern.permute.xlu0 0
      %404 = vperm.xlu0 %403, %v329
      %v405 = vpop.permute.xlu0 %404
      %406 = vset.pattern.permute.xlu0 0
      %407 = vperm.xlu0 %406, %v330
      %v408 = vpop.permute.xlu0 %407
      %409 = vset.pattern.permute.xlu0 0
      %410 = vperm.xlu0 %409, %v331
      %v411 = vpop.permute.xlu0 %410
      %412 = vset.pattern.permute.xlu0 0
      %413 = vperm.xlu0 %412, %v332
      %v414 = vpop.permute.xlu0 %413
      %415 = vset.pattern.permute.xlu0 0
      %416 = vperm.xlu0 %415, %v333
      %v417 = vpop.permute.xlu0 %416
      %418 = vset.pattern.permute.xlu0 0
      %419 = vperm.xlu0 %418, %v334
      %v420 = vpop.permute.xlu0 %419
      %421 = vset.pattern.permute.xlu0 0
      %422 = vperm.xlu0 %421, %v335
      %v423 = vpop.permute.xlu0 %422
      %424 = vset.pattern.permute.xlu0 0
      %425 = vperm.xlu0 %424, %v336
      %v426 = vpop.permute.xlu0 %425
      %427 = vset.pattern.permute.xlu0 0
      %428 = vperm.xlu0 %427, %v337
      %v429 = vpop.permute.xlu0 %428
      %430 = vset.pattern.permute.xlu0 0
      %431 = vperm.xlu0 %430, %v338
      %v432 = vpop.permute.xlu0 %431
      %433 = vset.pattern.permute.xlu0 0
      %434 = vperm.xlu0 %433, %v339
      %v435 = vpop.permute.xlu0 %434
      %vm436 = vcmp.eq.s32.totalorder %v307, %v342
      %vm437 = vcmp.eq.s32.totalorder %v307, %v345
      %vm438 = vcmp.eq.s32.totalorder %v307, %v348
      %vm439 = vcmp.eq.s32.totalorder %v307, %v351
      %vm440 = vcmp.eq.s32.totalorder %v307, %v354
      %vm441 = vcmp.eq.s32.totalorder %v307, %v357
      %vm442 = vcmp.eq.s32.totalorder %v307, %v360
      %vm443 = vcmp.eq.s32.totalorder %v307, %v363
      %vm444 = vcmp.eq.s32.totalorder %v307, %v366
      %vm445 = vcmp.eq.s32.totalorder %v307, %v369
      %vm446 = vcmp.eq.s32.totalorder %v307, %v372
      %vm447 = vcmp.eq.s32.totalorder %v307, %v375
      %vm448 = vcmp.eq.s32.totalorder %v307, %v378
      %vm449 = vcmp.eq.s32.totalorder %v307, %v381
      %vm450 = vcmp.eq.s32.totalorder %v307, %v384
      %vm451 = vcmp.eq.s32.totalorder %v307, %v387
      %vm452 = vcmp.eq.s32.totalorder %v307, %v390
      %vm453 = vcmp.eq.s32.totalorder %v307, %v393
      %vm454 = vcmp.eq.s32.totalorder %v307, %v396
      %vm455 = vcmp.eq.s32.totalorder %v307, %v399
      %vm456 = vcmp.eq.s32.totalorder %v307, %v402
      %vm457 = vcmp.eq.s32.totalorder %v307, %v405
      %vm458 = vcmp.eq.s32.totalorder %v307, %v408
      %vm459 = vcmp.eq.s32.totalorder %v307, %v411
      %vm460 = vcmp.eq.s32.totalorder %v307, %v414
      %vm461 = vcmp.eq.s32.totalorder %v307, %v417
      %vm462 = vcmp.eq.s32.totalorder %v307, %v420
      %vm463 = vcmp.eq.s32.totalorder %v307, %v423
      %vm464 = vcmp.eq.s32.totalorder %v307, %v426
      %vm465 = vcmp.eq.s32.totalorder %v307, %v429
      %vm466 = vcmp.eq.s32.totalorder %v307, %v432
      %vm467 = vcmp.eq.s32.totalorder %v307, %v435
      %v468 = vsel %vm436, 1, 0
      %v469 = vsel %vm437, 1, 0
      %v470 = vsel %vm438, 1, 0
      %v471 = vsel %vm439, 1, 0
      %v472 = vsel %vm440, 1, 0
      %v473 = vsel %vm441, 1, 0
      %v474 = vsel %vm442, 1, 0
      %v475 = vsel %vm443, 1, 0
      %v476 = vsel %vm444, 1, 0
      %v477 = vsel %vm445, 1, 0
      %v478 = vsel %vm446, 1, 0
      %v479 = vsel %vm447, 1, 0
      %v480 = vsel %vm448, 1, 0
      %v481 = vsel %vm449, 1, 0
      %v482 = vsel %vm450, 1, 0
      %v483 = vsel %vm451, 1, 0
      %v484 = vsel %vm452, 1, 0
      %v485 = vsel %vm453, 1, 0
      %v486 = vsel %vm454, 1, 0
      %v487 = vsel %vm455, 1, 0
      %v488 = vsel %vm456, 1, 0
      %v489 = vsel %vm457, 1, 0
      %v490 = vsel %vm458, 1, 0
      %v491 = vsel %vm459, 1, 0
      %v492 = vsel %vm460, 1, 0
      %v493 = vsel %vm461, 1, 0
      %v494 = vsel %vm462, 1, 0
      %v495 = vsel %vm463, 1, 0
      %v496 = vsel %vm464, 1, 0
      %v497 = vsel %vm465, 1, 0
      %v498 = vsel %vm466, 1, 0
      %v499 = vsel %vm467, 1, 0
      %v500 = vcvt.s32.f32 %v468
      %v501 = vcvt.s32.f32 %v469
      %v502 = vcvt.s32.f32 %v470
      %v503 = vcvt.s32.f32 %v471
      %v504 = vcvt.s32.f32 %v472
      %v505 = vcvt.s32.f32 %v473
      %v506 = vcvt.s32.f32 %v474
      %v507 = vcvt.s32.f32 %v475
      %v508 = vcvt.s32.f32 %v476
      %v509 = vcvt.s32.f32 %v477
      %v510 = vcvt.s32.f32 %v478
      %v511 = vcvt.s32.f32 %v479
      %v512 = vcvt.s32.f32 %v480
      %v513 = vcvt.s32.f32 %v481
      %v514 = vcvt.s32.f32 %v482
      %v515 = vcvt.s32.f32 %v483
      %v516 = vcvt.s32.f32 %v484
      %v517 = vcvt.s32.f32 %v485
      %v518 = vcvt.s32.f32 %v486
      %v519 = vcvt.s32.f32 %v487
      %v520 = vcvt.s32.f32 %v488
      %v521 = vcvt.s32.f32 %v489
      %v522 = vcvt.s32.f32 %v490
      %v523 = vcvt.s32.f32 %v491
      %v524 = vcvt.s32.f32 %v492
      %v525 = vcvt.s32.f32 %v493
      %v526 = vcvt.s32.f32 %v494
      %v527 = vcvt.s32.f32 %v495
      %v528 = vcvt.s32.f32 %v496
      %v529 = vcvt.s32.f32 %v497
      %v530 = vcvt.s32.f32 %v498
      %v531 = vcvt.s32.f32 %v499
      %v532 = vld [vmem:[%s1] sm:$0xff]
      %v533 = vld [vmem:[%s1 + $0x8] sm:$0xff]
      %v534 = vld [vmem:[%s1 + $0x10] sm:$0xff]
      %v535 = vld [vmem:[%s1 + $0x18] sm:$0xff]
      %vm536 = vcmask 261120
      %v538 = vsel %vm536, %v500, 0
      %v541 = vsel %vm536, %v501, 0
      %v544 = vsel %vm536, %v502, 0
      %v547 = vsel %vm536, %v503, 0
      %v550 = vsel %vm536, %v504, 0
      %v553 = vsel %vm536, %v505, 0
      %v556 = vsel %vm536, %v506, 0
      %v559 = vsel %vm536, %v507, 0
      %v562 = vsel %vm536, %v508, 0
      %v565 = vsel %vm536, %v509, 0
      %v568 = vsel %vm536, %v510, 0
      %v571 = vsel %vm536, %v511, 0
      %v574 = vsel %vm536, %v512, 0
      %v577 = vsel %vm536, %v513, 0
      %v580 = vsel %vm536, %v514, 0
      %v583 = vsel %vm536, %v515, 0
      %v586 = vsel %vm536, %v516, 0
      %v589 = vsel %vm536, %v517, 0
      %v592 = vsel %vm536, %v518, 0
      %v595 = vsel %vm536, %v519, 0
      %v598 = vsel %vm536, %v520, 0
      %v601 = vsel %vm536, %v521, 0
      %v604 = vsel %vm536, %v522, 0
      %v607 = vsel %vm536, %v523, 0
      %v610 = vsel %vm536, %v524, 0
      %v613 = vsel %vm536, %v525, 0
      %v616 = vsel %vm536, %v526, 0
      %v619 = vsel %vm536, %v527, 0
      %v622 = vsel %vm536, %v528, 0
      %v625 = vsel %vm536, %v529, 0
      %v628 = vsel %vm536, %v530, 0
      %v631 = vsel %vm536, %v531, 0
      %633 = vmatprep.subr.mxu0 0.0
      %634 = vmatpush1.msra.mxu0 0.0
      %635 = vmatprep.subr.mxu0 0.0
      %636 = vmatpush1.msra.mxu0 0.0
      %637 = vmatprep.subr.mxu0 0.0
      %638 = vmatpush1.msra.mxu0 0.0
      %639 = vmatprep.subr.mxu0 0.0
      %640 = vmatpush1.msra.mxu0 0.0
      %641 = vmatprep.subr.mxu0 0.0
      %642 = vmatpush1.msra.mxu0 0.0
      %643 = vmatprep.subr.mxu0 0.0
      %644 = vmatpush1.msra.mxu0 0.0
      %645 = vmatprep.subr.mxu0 0.0
      %646 = vmatpush1.msra.mxu0 0.0
      %647 = vmatprep.subr.mxu0 0.0
      %648 = vmatpush1.msra.mxu0 0.0
      %649 = vmatprep.subr.mxu0 0.0
      %650 = vmatpush1.msra.mxu0 0.0
      %651 = vmatprep.subr.mxu0 0.0
      %652 = vmatpush1.msra.mxu0 0.0
      %653 = vmatprep.subr.mxu0 0.0
      %654 = vmatpush1.msra.mxu0 0.0
      %655 = vmatprep.subr.mxu0 0.0
      %656 = vmatpush1.msra.mxu0 0.0
      %657 = vmatprep.subr.mxu0 0.0
      %658 = vmatpush1.msra.mxu0 %v535
      %659 = vmatprep.subr.mxu0 0.0
      %660 = vmatpush1.msra.mxu0 %v534
      %661 = vmatprep.subr.mxu0 0.0
      %662 = vmatpush1.msra.mxu0 %v533
      %663 = vmatprep.subr.mxu0 0.0
      %664 = vmatpush1.msra.mxu0 %v532
      %665 = vmatprep.subr.mxu0 0.0
      %666 = vmatpush2.msra.mxu0 0.0
      %667 = vmatprep.subr.mxu0 0.0
      %668 = vmatpush2.msra.mxu0 0.0
      %669 = vmatprep.subr.mxu0 0.0
      %670 = vmatpush2.msra.mxu0 0.0
      %671 = vmatprep.subr.mxu0 0.0
      %672 = vmatpush2.msra.mxu0 0.0
      %673 = vmatprep.subr.mxu0 0.0
      %674 = vmatpush2.msra.mxu0 0.0
      %675 = vmatprep.subr.mxu0 0.0
      %676 = vmatpush2.msra.mxu0 0.0
      %677 = vmatprep.subr.mxu0 0.0
      %678 = vmatpush2.msra.mxu0 0.0
      %679 = vmatprep.subr.mxu0 0.0
      %680 = vmatpush2.msra.mxu0 0.0
      %681 = vmatprep.subr.mxu0 0.0
      %682 = vmatpush2.msra.mxu0 0.0
      %683 = vmatprep.subr.mxu0 0.0
      %684 = vmatpush2.msra.mxu0 0.0
      %685 = vmatprep.subr.mxu0 0.0
      %686 = vmatpush2.msra.mxu0 0.0
      %687 = vmatprep.subr.mxu0 0.0
      %688 = vmatpush2.msra.mxu0 0.0
      %689 = vmatprep.subr.mxu0 0.0
      %690 = vmatpush2.msra.mxu0 0.0
      %691 = vmatprep.subr.mxu0 0.0
      %692 = vmatpush2.msra.mxu0 0.0
      %693 = vmatprep.subr.mxu0 0.0
      %694 = vmatpush2.msra.mxu0 0.0
      %695 = vmatprep.subr.mxu0 0.0
      %696 = vmatpush2.msra.mxu0 0.0
      %697 = vmatprep.mubr.f32.mxu0 0.0
      %698 = vmatmul.mubr.f32.gmra.mxu0 %v538
      %v699 = vpop.f32.mrf.mxu0
      %v700 = vadd.f32 0.0, %v699
      %v701 = vpop.f32.mrf.mxu0
      %702 = vmatprep.mubr.f32.mxu0 0.0
      %703 = vmatmul.mubr.f32.gmra.mxu0 %v541
      %v704 = vpop.f32.mrf.mxu0
      %v705 = vadd.f32 0.0, %v704
      %v706 = vpop.f32.mrf.mxu0
      %707 = vmatprep.mubr.f32.mxu0 0.0
      %708 = vmatmul.mubr.f32.gmra.mxu0 %v544
      %v709 = vpop.f32.mrf.mxu0
      %v710 = vadd.f32 0.0, %v709
      %v711 = vpop.f32.mrf.mxu0
      %712 = vmatprep.mubr.f32.mxu0 0.0
      %713 = vmatmul.mubr.f32.gmra.mxu0 %v547
      %v714 = vpop.f32.mrf.mxu0
      %v715 = vadd.f32 0.0, %v714
      %v716 = vpop.f32.mrf.mxu0
      %717 = vmatprep.mubr.f32.mxu0 0.0
      %718 = vmatmul.mubr.f32.gmra.mxu0 %v550
      %v719 = vpop.f32.mrf.mxu0
      %v720 = vadd.f32 0.0, %v719
      %v721 = vpop.f32.mrf.mxu0
      %722 = vmatprep.mubr.f32.mxu0 0.0
      %723 = vmatmul.mubr.f32.gmra.mxu0 %v553
      %v724 = vpop.f32.mrf.mxu0
      %v725 = vadd.f32 0.0, %v724
      %v726 = vpop.f32.mrf.mxu0
      %727 = vmatprep.mubr.f32.mxu0 0.0
      %728 = vmatmul.mubr.f32.gmra.mxu0 %v556
      %v729 = vpop.f32.mrf.mxu0
      %v730 = vadd.f32 0.0, %v729
      %v731 = vpop.f32.mrf.mxu0
      %732 = vmatprep.mubr.f32.mxu0 0.0
      %733 = vmatmul.mubr.f32.gmra.mxu0 %v559
      %v734 = vpop.f32.mrf.mxu0
      %v735 = vadd.f32 0.0, %v734
      %v736 = vpop.f32.mrf.mxu0
      %737 = vmatprep.mubr.f32.mxu0 0.0
      %738 = vmatmul.mubr.f32.gmra.mxu0 %v562
      %v739 = vpop.f32.mrf.mxu0
      %v740 = vadd.f32 0.0, %v739
      %v741 = vpop.f32.mrf.mxu0
      %742 = vmatprep.mubr.f32.mxu0 0.0
      %743 = vmatmul.mubr.f32.gmra.mxu0 %v565
      %v744 = vpop.f32.mrf.mxu0
      %v745 = vadd.f32 0.0, %v744
      %v746 = vpop.f32.mrf.mxu0
      %747 = vmatprep.mubr.f32.mxu0 0.0
      %748 = vmatmul.mubr.f32.gmra.mxu0 %v568
      %v749 = vpop.f32.mrf.mxu0
      %v750 = vadd.f32 0.0, %v749
      %v751 = vpop.f32.mrf.mxu0
      %752 = vmatprep.mubr.f32.mxu0 0.0
      %753 = vmatmul.mubr.f32.gmra.mxu0 %v571
      %v754 = vpop.f32.mrf.mxu0
      %v755 = vadd.f32 0.0, %v754
      %v756 = vpop.f32.mrf.mxu0
      %757 = vmatprep.mubr.f32.mxu0 0.0
      %758 = vmatmul.mubr.f32.gmra.mxu0 %v574
      %v759 = vpop.f32.mrf.mxu0
      %v760 = vadd.f32 0.0, %v759
      %v761 = vpop.f32.mrf.mxu0
      %762 = vmatprep.mubr.f32.mxu0 0.0
      %763 = vmatmul.mubr.f32.gmra.mxu0 %v577
      %v764 = vpop.f32.mrf.mxu0
      %v765 = vadd.f32 0.0, %v764
      %v766 = vpop.f32.mrf.mxu0
      %767 = vmatprep.mubr.f32.mxu0 0.0
      %768 = vmatmul.mubr.f32.gmra.mxu0 %v580
      %v769 = vpop.f32.mrf.mxu0
      %v770 = vadd.f32 0.0, %v769
      %v771 = vpop.f32.mrf.mxu0
      %772 = vmatprep.mubr.f32.mxu0 0.0
      %773 = vmatmul.mubr.f32.gmra.mxu0 %v583
      %v774 = vpop.f32.mrf.mxu0
      %v775 = vadd.f32 0.0, %v774
      %v776 = vpop.f32.mrf.mxu0
      %777 = vmatprep.mubr.f32.mxu0 0.0
      %778 = vmatmul.mubr.f32.gmra.mxu0 %v586
      %v779 = vpop.f32.mrf.mxu0
      %v780 = vadd.f32 0.0, %v779
      %v781 = vpop.f32.mrf.mxu0
      %782 = vmatprep.mubr.f32.mxu0 0.0
      %783 = vmatmul.mubr.f32.gmra.mxu0 %v589
      %v784 = vpop.f32.mrf.mxu0
      %v785 = vadd.f32 0.0, %v784
      %v786 = vpop.f32.mrf.mxu0
      %787 = vmatprep.mubr.f32.mxu0 0.0
      %788 = vmatmul.mubr.f32.gmra.mxu0 %v592
      %v789 = vpop.f32.mrf.mxu0
      %v790 = vadd.f32 0.0, %v789
      %v791 = vpop.f32.mrf.mxu0
      %792 = vmatprep.mubr.f32.mxu0 0.0
      %793 = vmatmul.mubr.f32.gmra.mxu0 %v595
      %v794 = vpop.f32.mrf.mxu0
      %v795 = vadd.f32 0.0, %v794
      %v796 = vpop.f32.mrf.mxu0
      %797 = vmatprep.mubr.f32.mxu0 0.0
      %798 = vmatmul.mubr.f32.gmra.mxu0 %v598
      %v799 = vpop.f32.mrf.mxu0
      %v800 = vadd.f32 0.0, %v799
      %v801 = vpop.f32.mrf.mxu0
      %802 = vmatprep.mubr.f32.mxu0 0.0
      %803 = vmatmul.mubr.f32.gmra.mxu0 %v601
      %v804 = vpop.f32.mrf.mxu0
      %v805 = vadd.f32 0.0, %v804
      %v806 = vpop.f32.mrf.mxu0
      %807 = vmatprep.mubr.f32.mxu0 0.0
      %808 = vmatmul.mubr.f32.gmra.mxu0 %v604
      %v809 = vpop.f32.mrf.mxu0
      %v810 = vadd.f32 0.0, %v809
      %v811 = vpop.f32.mrf.mxu0
      %812 = vmatprep.mubr.f32.mxu0 0.0
      %813 = vmatmul.mubr.f32.gmra.mxu0 %v607
      %v814 = vpop.f32.mrf.mxu0
      %v815 = vadd.f32 0.0, %v814
      %v816 = vpop.f32.mrf.mxu0
      %817 = vmatprep.mubr.f32.mxu0 0.0
      %818 = vmatmul.mubr.f32.gmra.mxu0 %v610
      %v819 = vpop.f32.mrf.mxu0
      %v820 = vadd.f32 0.0, %v819
      %v821 = vpop.f32.mrf.mxu0
      %822 = vmatprep.mubr.f32.mxu0 0.0
      %823 = vmatmul.mubr.f32.gmra.mxu0 %v613
      %v824 = vpop.f32.mrf.mxu0
      %v825 = vadd.f32 0.0, %v824
      %v826 = vpop.f32.mrf.mxu0
      %827 = vmatprep.mubr.f32.mxu0 0.0
      %828 = vmatmul.mubr.f32.gmra.mxu0 %v616
      %v829 = vpop.f32.mrf.mxu0
      %v830 = vadd.f32 0.0, %v829
      %v831 = vpop.f32.mrf.mxu0
      %832 = vmatprep.mubr.f32.mxu0 0.0
      %833 = vmatmul.mubr.f32.gmra.mxu0 %v619
      %v834 = vpop.f32.mrf.mxu0
      %v835 = vadd.f32 0.0, %v834
      %v836 = vpop.f32.mrf.mxu0
      %837 = vmatprep.mubr.f32.mxu0 0.0
      %838 = vmatmul.mubr.f32.gmra.mxu0 %v622
      %v839 = vpop.f32.mrf.mxu0
      %v840 = vadd.f32 0.0, %v839
      %v841 = vpop.f32.mrf.mxu0
      %842 = vmatprep.mubr.f32.mxu0 0.0
      %843 = vmatmul.mubr.f32.gmra.mxu0 %v625
      %v844 = vpop.f32.mrf.mxu0
      %v845 = vadd.f32 0.0, %v844
      %v846 = vpop.f32.mrf.mxu0
      %847 = vmatprep.mubr.f32.mxu0 0.0
      %848 = vmatmul.mubr.f32.gmra.mxu0 %v628
      %v849 = vpop.f32.mrf.mxu0
      %v850 = vadd.f32 0.0, %v849
      %v851 = vpop.f32.mrf.mxu0
      %852 = vmatprep.mubr.f32.mxu0 0.0
      %853 = vmatmul.mubr.f32.gmra.mxu0 %v631
      %v854 = vpop.f32.mrf.mxu0
      %v855 = vadd.f32 0.0, %v854
      %v856 = vpop.f32.mrf.mxu0
      %857 = vdwg.mxu0
      %v858 = vld [vmem:[%s2] sm:$0xff]
      %v859 = vld [vmem:[%s2 + $0x8] sm:$0xff]
      %v860 = vld [vmem:[%s2 + $0x10] sm:$0xff]
      %v861 = vld [vmem:[%s2 + $0x18] sm:$0xff]
      %v862 = vld [vmem:[%s3] sm:$0x1]
      %v864 = vlaneseq
      %v865 = vshrl.u32 %v864, 7
      %v866 = vsub.s32 0, %v865
      %v867 = vrot.slane %v862, %v866
      %v870 = vsel %vm536, %v700, 0
      %v873 = vsel %vm536, %v705, 0
      %v876 = vsel %vm536, %v710, 0
      %v879 = vsel %vm536, %v715, 0
      %v882 = vsel %vm536, %v720, 0
      %v885 = vsel %vm536, %v725, 0
      %v888 = vsel %vm536, %v730, 0
      %v891 = vsel %vm536, %v735, 0
      %v894 = vsel %vm536, %v740, 0
      %v897 = vsel %vm536, %v745, 0
      %v900 = vsel %vm536, %v750, 0
      %v903 = vsel %vm536, %v755, 0
      %v906 = vsel %vm536, %v760, 0
      %v909 = vsel %vm536, %v765, 0
      %v912 = vsel %vm536, %v770, 0
      %v915 = vsel %vm536, %v775, 0
      %v918 = vsel %vm536, %v780, 0
      %v921 = vsel %vm536, %v785, 0
      %v924 = vsel %vm536, %v790, 0
      %v927 = vsel %vm536, %v795, 0
      %v930 = vsel %vm536, %v800, 0
      %v933 = vsel %vm536, %v805, 0
      %v936 = vsel %vm536, %v810, 0
      %v939 = vsel %vm536, %v815, 0
      %v942 = vsel %vm536, %v820, 0
      %v945 = vsel %vm536, %v825, 0
      %v948 = vsel %vm536, %v830, 0
      %v951 = vsel %vm536, %v835, 0
      %v954 = vsel %vm536, %v840, 0
      %v957 = vsel %vm536, %v845, 0
      %v960 = vsel %vm536, %v850, 0
      %v963 = vsel %vm536, %v855, 0
      %965 = vmatprep.subr.mxu0 0.0
      %966 = vmatpush1.msra.mxu0 0.0
      %967 = vmatprep.subr.mxu0 0.0
      %968 = vmatpush1.msra.mxu0 0.0
      %969 = vmatprep.subr.mxu0 0.0
      %970 = vmatpush1.msra.mxu0 0.0
      %971 = vmatprep.subr.mxu0 0.0
      %972 = vmatpush1.msra.mxu0 0.0
      %973 = vmatprep.subr.mxu0 0.0
      %974 = vmatpush1.msra.mxu0 0.0
      %975 = vmatprep.subr.mxu0 0.0
      %976 = vmatpush1.msra.mxu0 0.0
      %977 = vmatprep.subr.mxu0 0.0
      %978 = vmatpush1.msra.mxu0 0.0
      %979 = vmatprep.subr.mxu0 0.0
      %980 = vmatpush1.msra.mxu0 0.0
      %981 = vmatprep.subr.mxu0 0.0
      %982 = vmatpush1.msra.mxu0 0.0
      %983 = vmatprep.subr.mxu0 0.0
      %984 = vmatpush1.msra.mxu0 0.0
      %985 = vmatprep.subr.mxu0 0.0
      %986 = vmatpush1.msra.mxu0 0.0
      %987 = vmatprep.subr.mxu0 0.0
      %988 = vmatpush1.msra.mxu0 0.0
      %989 = vmatprep.subr.mxu0 0.0
      %990 = vmatpush1.msra.mxu0 %v861
      %991 = vmatprep.subr.mxu0 0.0
      %992 = vmatpush1.msra.mxu0 %v860
      %993 = vmatprep.subr.mxu0 0.0
      %994 = vmatpush1.msra.mxu0 %v859
      %995 = vmatprep.subr.mxu0 0.0
      %996 = vmatpush1.msra.mxu0 %v858
      %997 = vmatprep.subr.mxu0 0.0
      %998 = vmatpush2.msra.mxu0 0.0
      %999 = vmatprep.subr.mxu0 0.0
      %1000 = vmatpush2.msra.mxu0 0.0
      %1001 = vmatprep.subr.mxu0 0.0
      %1002 = vmatpush2.msra.mxu0 0.0
      %1003 = vmatprep.subr.mxu0 0.0
      %1004 = vmatpush2.msra.mxu0 0.0
      %1005 = vmatprep.subr.mxu0 0.0
      %1006 = vmatpush2.msra.mxu0 0.0
      %1007 = vmatprep.subr.mxu0 0.0
      %1008 = vmatpush2.msra.mxu0 0.0
      %1009 = vmatprep.subr.mxu0 0.0
      %1010 = vmatpush2.msra.mxu0 0.0
      %1011 = vmatprep.subr.mxu0 0.0
      %1012 = vmatpush2.msra.mxu0 0.0
      %1013 = vmatprep.subr.mxu0 0.0
      %1014 = vmatpush2.msra.mxu0 0.0
      %1015 = vmatprep.subr.mxu0 0.0
      %1016 = vmatpush2.msra.mxu0 0.0
      %1017 = vmatprep.subr.mxu0 0.0
      %1018 = vmatpush2.msra.mxu0 0.0
      %1019 = vmatprep.subr.mxu0 0.0
      %1020 = vmatpush2.msra.mxu0 0.0
      %1021 = vmatprep.subr.mxu0 0.0
      %1022 = vmatpush2.msra.mxu0 0.0
      %1023 = vmatprep.subr.mxu0 0.0
      %1024 = vmatpush2.msra.mxu0 0.0
      %1025 = vmatprep.subr.mxu0 0.0
      %1026 = vmatpush2.msra.mxu0 0.0
      %1027 = vmatprep.subr.mxu0 0.0
      %1028 = vmatpush2.msra.mxu0 0.0
      %1029 = vmatprep.mubr.f32.mxu0 0.0
      %1030 = vmatmul.mubr.f32.gmra.mxu0 %v870
      %v1031 = vpop.f32.mrf.mxu0
      %v1032 = vadd.f32 %v867, %v1031
      %v1033 = vpop.f32.mrf.mxu0
      %1034 = vmatprep.mubr.f32.mxu0 0.0
      %1035 = vmatmul.mubr.f32.gmra.mxu0 %v873
      %v1036 = vpop.f32.mrf.mxu0
      %v1037 = vadd.f32 %v867, %v1036
      %v1038 = vpop.f32.mrf.mxu0
      %1039 = vmatprep.mubr.f32.mxu0 0.0
      %1040 = vmatmul.mubr.f32.gmra.mxu0 %v876
      %v1041 = vpop.f32.mrf.mxu0
      %v1042 = vadd.f32 %v867, %v1041
      %v1043 = vpop.f32.mrf.mxu0
      %1044 = vmatprep.mubr.f32.mxu0 0.0
      %1045 = vmatmul.mubr.f32.gmra.mxu0 %v879
      %v1046 = vpop.f32.mrf.mxu0
      %v1047 = vadd.f32 %v867, %v1046
      %v1048 = vpop.f32.mrf.mxu0
      %1049 = vmatprep.mubr.f32.mxu0 0.0
      %1050 = vmatmul.mubr.f32.gmra.mxu0 %v882
      %v1051 = vpop.f32.mrf.mxu0
      %v1052 = vadd.f32 %v867, %v1051
      %v1053 = vpop.f32.mrf.mxu0
      %1054 = vmatprep.mubr.f32.mxu0 0.0
      %1055 = vmatmul.mubr.f32.gmra.mxu0 %v885
      %v1056 = vpop.f32.mrf.mxu0
      %v1057 = vadd.f32 %v867, %v1056
      %v1058 = vpop.f32.mrf.mxu0
      %1059 = vmatprep.mubr.f32.mxu0 0.0
      %1060 = vmatmul.mubr.f32.gmra.mxu0 %v888
      %v1061 = vpop.f32.mrf.mxu0
      %v1062 = vadd.f32 %v867, %v1061
      %v1063 = vpop.f32.mrf.mxu0
      %1064 = vmatprep.mubr.f32.mxu0 0.0
      %1065 = vmatmul.mubr.f32.gmra.mxu0 %v891
      %v1066 = vpop.f32.mrf.mxu0
      %v1067 = vadd.f32 %v867, %v1066
      %v1068 = vpop.f32.mrf.mxu0
      %1069 = vmatprep.mubr.f32.mxu0 0.0
      %1070 = vmatmul.mubr.f32.gmra.mxu0 %v894
      %v1071 = vpop.f32.mrf.mxu0
      %v1072 = vadd.f32 %v867, %v1071
      %v1073 = vpop.f32.mrf.mxu0
      %1074 = vmatprep.mubr.f32.mxu0 0.0
      %1075 = vmatmul.mubr.f32.gmra.mxu0 %v897
      %v1076 = vpop.f32.mrf.mxu0
      %v1077 = vadd.f32 %v867, %v1076
      %v1078 = vpop.f32.mrf.mxu0
      %1079 = vmatprep.mubr.f32.mxu0 0.0
      %1080 = vmatmul.mubr.f32.gmra.mxu0 %v900
      %v1081 = vpop.f32.mrf.mxu0
      %v1082 = vadd.f32 %v867, %v1081
      %v1083 = vpop.f32.mrf.mxu0
      %1084 = vmatprep.mubr.f32.mxu0 0.0
      %1085 = vmatmul.mubr.f32.gmra.mxu0 %v903
      %v1086 = vpop.f32.mrf.mxu0
      %v1087 = vadd.f32 %v867, %v1086
      %v1088 = vpop.f32.mrf.mxu0
      %1089 = vmatprep.mubr.f32.mxu0 0.0
      %1090 = vmatmul.mubr.f32.gmra.mxu0 %v906
      %v1091 = vpop.f32.mrf.mxu0
      %v1092 = vadd.f32 %v867, %v1091
      %v1093 = vpop.f32.mrf.mxu0
      %1094 = vmatprep.mubr.f32.mxu0 0.0
      %1095 = vmatmul.mubr.f32.gmra.mxu0 %v909
      %v1096 = vpop.f32.mrf.mxu0
      %v1097 = vadd.f32 %v867, %v1096
      %v1098 = vpop.f32.mrf.mxu0
      %1099 = vmatprep.mubr.f32.mxu0 0.0
      %1100 = vmatmul.mubr.f32.gmra.mxu0 %v912
      %v1101 = vpop.f32.mrf.mxu0
      %v1102 = vadd.f32 %v867, %v1101
      %v1103 = vpop.f32.mrf.mxu0
      %1104 = vmatprep.mubr.f32.mxu0 0.0
      %1105 = vmatmul.mubr.f32.gmra.mxu0 %v915
      %v1106 = vpop.f32.mrf.mxu0
      %v1107 = vadd.f32 %v867, %v1106
      %v1108 = vpop.f32.mrf.mxu0
      %1109 = vmatprep.mubr.f32.mxu0 0.0
      %1110 = vmatmul.mubr.f32.gmra.mxu0 %v918
      %v1111 = vpop.f32.mrf.mxu0
      %v1112 = vadd.f32 %v867, %v1111
      %v1113 = vpop.f32.mrf.mxu0
      %1114 = vmatprep.mubr.f32.mxu0 0.0
      %1115 = vmatmul.mubr.f32.gmra.mxu0 %v921
      %v1116 = vpop.f32.mrf.mxu0
      %v1117 = vadd.f32 %v867, %v1116
      %v1118 = vpop.f32.mrf.mxu0
      %1119 = vmatprep.mubr.f32.mxu0 0.0
      %1120 = vmatmul.mubr.f32.gmra.mxu0 %v924
      %v1121 = vpop.f32.mrf.mxu0
      %v1122 = vadd.f32 %v867, %v1121
      %v1123 = vpop.f32.mrf.mxu0
      %1124 = vmatprep.mubr.f32.mxu0 0.0
      %1125 = vmatmul.mubr.f32.gmra.mxu0 %v927
      %v1126 = vpop.f32.mrf.mxu0
      %v1127 = vadd.f32 %v867, %v1126
      %v1128 = vpop.f32.mrf.mxu0
      %1129 = vmatprep.mubr.f32.mxu0 0.0
      %1130 = vmatmul.mubr.f32.gmra.mxu0 %v930
      %v1131 = vpop.f32.mrf.mxu0
      %v1132 = vadd.f32 %v867, %v1131
      %v1133 = vpop.f32.mrf.mxu0
      %1134 = vmatprep.mubr.f32.mxu0 0.0
      %1135 = vmatmul.mubr.f32.gmra.mxu0 %v933
      %v1136 = vpop.f32.mrf.mxu0
      %v1137 = vadd.f32 %v867, %v1136
      %v1138 = vpop.f32.mrf.mxu0
      %1139 = vmatprep.mubr.f32.mxu0 0.0
      %1140 = vmatmul.mubr.f32.gmra.mxu0 %v936
      %v1141 = vpop.f32.mrf.mxu0
      %v1142 = vadd.f32 %v867, %v1141
      %v1143 = vpop.f32.mrf.mxu0
      %1144 = vmatprep.mubr.f32.mxu0 0.0
      %1145 = vmatmul.mubr.f32.gmra.mxu0 %v939
      %v1146 = vpop.f32.mrf.mxu0
      %v1147 = vadd.f32 %v867, %v1146
      %v1148 = vpop.f32.mrf.mxu0
      %1149 = vmatprep.mubr.f32.mxu0 0.0
      %1150 = vmatmul.mubr.f32.gmra.mxu0 %v942
      %v1151 = vpop.f32.mrf.mxu0
      %v1152 = vadd.f32 %v867, %v1151
      %v1153 = vpop.f32.mrf.mxu0
      %1154 = vmatprep.mubr.f32.mxu0 0.0
      %1155 = vmatmul.mubr.f32.gmra.mxu0 %v945
      %v1156 = vpop.f32.mrf.mxu0
      %v1157 = vadd.f32 %v867, %v1156
      %v1158 = vpop.f32.mrf.mxu0
      %1159 = vmatprep.mubr.f32.mxu0 0.0
      %1160 = vmatmul.mubr.f32.gmra.mxu0 %v948
      %v1161 = vpop.f32.mrf.mxu0
      %v1162 = vadd.f32 %v867, %v1161
      %v1163 = vpop.f32.mrf.mxu0
      %1164 = vmatprep.mubr.f32.mxu0 0.0
      %1165 = vmatmul.mubr.f32.gmra.mxu0 %v951
      %v1166 = vpop.f32.mrf.mxu0
      %v1167 = vadd.f32 %v867, %v1166
      %v1168 = vpop.f32.mrf.mxu0
      %1169 = vmatprep.mubr.f32.mxu0 0.0
      %1170 = vmatmul.mubr.f32.gmra.mxu0 %v954
      %v1171 = vpop.f32.mrf.mxu0
      %v1172 = vadd.f32 %v867, %v1171
      %v1173 = vpop.f32.mrf.mxu0
      %1174 = vmatprep.mubr.f32.mxu0 0.0
      %1175 = vmatmul.mubr.f32.gmra.mxu0 %v957
      %v1176 = vpop.f32.mrf.mxu0
      %v1177 = vadd.f32 %v867, %v1176
      %v1178 = vpop.f32.mrf.mxu0
      %1179 = vmatprep.mubr.f32.mxu0 0.0
      %1180 = vmatmul.mubr.f32.gmra.mxu0 %v960
      %v1181 = vpop.f32.mrf.mxu0
      %v1182 = vadd.f32 %v867, %v1181
      %v1183 = vpop.f32.mrf.mxu0
      %1184 = vmatprep.mubr.f32.mxu0 0.0
      %1185 = vmatmul.mubr.f32.gmra.mxu0 %v963
      %v1186 = vpop.f32.mrf.mxu0
      %v1187 = vadd.f32 %v867, %v1186
      %v1188 = vpop.f32.mrf.mxu0
      %1189 = vdwg.mxu0
      %v1190 = vld [vmem:[%s7] sm:$0xff]
      %v1191 = vld [vmem:[%s7 + $0x8] sm:$0xff]
      %v1192 = vld [vmem:[%s7 + $0x10] sm:$0xff]
      %v1193 = vld [vmem:[%s7 + $0x18] sm:$0xff]
      %v1194 = vld [vmem:[%s7 + $0x20] sm:$0xff]
      %v1195 = vld [vmem:[%s7 + $0x28] sm:$0xff]
      %v1196 = vld [vmem:[%s7 + $0x30] sm:$0xff]
      %v1197 = vld [vmem:[%s7 + $0x38] sm:$0xff]
      %v1198 = vld [vmem:[%s7 + $0x40] sm:$0xff]
      %v1199 = vld [vmem:[%s7 + $0x48] sm:$0xff]
      %v1200 = vld [vmem:[%s7 + $0x50] sm:$0xff]
      %v1201 = vld [vmem:[%s7 + $0x58] sm:$0xff]
      %v1202 = vld [vmem:[%s7 + $0x60] sm:$0xff]
      %v1203 = vld [vmem:[%s7 + $0x68] sm:$0xff]
      %v1204 = vld [vmem:[%s7 + $0x70] sm:$0xff]
      %v1205 = vld [vmem:[%s7 + $0x78] sm:$0xff]
      %v1206 = vld [vmem:[%s7 + $0x80] sm:$0xff]
      %v1207 = vld [vmem:[%s7 + $0x88] sm:$0xff]
      %v1208 = vld [vmem:[%s7 + $0x90] sm:$0xff]
      %v1209 = vld [vmem:[%s7 + $0x98] sm:$0xff]
      %v1210 = vld [vmem:[%s7 + $0xa0] sm:$0xff]
      %v1211 = vld [vmem:[%s7 + $0xa8] sm:$0xff]
      %v1212 = vld [vmem:[%s7 + $0xb0] sm:$0xff]
      %v1213 = vld [vmem:[%s7 + $0xb8] sm:$0xff]
      %v1214 = vld [vmem:[%s7 + $0xc0] sm:$0xff]
      %v1215 = vld [vmem:[%s7 + $0xc8] sm:$0xff]
      %v1216 = vld [vmem:[%s7 + $0xd0] sm:$0xff]
      %v1217 = vld [vmem:[%s7 + $0xd8] sm:$0xff]
      %v1218 = vld [vmem:[%s7 + $0xe0] sm:$0xff]
      %v1219 = vld [vmem:[%s7 + $0xe8] sm:$0xff]
      %v1220 = vld [vmem:[%s7 + $0xf0] sm:$0xff]
      %v1221 = vld [vmem:[%s7 + $0xf8] sm:$0xff]
      %v1222 = vld [vmem:[%s7 + $0x100] sm:$0xff]
      %v1223 = vld [vmem:[%s7 + $0x108] sm:$0xff]
      %v1224 = vld [vmem:[%s7 + $0x110] sm:$0xff]
      %v1225 = vld [vmem:[%s7 + $0x118] sm:$0xff]
      %v1226 = vld [vmem:[%s7 + $0x120] sm:$0xff]
      %v1227 = vld [vmem:[%s7 + $0x128] sm:$0xff]
      %v1228 = vld [vmem:[%s7 + $0x130] sm:$0xff]
      %v1229 = vld [vmem:[%s7 + $0x138] sm:$0xff]
      %v1230 = vld [vmem:[%s7 + $0x140] sm:$0xff]
      %v1231 = vld [vmem:[%s7 + $0x148] sm:$0xff]
      %v1232 = vld [vmem:[%s7 + $0x150] sm:$0xff]
      %v1233 = vld [vmem:[%s7 + $0x158] sm:$0xff]
      %v1234 = vld [vmem:[%s7 + $0x160] sm:$0xff]
      %v1235 = vld [vmem:[%s7 + $0x168] sm:$0xff]
      %v1236 = vld [vmem:[%s7 + $0x170] sm:$0xff]
      %v1237 = vld [vmem:[%s7 + $0x178] sm:$0xff]
      %v1238 = vld [vmem:[%s7 + $0x180] sm:$0xff]
      %v1239 = vld [vmem:[%s7 + $0x188] sm:$0xff]
      %v1240 = vld [vmem:[%s7 + $0x190] sm:$0xff]
      %v1241 = vld [vmem:[%s7 + $0x198] sm:$0xff]
      %v1242 = vld [vmem:[%s7 + $0x1a0] sm:$0xff]
      %v1243 = vld [vmem:[%s7 + $0x1a8] sm:$0xff]
      %v1244 = vld [vmem:[%s7 + $0x1b0] sm:$0xff]
      %v1245 = vld [vmem:[%s7 + $0x1b8] sm:$0xff]
      %v1246 = vld [vmem:[%s7 + $0x1c0] sm:$0xff]
      %v1247 = vld [vmem:[%s7 + $0x1c8] sm:$0xff]
      %v1248 = vld [vmem:[%s7 + $0x1d0] sm:$0xff]
      %v1249 = vld [vmem:[%s7 + $0x1d8] sm:$0xff]
      %v1250 = vld [vmem:[%s7 + $0x1e0] sm:$0xff]
      %v1251 = vld [vmem:[%s7 + $0x1e8] sm:$0xff]
      %v1252 = vld [vmem:[%s7 + $0x1f0] sm:$0xff]
      %v1253 = vld [vmem:[%s7 + $0x1f8] sm:$0xff]
      %1286 = vrot.lane.b32.xlu0 %v1032, 96
      %v1287 = vpop.permute.xlu0 %1286
      %1288 = vrot.lane.b32.xlu0 %v1037, 96
      %v1289 = vpop.permute.xlu0 %1288
      %1290 = vrot.lane.b32.xlu0 %v1042, 96
      %v1291 = vpop.permute.xlu0 %1290
      %1292 = vrot.lane.b32.xlu0 %v1047, 96
      %v1293 = vpop.permute.xlu0 %1292
      %1294 = vrot.lane.b32.xlu0 %v1052, 96
      %v1295 = vpop.permute.xlu0 %1294
      %1296 = vrot.lane.b32.xlu0 %v1057, 96
      %v1297 = vpop.permute.xlu0 %1296
      %1298 = vrot.lane.b32.xlu0 %v1062, 96
      %v1299 = vpop.permute.xlu0 %1298
      %1300 = vrot.lane.b32.xlu0 %v1067, 96
      %v1301 = vpop.permute.xlu0 %1300
      %1302 = vrot.lane.b32.xlu0 %v1072, 96
      %v1303 = vpop.permute.xlu0 %1302
      %1304 = vrot.lane.b32.xlu0 %v1077, 96
      %v1305 = vpop.permute.xlu0 %1304
      %1306 = vrot.lane.b32.xlu0 %v1082, 96
      %v1307 = vpop.permute.xlu0 %1306
      %1308 = vrot.lane.b32.xlu0 %v1087, 96
      %v1309 = vpop.permute.xlu0 %1308
      %1310 = vrot.lane.b32.xlu0 %v1092, 96
      %v1311 = vpop.permute.xlu0 %1310
      %1312 = vrot.lane.b32.xlu0 %v1097, 96
      %v1313 = vpop.permute.xlu0 %1312
      %1314 = vrot.lane.b32.xlu0 %v1102, 96
      %v1315 = vpop.permute.xlu0 %1314
      %1316 = vrot.lane.b32.xlu0 %v1107, 96
      %v1317 = vpop.permute.xlu0 %1316
      %1318 = vrot.lane.b32.xlu0 %v1112, 96
      %v1319 = vpop.permute.xlu0 %1318
      %1320 = vrot.lane.b32.xlu0 %v1117, 96
      %v1321 = vpop.permute.xlu0 %1320
      %1322 = vrot.lane.b32.xlu0 %v1122, 96
      %v1323 = vpop.permute.xlu0 %1322
      %1324 = vrot.lane.b32.xlu0 %v1127, 96
      %v1325 = vpop.permute.xlu0 %1324
      %1326 = vrot.lane.b32.xlu0 %v1132, 96
      %v1327 = vpop.permute.xlu0 %1326
      %1328 = vrot.lane.b32.xlu0 %v1137, 96
      %v1329 = vpop.permute.xlu0 %1328
      %1330 = vrot.lane.b32.xlu0 %v1142, 96
      %v1331 = vpop.permute.xlu0 %1330
      %1332 = vrot.lane.b32.xlu0 %v1147, 96
      %v1333 = vpop.permute.xlu0 %1332
      %1334 = vrot.lane.b32.xlu0 %v1152, 96
      %v1335 = vpop.permute.xlu0 %1334
      %1336 = vrot.lane.b32.xlu0 %v1157, 96
      %v1337 = vpop.permute.xlu0 %1336
      %1338 = vrot.lane.b32.xlu0 %v1162, 96
      %v1339 = vpop.permute.xlu0 %1338
      %1340 = vrot.lane.b32.xlu0 %v1167, 96
      %v1341 = vpop.permute.xlu0 %1340
      %1342 = vrot.lane.b32.xlu0 %v1172, 96
      %v1343 = vpop.permute.xlu0 %1342
      %1344 = vrot.lane.b32.xlu0 %v1177, 96
      %v1345 = vpop.permute.xlu0 %1344
      %1346 = vrot.lane.b32.xlu0 %v1182, 96
      %v1347 = vpop.permute.xlu0 %1346
      %1348 = vrot.lane.b32.xlu0 %v1187, 96
      %v1349 = vpop.permute.xlu0 %1348
      %v1350 = vsel %vm536, %v1032, 0
      %v1352 = vsel %vm536, %v1037, 0
      %v1354 = vsel %vm536, %v1042, 0
      %v1356 = vsel %vm536, %v1047, 0
      %v1358 = vsel %vm536, %v1052, 0
      %v1360 = vsel %vm536, %v1057, 0
      %v1362 = vsel %vm536, %v1062, 0
      %v1364 = vsel %vm536, %v1067, 0
      %v1366 = vsel %vm536, %v1072, 0
      %v1368 = vsel %vm536, %v1077, 0
      %v1370 = vsel %vm536, %v1082, 0
      %v1372 = vsel %vm536, %v1087, 0
      %v1374 = vsel %vm536, %v1092, 0
      %v1376 = vsel %vm536, %v1097, 0
      %v1378 = vsel %vm536, %v1102, 0
      %v1380 = vsel %vm536, %v1107, 0
      %v1382 = vsel %vm536, %v1112, 0
      %v1384 = vsel %vm536, %v1117, 0
      %v1386 = vsel %vm536, %v1122, 0
      %v1388 = vsel %vm536, %v1127, 0
      %v1390 = vsel %vm536, %v1132, 0
      %v1392 = vsel %vm536, %v1137, 0
      %v1394 = vsel %vm536, %v1142, 0
      %v1396 = vsel %vm536, %v1147, 0
      %v1398 = vsel %vm536, %v1152, 0
      %v1400 = vsel %vm536, %v1157, 0
      %v1402 = vsel %vm536, %v1162, 0
      %v1404 = vsel %vm536, %v1167, 0
      %v1406 = vsel %vm536, %v1172, 0
      %v1408 = vsel %vm536, %v1177, 0
      %v1410 = vsel %vm536, %v1182, 0
      %v1412 = vsel %vm536, %v1187, 0
      %v1414 = vsel %vm536, %v1287, 0
      %v1416 = vsel %vm536, %v1289, 0
      %v1418 = vsel %vm536, %v1291, 0
      %v1420 = vsel %vm536, %v1293, 0
      %v1422 = vsel %vm536, %v1295, 0
      %v1424 = vsel %vm536, %v1297, 0
      %v1426 = vsel %vm536, %v1299, 0
      %v1428 = vsel %vm536, %v1301, 0
      %v1430 = vsel %vm536, %v1303, 0
      %v1432 = vsel %vm536, %v1305, 0
      %v1434 = vsel %vm536, %v1307, 0
      %v1436 = vsel %vm536, %v1309, 0
      %v1438 = vsel %vm536, %v1311, 0
      %v1440 = vsel %vm536, %v1313, 0
      %v1442 = vsel %vm536, %v1315, 0
      %v1444 = vsel %vm536, %v1317, 0
      %v1446 = vsel %vm536, %v1319, 0
      %v1448 = vsel %vm536, %v1321, 0
      %v1450 = vsel %vm536, %v1323, 0
      %v1452 = vsel %vm536, %v1325, 0
      %v1454 = vsel %vm536, %v1327, 0
      %v1456 = vsel %vm536, %v1329, 0
      %v1458 = vsel %vm536, %v1331, 0
      %v1460 = vsel %vm536, %v1333, 0
      %v1462 = vsel %vm536, %v1335, 0
      %v1464 = vsel %vm536, %v1337, 0
      %v1466 = vsel %vm536, %v1339, 0
      %v1468 = vsel %vm536, %v1341, 0
      %v1470 = vsel %vm536, %v1343, 0
      %v1472 = vsel %vm536, %v1345, 0
      %v1474 = vsel %vm536, %v1347, 0
      %v1476 = vsel %vm536, %v1349, 0
      %1478 = vmatprep.subr.mxu0 0.0
      %1479 = vmatpush1.xpose.msra.mxu0 %v1444
      %1480 = vmatprep.subr.mxu0 0.0
      %1481 = vmatpush1.xpose.msra.mxu0 %v1442
      %1482 = vmatprep.subr.mxu0 0.0
      %1483 = vmatpush1.xpose.msra.mxu0 %v1440
      %1484 = vmatprep.subr.mxu0 0.0
      %1485 = vmatpush1.xpose.msra.mxu0 %v1438
      %1486 = vmatprep.subr.mxu0 0.0
      %1487 = vmatpush1.xpose.msra.mxu0 %v1436
      %1488 = vmatprep.subr.mxu0 0.0
      %1489 = vmatpush1.xpose.msra.mxu0 %v1434
      %1490 = vmatprep.subr.mxu0 0.0
      %1491 = vmatpush1.xpose.msra.mxu0 %v1432
      %1492 = vmatprep.subr.mxu0 0.0
      %1493 = vmatpush1.xpose.msra.mxu0 %v1430
      %1494 = vmatprep.subr.mxu0 0.0
      %1495 = vmatpush1.xpose.msra.mxu0 %v1428
      %1496 = vmatprep.subr.mxu0 0.0
      %1497 = vmatpush1.xpose.msra.mxu0 %v1426
      %1498 = vmatprep.subr.mxu0 0.0
      %1499 = vmatpush1.xpose.msra.mxu0 %v1424
      %1500 = vmatprep.subr.mxu0 0.0
      %1501 = vmatpush1.xpose.msra.mxu0 %v1422
      %1502 = vmatprep.subr.mxu0 0.0
      %1503 = vmatpush1.xpose.msra.mxu0 %v1420
      %1504 = vmatprep.subr.mxu0 0.0
      %1505 = vmatpush1.xpose.msra.mxu0 %v1418
      %1506 = vmatprep.subr.mxu0 0.0
      %1507 = vmatpush1.xpose.msra.mxu0 %v1416
      %1508 = vmatprep.subr.mxu0 0.0
      %1509 = vmatpush1.xpose.msra.mxu0 %v1414
      %1510 = vmatprep.subr.mxu0 0.0
      %1511 = vmatpush2.xpose.msra.mxu0 %v1476
      %1512 = vmatprep.subr.mxu0 0.0
      %1513 = vmatpush2.xpose.msra.mxu0 %v1474
      %1514 = vmatprep.subr.mxu0 0.0
      %1515 = vmatpush2.xpose.msra.mxu0 %v1472
      %1516 = vmatprep.subr.mxu0 0.0
      %1517 = vmatpush2.xpose.msra.mxu0 %v1470
      %1518 = vmatprep.subr.mxu0 0.0
      %1519 = vmatpush2.xpose.msra.mxu0 %v1468
      %1520 = vmatprep.subr.mxu0 0.0
      %1521 = vmatpush2.xpose.msra.mxu0 %v1466
      %1522 = vmatprep.subr.mxu0 0.0
      %1523 = vmatpush2.xpose.msra.mxu0 %v1464
      %1524 = vmatprep.subr.mxu0 0.0
      %1525 = vmatpush2.xpose.msra.mxu0 %v1462
      %1526 = vmatprep.subr.mxu0 0.0
      %1527 = vmatpush2.xpose.msra.mxu0 %v1460
      %1528 = vmatprep.subr.mxu0 0.0
      %1529 = vmatpush2.xpose.msra.mxu0 %v1458
      %1530 = vmatprep.subr.mxu0 0.0
      %1531 = vmatpush2.xpose.msra.mxu0 %v1456
      %1532 = vmatprep.subr.mxu0 0.0
      %1533 = vmatpush2.xpose.msra.mxu0 %v1454
      %1534 = vmatprep.subr.mxu0 0.0
      %1535 = vmatpush2.xpose.msra.mxu0 %v1452
      %1536 = vmatprep.subr.mxu0 0.0
      %1537 = vmatpush2.xpose.msra.mxu0 %v1450
      %1538 = vmatprep.subr.mxu0 0.0
      %1539 = vmatpush2.xpose.msra.mxu0 %v1448
      %1540 = vmatprep.subr.mxu0 0.0
      %1541 = vmatpush2.xpose.msra.mxu0 %v1446
      %1542 = vmatprep.mubr.f32.mxu0 0.0
      %1543 = vmatmul.mubr.f32.gmra.mxu0 %v1350
      %v1544 = vpop.f32.mrf.mxu0
      %v1545 = vadd.f32 %v1190, %v1544
      %v1546 = vpop.f32.mrf.mxu0
      %v1547 = vadd.f32 %v1191, %v1546
      %1548 = vmatprep.mubr.f32.mxu0 0.0
      %1549 = vmatmul.mubr.f32.gmra.mxu0 %v1352
      %v1550 = vpop.f32.mrf.mxu0
      %v1551 = vadd.f32 %v1192, %v1550
      %v1552 = vpop.f32.mrf.mxu0
      %v1553 = vadd.f32 %v1193, %v1552
      %1554 = vmatprep.mubr.f32.mxu0 0.0
      %1555 = vmatmul.mubr.f32.gmra.mxu0 %v1354
      %v1556 = vpop.f32.mrf.mxu0
      %v1557 = vadd.f32 %v1194, %v1556
      %v1558 = vpop.f32.mrf.mxu0
      %v1559 = vadd.f32 %v1195, %v1558
      %1560 = vmatprep.mubr.f32.mxu0 0.0
      %1561 = vmatmul.mubr.f32.gmra.mxu0 %v1356
      %v1562 = vpop.f32.mrf.mxu0
      %v1563 = vadd.f32 %v1196, %v1562
      %v1564 = vpop.f32.mrf.mxu0
      %v1565 = vadd.f32 %v1197, %v1564
      %1566 = vmatprep.mubr.f32.mxu0 0.0
      %1567 = vmatmul.mubr.f32.gmra.mxu0 %v1358
      %v1568 = vpop.f32.mrf.mxu0
      %v1569 = vadd.f32 %v1198, %v1568
      %v1570 = vpop.f32.mrf.mxu0
      %v1571 = vadd.f32 %v1199, %v1570
      %1572 = vmatprep.mubr.f32.mxu0 0.0
      %1573 = vmatmul.mubr.f32.gmra.mxu0 %v1360
      %v1574 = vpop.f32.mrf.mxu0
      %v1575 = vadd.f32 %v1200, %v1574
      %v1576 = vpop.f32.mrf.mxu0
      %v1577 = vadd.f32 %v1201, %v1576
      %1578 = vmatprep.mubr.f32.mxu0 0.0
      %1579 = vmatmul.mubr.f32.gmra.mxu0 %v1362
      %v1580 = vpop.f32.mrf.mxu0
      %v1581 = vadd.f32 %v1202, %v1580
      %v1582 = vpop.f32.mrf.mxu0
      %v1583 = vadd.f32 %v1203, %v1582
      %1584 = vmatprep.mubr.f32.mxu0 0.0
      %1585 = vmatmul.mubr.f32.gmra.mxu0 %v1364
      %v1586 = vpop.f32.mrf.mxu0
      %v1587 = vadd.f32 %v1204, %v1586
      %v1588 = vpop.f32.mrf.mxu0
      %v1589 = vadd.f32 %v1205, %v1588
      %1590 = vmatprep.mubr.f32.mxu0 0.0
      %1591 = vmatmul.mubr.f32.gmra.mxu0 %v1366
      %v1592 = vpop.f32.mrf.mxu0
      %v1593 = vadd.f32 %v1206, %v1592
      %v1594 = vpop.f32.mrf.mxu0
      %v1595 = vadd.f32 %v1207, %v1594
      %1596 = vmatprep.mubr.f32.mxu0 0.0
      %1597 = vmatmul.mubr.f32.gmra.mxu0 %v1368
      %v1598 = vpop.f32.mrf.mxu0
      %v1599 = vadd.f32 %v1208, %v1598
      %v1600 = vpop.f32.mrf.mxu0
      %v1601 = vadd.f32 %v1209, %v1600
      %1602 = vmatprep.mubr.f32.mxu0 0.0
      %1603 = vmatmul.mubr.f32.gmra.mxu0 %v1370
      %v1604 = vpop.f32.mrf.mxu0
      %v1605 = vadd.f32 %v1210, %v1604
      %v1606 = vpop.f32.mrf.mxu0
      %v1607 = vadd.f32 %v1211, %v1606
      %1608 = vmatprep.mubr.f32.mxu0 0.0
      %1609 = vmatmul.mubr.f32.gmra.mxu0 %v1372
      %v1610 = vpop.f32.mrf.mxu0
      %v1611 = vadd.f32 %v1212, %v1610
      %v1612 = vpop.f32.mrf.mxu0
      %v1613 = vadd.f32 %v1213, %v1612
      %1614 = vmatprep.mubr.f32.mxu0 0.0
      %1615 = vmatmul.mubr.f32.gmra.mxu0 %v1374
      %v1616 = vpop.f32.mrf.mxu0
      %v1617 = vadd.f32 %v1214, %v1616
      %v1618 = vpop.f32.mrf.mxu0
      %v1619 = vadd.f32 %v1215, %v1618
      %1620 = vmatprep.mubr.f32.mxu0 0.0
      %1621 = vmatmul.mubr.f32.gmra.mxu0 %v1376
      %v1622 = vpop.f32.mrf.mxu0
      %v1623 = vadd.f32 %v1216, %v1622
      %v1624 = vpop.f32.mrf.mxu0
      %v1625 = vadd.f32 %v1217, %v1624
      %1626 = vmatprep.mubr.f32.mxu0 0.0
      %1627 = vmatmul.mubr.f32.gmra.mxu0 %v1378
      %v1628 = vpop.f32.mrf.mxu0
      %v1629 = vadd.f32 %v1218, %v1628
      %v1630 = vpop.f32.mrf.mxu0
      %v1631 = vadd.f32 %v1219, %v1630
      %1632 = vmatprep.mubr.f32.mxu0 0.0
      %1633 = vmatmul.mubr.f32.gmra.mxu0 %v1380
      %v1634 = vpop.f32.mrf.mxu0
      %v1635 = vadd.f32 %v1220, %v1634
      %v1636 = vpop.f32.mrf.mxu0
      %v1637 = vadd.f32 %v1221, %v1636
      %1638 = vmatprep.mubr.f32.mxu0 0.0
      %1639 = vmatmul.mubr.f32.gmra.mxu0 %v1382
      %v1640 = vpop.f32.mrf.mxu0
      %v1641 = vadd.f32 %v1222, %v1640
      %v1642 = vpop.f32.mrf.mxu0
      %v1643 = vadd.f32 %v1223, %v1642
      %1644 = vmatprep.mubr.f32.mxu0 0.0
      %1645 = vmatmul.mubr.f32.gmra.mxu0 %v1384
      %v1646 = vpop.f32.mrf.mxu0
      %v1647 = vadd.f32 %v1224, %v1646
      %v1648 = vpop.f32.mrf.mxu0
      %v1649 = vadd.f32 %v1225, %v1648
      %1650 = vmatprep.mubr.f32.mxu0 0.0
      %1651 = vmatmul.mubr.f32.gmra.mxu0 %v1386
      %v1652 = vpop.f32.mrf.mxu0
      %v1653 = vadd.f32 %v1226, %v1652
      %v1654 = vpop.f32.mrf.mxu0
      %v1655 = vadd.f32 %v1227, %v1654
      %1656 = vmatprep.mubr.f32.mxu0 0.0
      %1657 = vmatmul.mubr.f32.gmra.mxu0 %v1388
      %v1658 = vpop.f32.mrf.mxu0
      %v1659 = vadd.f32 %v1228, %v1658
      %v1660 = vpop.f32.mrf.mxu0
      %v1661 = vadd.f32 %v1229, %v1660
      %1662 = vmatprep.mubr.f32.mxu0 0.0
      %1663 = vmatmul.mubr.f32.gmra.mxu0 %v1390
      %v1664 = vpop.f32.mrf.mxu0
      %v1665 = vadd.f32 %v1230, %v1664
      %v1666 = vpop.f32.mrf.mxu0
      %v1667 = vadd.f32 %v1231, %v1666
      %1668 = vmatprep.mubr.f32.mxu0 0.0
      %1669 = vmatmul.mubr.f32.gmra.mxu0 %v1392
      %v1670 = vpop.f32.mrf.mxu0
      %v1671 = vadd.f32 %v1232, %v1670
      %v1672 = vpop.f32.mrf.mxu0
      %v1673 = vadd.f32 %v1233, %v1672
      %1674 = vmatprep.mubr.f32.mxu0 0.0
      %1675 = vmatmul.mubr.f32.gmra.mxu0 %v1394
      %v1676 = vpop.f32.mrf.mxu0
      %v1677 = vadd.f32 %v1234, %v1676
      %v1678 = vpop.f32.mrf.mxu0
      %v1679 = vadd.f32 %v1235, %v1678
      %1680 = vmatprep.mubr.f32.mxu0 0.0
      %1681 = vmatmul.mubr.f32.gmra.mxu0 %v1396
      %v1682 = vpop.f32.mrf.mxu0
      %v1683 = vadd.f32 %v1236, %v1682
      %v1684 = vpop.f32.mrf.mxu0
      %v1685 = vadd.f32 %v1237, %v1684
      %1686 = vmatprep.mubr.f32.mxu0 0.0
      %1687 = vmatmul.mubr.f32.gmra.mxu0 %v1398
      %v1688 = vpop.f32.mrf.mxu0
      %v1689 = vadd.f32 %v1238, %v1688
      %v1690 = vpop.f32.mrf.mxu0
      %v1691 = vadd.f32 %v1239, %v1690
      %1692 = vmatprep.mubr.f32.mxu0 0.0
      %1693 = vmatmul.mubr.f32.gmra.mxu0 %v1400
      %v1694 = vpop.f32.mrf.mxu0
      %v1695 = vadd.f32 %v1240, %v1694
      %v1696 = vpop.f32.mrf.mxu0
      %v1697 = vadd.f32 %v1241, %v1696
      %1698 = vmatprep.mubr.f32.mxu0 0.0
      %1699 = vmatmul.mubr.f32.gmra.mxu0 %v1402
      %v1700 = vpop.f32.mrf.mxu0
      %v1701 = vadd.f32 %v1242, %v1700
      %v1702 = vpop.f32.mrf.mxu0
      %v1703 = vadd.f32 %v1243, %v1702
      %1704 = vmatprep.mubr.f32.mxu0 0.0
      %1705 = vmatmul.mubr.f32.gmra.mxu0 %v1404
      %v1706 = vpop.f32.mrf.mxu0
      %v1707 = vadd.f32 %v1244, %v1706
      %v1708 = vpop.f32.mrf.mxu0
      %v1709 = vadd.f32 %v1245, %v1708
      %1710 = vmatprep.mubr.f32.mxu0 0.0
      %1711 = vmatmul.mubr.f32.gmra.mxu0 %v1406
      %v1712 = vpop.f32.mrf.mxu0
      %v1713 = vadd.f32 %v1246, %v1712
      %v1714 = vpop.f32.mrf.mxu0
      %v1715 = vadd.f32 %v1247, %v1714
      %1716 = vmatprep.mubr.f32.mxu0 0.0
      %1717 = vmatmul.mubr.f32.gmra.mxu0 %v1408
      %v1718 = vpop.f32.mrf.mxu0
      %v1719 = vadd.f32 %v1248, %v1718
      %v1720 = vpop.f32.mrf.mxu0
      %v1721 = vadd.f32 %v1249, %v1720
      %1722 = vmatprep.mubr.f32.mxu0 0.0
      %1723 = vmatmul.mubr.f32.gmra.mxu0 %v1410
      %v1724 = vpop.f32.mrf.mxu0
      %v1725 = vadd.f32 %v1250, %v1724
      %v1726 = vpop.f32.mrf.mxu0
      %v1727 = vadd.f32 %v1251, %v1726
      %1728 = vmatprep.mubr.f32.mxu0 0.0
      %1729 = vmatmul.mubr.f32.gmra.mxu0 %v1412
      %v1730 = vpop.f32.mrf.mxu0
      %v1731 = vadd.f32 %v1252, %v1730
      %v1732 = vpop.f32.mrf.mxu0
      %v1733 = vadd.f32 %v1253, %v1732
      %1734 = vdwg.mxu0
      %v1735 = vmax.f32 %v1545, %v1547
      %1736 = vmax.xlane.f32.xlu0 %v1735
      %v1737 = vpop.xlane.xlu0 %1736
      %v1738 = vmax.f32 %v1551, %v1553
      %1739 = vmax.xlane.f32.xlu0 %v1738
      %v1740 = vpop.xlane.xlu0 %1739
      %v1741 = vmax.f32 %v1557, %v1559
      %1742 = vmax.xlane.f32.xlu0 %v1741
      %v1743 = vpop.xlane.xlu0 %1742
      %v1744 = vmax.f32 %v1563, %v1565
      %1745 = vmax.xlane.f32.xlu0 %v1744
      %v1746 = vpop.xlane.xlu0 %1745
      %v1747 = vmax.f32 %v1569, %v1571
      %1748 = vmax.xlane.f32.xlu0 %v1747
      %v1749 = vpop.xlane.xlu0 %1748
      %v1750 = vmax.f32 %v1575, %v1577
      %1751 = vmax.xlane.f32.xlu0 %v1750
      %v1752 = vpop.xlane.xlu0 %1751
      %v1753 = vmax.f32 %v1581, %v1583
      %1754 = vmax.xlane.f32.xlu0 %v1753
      %v1755 = vpop.xlane.xlu0 %1754
      %v1756 = vmax.f32 %v1587, %v1589
      %1757 = vmax.xlane.f32.xlu0 %v1756
      %v1758 = vpop.xlane.xlu0 %1757
      %v1759 = vmax.f32 %v1593, %v1595
      %1760 = vmax.xlane.f32.xlu0 %v1759
      %v1761 = vpop.xlane.xlu0 %1760
      %v1762 = vmax.f32 %v1599, %v1601
      %1763 = vmax.xlane.f32.xlu0 %v1762
      %v1764 = vpop.xlane.xlu0 %1763
      %v1765 = vmax.f32 %v1605, %v1607
      %1766 = vmax.xlane.f32.xlu0 %v1765
      %v1767 = vpop.xlane.xlu0 %1766
      %v1768 = vmax.f32 %v1611, %v1613
      %1769 = vmax.xlane.f32.xlu0 %v1768
      %v1770 = vpop.xlane.xlu0 %1769
      %v1771 = vmax.f32 %v1617, %v1619
      %1772 = vmax.xlane.f32.xlu0 %v1771
      %v1773 = vpop.xlane.xlu0 %1772
      %v1774 = vmax.f32 %v1623, %v1625
      %1775 = vmax.xlane.f32.xlu0 %v1774
      %v1776 = vpop.xlane.xlu0 %1775
      %v1777 = vmax.f32 %v1629, %v1631
      %1778 = vmax.xlane.f32.xlu0 %v1777
      %v1779 = vpop.xlane.xlu0 %1778
      %v1780 = vmax.f32 %v1635, %v1637
      %1781 = vmax.xlane.f32.xlu0 %v1780
      %v1782 = vpop.xlane.xlu0 %1781
      %v1783 = vmax.f32 %v1641, %v1643
      %1784 = vmax.xlane.f32.xlu0 %v1783
      %v1785 = vpop.xlane.xlu0 %1784
      %v1786 = vmax.f32 %v1647, %v1649
      %1787 = vmax.xlane.f32.xlu0 %v1786
      %v1788 = vpop.xlane.xlu0 %1787
      %v1789 = vmax.f32 %v1653, %v1655
      %1790 = vmax.xlane.f32.xlu0 %v1789
      %v1791 = vpop.xlane.xlu0 %1790
      %v1792 = vmax.f32 %v1659, %v1661
      %1793 = vmax.xlane.f32.xlu0 %v1792
      %v1794 = vpop.xlane.xlu0 %1793
      %v1795 = vmax.f32 %v1665, %v1667
      %1796 = vmax.xlane.f32.xlu0 %v1795
      %v1797 = vpop.xlane.xlu0 %1796
      %v1798 = vmax.f32 %v1671, %v1673
      %1799 = vmax.xlane.f32.xlu0 %v1798
      %v1800 = vpop.xlane.xlu0 %1799
      %v1801 = vmax.f32 %v1677, %v1679
      %1802 = vmax.xlane.f32.xlu0 %v1801
      %v1803 = vpop.xlane.xlu0 %1802
      %v1804 = vmax.f32 %v1683, %v1685
      %1805 = vmax.xlane.f32.xlu0 %v1804
      %v1806 = vpop.xlane.xlu0 %1805
      %v1807 = vmax.f32 %v1689, %v1691
      %1808 = vmax.xlane.f32.xlu0 %v1807
      %v1809 = vpop.xlane.xlu0 %1808
      %v1810 = vmax.f32 %v1695, %v1697
      %1811 = vmax.xlane.f32.xlu0 %v1810
      %v1812 = vpop.xlane.xlu0 %1811
      %v1813 = vmax.f32 %v1701, %v1703
      %1814 = vmax.xlane.f32.xlu0 %v1813
      %v1815 = vpop.xlane.xlu0 %1814
      %v1816 = vmax.f32 %v1707, %v1709
      %1817 = vmax.xlane.f32.xlu0 %v1816
      %v1818 = vpop.xlane.xlu0 %1817
      %v1819 = vmax.f32 %v1713, %v1715
      %1820 = vmax.xlane.f32.xlu0 %v1819
      %v1821 = vpop.xlane.xlu0 %1820
      %v1822 = vmax.f32 %v1719, %v1721
      %1823 = vmax.xlane.f32.xlu0 %v1822
      %v1824 = vpop.xlane.xlu0 %1823
      %v1825 = vmax.f32 %v1725, %v1727
      %1826 = vmax.xlane.f32.xlu0 %v1825
      %v1827 = vpop.xlane.xlu0 %1826
      %v1828 = vmax.f32 %v1731, %v1733
      %1829 = vmax.xlane.f32.xlu0 %v1828
      %v1830 = vpop.xlane.xlu0 %1829
      %v1831 = vsub.f32 %v1545, %v1737
      %v1832 = vsub.f32 %v1547, %v1737
      %v1833 = vsub.f32 %v1551, %v1740
      %v1834 = vsub.f32 %v1553, %v1740
      %v1835 = vsub.f32 %v1557, %v1743
      %v1836 = vsub.f32 %v1559, %v1743
      %v1837 = vsub.f32 %v1563, %v1746
      %v1838 = vsub.f32 %v1565, %v1746
      %v1839 = vsub.f32 %v1569, %v1749
      %v1840 = vsub.f32 %v1571, %v1749
      %v1841 = vsub.f32 %v1575, %v1752
      %v1842 = vsub.f32 %v1577, %v1752
      %v1843 = vsub.f32 %v1581, %v1755
      %v1844 = vsub.f32 %v1583, %v1755
      %v1845 = vsub.f32 %v1587, %v1758
      %v1846 = vsub.f32 %v1589, %v1758
      %v1847 = vsub.f32 %v1593, %v1761
      %v1848 = vsub.f32 %v1595, %v1761
      %v1849 = vsub.f32 %v1599, %v1764
      %v1850 = vsub.f32 %v1601, %v1764
      %v1851 = vsub.f32 %v1605, %v1767
      %v1852 = vsub.f32 %v1607, %v1767
      %v1853 = vsub.f32 %v1611, %v1770
      %v1854 = vsub.f32 %v1613, %v1770
      %v1855 = vsub.f32 %v1617, %v1773
      %v1856 = vsub.f32 %v1619, %v1773
      %v1857 = vsub.f32 %v1623, %v1776
      %v1858 = vsub.f32 %v1625, %v1776
      %v1859 = vsub.f32 %v1629, %v1779
      %v1860 = vsub.f32 %v1631, %v1779
      %v1861 = vsub.f32 %v1635, %v1782
      %v1862 = vsub.f32 %v1637, %v1782
      %v1863 = vsub.f32 %v1641, %v1785
      %v1864 = vsub.f32 %v1643, %v1785
      %v1865 = vsub.f32 %v1647, %v1788
      %v1866 = vsub.f32 %v1649, %v1788
      %v1867 = vsub.f32 %v1653, %v1791
      %v1868 = vsub.f32 %v1655, %v1791
      %v1869 = vsub.f32 %v1659, %v1794
      %v1870 = vsub.f32 %v1661, %v1794
      %v1871 = vsub.f32 %v1665, %v1797
      %v1872 = vsub.f32 %v1667, %v1797
      %v1873 = vsub.f32 %v1671, %v1800
      %v1874 = vsub.f32 %v1673, %v1800
      %v1875 = vsub.f32 %v1677, %v1803
      %v1876 = vsub.f32 %v1679, %v1803
      %v1877 = vsub.f32 %v1683, %v1806
      %v1878 = vsub.f32 %v1685, %v1806
      %v1879 = vsub.f32 %v1689, %v1809
      %v1880 = vsub.f32 %v1691, %v1809
      %v1881 = vsub.f32 %v1695, %v1812
      %v1882 = vsub.f32 %v1697, %v1812
      %v1883 = vsub.f32 %v1701, %v1815
      %v1884 = vsub.f32 %v1703, %v1815
      %v1885 = vsub.f32 %v1707, %v1818
      %v1886 = vsub.f32 %v1709, %v1818
      %v1887 = vsub.f32 %v1713, %v1821
      %v1888 = vsub.f32 %v1715, %v1821
      %v1889 = vsub.f32 %v1719, %v1824
      %v1890 = vsub.f32 %v1721, %v1824
      %v1891 = vsub.f32 %v1725, %v1827
      %v1892 = vsub.f32 %v1727, %v1827
      %v1893 = vsub.f32 %v1731, %v1830
      %v1894 = vsub.f32 %v1733, %v1830
      %v1895 = vmul.f32 %v1831, 1.442695
      %v1896 = vpow.pop %v1895
      %v1897 = vmul.f32 %v1832, 1.442695
      %v1898 = vpow.pop %v1897
      %v1899 = vmul.f32 %v1833, 1.442695
      %v1900 = vpow.pop %v1899
      %v1901 = vmul.f32 %v1834, 1.442695
      %v1902 = vpow.pop %v1901
      %v1903 = vmul.f32 %v1835, 1.442695
      %v1904 = vpow.pop %v1903
      %v1905 = vmul.f32 %v1836, 1.442695
      %v1906 = vpow.pop %v1905
      %v1907 = vmul.f32 %v1837, 1.442695
      %v1908 = vpow.pop %v1907
      %v1909 = vmul.f32 %v1838, 1.442695
      %v1910 = vpow.pop %v1909
      %v1911 = vmul.f32 %v1839, 1.442695
      %v1912 = vpow.pop %v1911
      %v1913 = vmul.f32 %v1840, 1.442695
      %v1914 = vpow.pop %v1913
      %v1915 = vmul.f32 %v1841, 1.442695
      %v1916 = vpow.pop %v1915
      %v1917 = vmul.f32 %v1842, 1.442695
      %v1918 = vpow.pop %v1917
      %v1919 = vmul.f32 %v1843, 1.442695
      %v1920 = vpow.pop %v1919
      %v1921 = vmul.f32 %v1844, 1.442695
      %v1922 = vpow.pop %v1921
      %v1923 = vmul.f32 %v1845, 1.442695
      %v1924 = vpow.pop %v1923
      %v1925 = vmul.f32 %v1846, 1.442695
      %v1926 = vpow.pop %v1925
      %v1927 = vmul.f32 %v1847, 1.442695
      %v1928 = vpow.pop %v1927
      %v1929 = vmul.f32 %v1848, 1.442695
      %v1930 = vpow.pop %v1929
      %v1931 = vmul.f32 %v1849, 1.442695
      %v1932 = vpow.pop %v1931
      %v1933 = vmul.f32 %v1850, 1.442695
      %v1934 = vpow.pop %v1933
      %v1935 = vmul.f32 %v1851, 1.442695
      %v1936 = vpow.pop %v1935
      %v1937 = vmul.f32 %v1852, 1.442695
      %v1938 = vpow.pop %v1937
      %v1939 = vmul.f32 %v1853, 1.442695
      %v1940 = vpow.pop %v1939
      %v1941 = vmul.f32 %v1854, 1.442695
      %v1942 = vpow.pop %v1941
      %v1943 = vmul.f32 %v1855, 1.442695
      %v1944 = vpow.pop %v1943
      %v1945 = vmul.f32 %v1856, 1.442695
      %v1946 = vpow.pop %v1945
      %v1947 = vmul.f32 %v1857, 1.442695
      %v1948 = vpow.pop %v1947
      %v1949 = vmul.f32 %v1858, 1.442695
      %v1950 = vpow.pop %v1949
      %v1951 = vmul.f32 %v1859, 1.442695
      %v1952 = vpow.pop %v1951
      %v1953 = vmul.f32 %v1860, 1.442695
      %v1954 = vpow.pop %v1953
      %v1955 = vmul.f32 %v1861, 1.442695
      %v1956 = vpow.pop %v1955
      %v1957 = vmul.f32 %v1862, 1.442695
      %v1958 = vpow.pop %v1957
      %v1959 = vmul.f32 %v1863, 1.442695
      %v1960 = vpow.pop %v1959
      %v1961 = vmul.f32 %v1864, 1.442695
      %v1962 = vpow.pop %v1961
      %v1963 = vmul.f32 %v1865, 1.442695
      %v1964 = vpow.pop %v1963
      %v1965 = vmul.f32 %v1866, 1.442695
      %v1966 = vpow.pop %v1965
      %v1967 = vmul.f32 %v1867, 1.442695
      %v1968 = vpow.pop %v1967
      %v1969 = vmul.f32 %v1868, 1.442695
      %v1970 = vpow.pop %v1969
      %v1971 = vmul.f32 %v1869, 1.442695
      %v1972 = vpow.pop %v1971
      %v1973 = vmul.f32 %v1870, 1.442695
      %v1974 = vpow.pop %v1973
      %v1975 = vmul.f32 %v1871, 1.442695
      %v1976 = vpow.pop %v1975
      %v1977 = vmul.f32 %v1872, 1.442695
      %v1978 = vpow.pop %v1977
      %v1979 = vmul.f32 %v1873, 1.442695
      %v1980 = vpow.pop %v1979
      %v1981 = vmul.f32 %v1874, 1.442695
      %v1982 = vpow.pop %v1981
      %v1983 = vmul.f32 %v1875, 1.442695
      %v1984 = vpow.pop %v1983
      %v1985 = vmul.f32 %v1876, 1.442695
      %v1986 = vpow.pop %v1985
      %v1987 = vmul.f32 %v1877, 1.442695
      %v1988 = vpow.pop %v1987
      %v1989 = vmul.f32 %v1878, 1.442695
      %v1990 = vpow.pop %v1989
      %v1991 = vmul.f32 %v1879, 1.442695
      %v1992 = vpow.pop %v1991
      %v1993 = vmul.f32 %v1880, 1.442695
      %v1994 = vpow.pop %v1993
      %v1995 = vmul.f32 %v1881, 1.442695
      %v1996 = vpow.pop %v1995
      %v1997 = vmul.f32 %v1882, 1.442695
      %v1998 = vpow.pop %v1997
      %v1999 = vmul.f32 %v1883, 1.442695
      %v2000 = vpow.pop %v1999
      %v2001 = vmul.f32 %v1884, 1.442695
      %v2002 = vpow.pop %v2001
      %v2003 = vmul.f32 %v1885, 1.442695
      %v2004 = vpow.pop %v2003
      %v2005 = vmul.f32 %v1886, 1.442695
      %v2006 = vpow.pop %v2005
      %v2007 = vmul.f32 %v1887, 1.442695
      %v2008 = vpow.pop %v2007
      %v2009 = vmul.f32 %v1888, 1.442695
      %v2010 = vpow.pop %v2009
      %v2011 = vmul.f32 %v1889, 1.442695
      %v2012 = vpow.pop %v2011
      %v2013 = vmul.f32 %v1890, 1.442695
      %v2014 = vpow.pop %v2013
      %v2015 = vmul.f32 %v1891, 1.442695
      %v2016 = vpow.pop %v2015
      %v2017 = vmul.f32 %v1892, 1.442695
      %v2018 = vpow.pop %v2017
      %v2019 = vmul.f32 %v1893, 1.442695
      %v2020 = vpow.pop %v2019
      %v2021 = vmul.f32 %v1894, 1.442695
      %v2022 = vpow.pop %v2021
      %v2023 = vadd.f32 %v1896, %v1898
      %2024 = vadd.xlane.f32.xlu0 %v2023
      %v2025 = vpop.xlane.xlu0 %2024
      %v2026 = vadd.f32 %v1900, %v1902
      %2027 = vadd.xlane.f32.xlu0 %v2026
      %v2028 = vpop.xlane.xlu0 %2027
      %v2029 = vadd.f32 %v1904, %v1906
      %2030 = vadd.xlane.f32.xlu0 %v2029
      %v2031 = vpop.xlane.xlu0 %2030
      %v2032 = vadd.f32 %v1908, %v1910
      %2033 = vadd.xlane.f32.xlu0 %v2032
      %v2034 = vpop.xlane.xlu0 %2033
      %v2035 = vadd.f32 %v1912, %v1914
      %2036 = vadd.xlane.f32.xlu0 %v2035
      %v2037 = vpop.xlane.xlu0 %2036
      %v2038 = vadd.f32 %v1916, %v1918
      %2039 = vadd.xlane.f32.xlu0 %v2038
      %v2040 = vpop.xlane.xlu0 %2039
      %v2041 = vadd.f32 %v1920, %v1922
      %2042 = vadd.xlane.f32.xlu0 %v2041
      %v2043 = vpop.xlane.xlu0 %2042
      %v2044 = vadd.f32 %v1924, %v1926
      %2045 = vadd.xlane.f32.xlu0 %v2044
      %v2046 = vpop.xlane.xlu0 %2045
      %v2047 = vadd.f32 %v1928, %v1930
      %2048 = vadd.xlane.f32.xlu0 %v2047
      %v2049 = vpop.xlane.xlu0 %2048
      %v2050 = vadd.f32 %v1932, %v1934
      %2051 = vadd.xlane.f32.xlu0 %v2050
      %v2052 = vpop.xlane.xlu0 %2051
      %v2053 = vadd.f32 %v1936, %v1938
      %2054 = vadd.xlane.f32.xlu0 %v2053
      %v2055 = vpop.xlane.xlu0 %2054
      %v2056 = vadd.f32 %v1940, %v1942
      %2057 = vadd.xlane.f32.xlu0 %v2056
      %v2058 = vpop.xlane.xlu0 %2057
      %v2059 = vadd.f32 %v1944, %v1946
      %2060 = vadd.xlane.f32.xlu0 %v2059
      %v2061 = vpop.xlane.xlu0 %2060
      %v2062 = vadd.f32 %v1948, %v1950
      %2063 = vadd.xlane.f32.xlu0 %v2062
      %v2064 = vpop.xlane.xlu0 %2063
      %v2065 = vadd.f32 %v1952, %v1954
      %2066 = vadd.xlane.f32.xlu0 %v2065
      %v2067 = vpop.xlane.xlu0 %2066
      %v2068 = vadd.f32 %v1956, %v1958
      %2069 = vadd.xlane.f32.xlu0 %v2068
      %v2070 = vpop.xlane.xlu0 %2069
      %v2071 = vadd.f32 %v1960, %v1962
      %2072 = vadd.xlane.f32.xlu0 %v2071
      %v2073 = vpop.xlane.xlu0 %2072
      %v2074 = vadd.f32 %v1964, %v1966
      %2075 = vadd.xlane.f32.xlu0 %v2074
      %v2076 = vpop.xlane.xlu0 %2075
      %v2077 = vadd.f32 %v1968, %v1970
      %2078 = vadd.xlane.f32.xlu0 %v2077
      %v2079 = vpop.xlane.xlu0 %2078
      %v2080 = vadd.f32 %v1972, %v1974
      %2081 = vadd.xlane.f32.xlu0 %v2080
      %v2082 = vpop.xlane.xlu0 %2081
      %v2083 = vadd.f32 %v1976, %v1978
      %2084 = vadd.xlane.f32.xlu0 %v2083
      %v2085 = vpop.xlane.xlu0 %2084
      %v2086 = vadd.f32 %v1980, %v1982
      %2087 = vadd.xlane.f32.xlu0 %v2086
      %v2088 = vpop.xlane.xlu0 %2087
      %v2089 = vadd.f32 %v1984, %v1986
      %2090 = vadd.xlane.f32.xlu0 %v2089
      %v2091 = vpop.xlane.xlu0 %2090
      %v2092 = vadd.f32 %v1988, %v1990
      %2093 = vadd.xlane.f32.xlu0 %v2092
      %v2094 = vpop.xlane.xlu0 %2093
      %v2095 = vadd.f32 %v1992, %v1994
      %2096 = vadd.xlane.f32.xlu0 %v2095
      %v2097 = vpop.xlane.xlu0 %2096
      %v2098 = vadd.f32 %v1996, %v1998
      %2099 = vadd.xlane.f32.xlu0 %v2098
      %v2100 = vpop.xlane.xlu0 %2099
      %v2101 = vadd.f32 %v2000, %v2002
      %2102 = vadd.xlane.f32.xlu0 %v2101
      %v2103 = vpop.xlane.xlu0 %2102
      %v2104 = vadd.f32 %v2004, %v2006
      %2105 = vadd.xlane.f32.xlu0 %v2104
      %v2106 = vpop.xlane.xlu0 %2105
      %v2107 = vadd.f32 %v2008, %v2010
      %2108 = vadd.xlane.f32.xlu0 %v2107
      %v2109 = vpop.xlane.xlu0 %2108
      %v2110 = vadd.f32 %v2012, %v2014
      %2111 = vadd.xlane.f32.xlu0 %v2110
      %v2112 = vpop.xlane.xlu0 %2111
      %v2113 = vadd.f32 %v2016, %v2018
      %2114 = vadd.xlane.f32.xlu0 %v2113
      %v2115 = vpop.xlane.xlu0 %2114
      %v2116 = vadd.f32 %v2020, %v2022
      %2117 = vadd.xlane.f32.xlu0 %v2116
      %v2118 = vpop.xlane.xlu0 %2117
      %v2119 = vrcp.pop %v2025
      %v2120 = vrcp.pop %v2028
      %v2121 = vrcp.pop %v2031
      %v2122 = vrcp.pop %v2034
      %v2123 = vrcp.pop %v2037
      %v2124 = vrcp.pop %v2040
      %v2125 = vrcp.pop %v2043
      %v2126 = vrcp.pop %v2046
      %v2127 = vrcp.pop %v2049
      %v2128 = vrcp.pop %v2052
      %v2129 = vrcp.pop %v2055
      %v2130 = vrcp.pop %v2058
      %v2131 = vrcp.pop %v2061
      %v2132 = vrcp.pop %v2064
      %v2133 = vrcp.pop %v2067
      %v2134 = vrcp.pop %v2070
      %v2135 = vrcp.pop %v2073
      %v2136 = vrcp.pop %v2076
      %v2137 = vrcp.pop %v2079
      %v2138 = vrcp.pop %v2082
      %v2139 = vrcp.pop %v2085
      %v2140 = vrcp.pop %v2088
      %v2141 = vrcp.pop %v2091
      %v2142 = vrcp.pop %v2094
      %v2143 = vrcp.pop %v2097
      %v2144 = vrcp.pop %v2100
      %v2145 = vrcp.pop %v2103
      %v2146 = vrcp.pop %v2106
      %v2147 = vrcp.pop %v2109
      %v2148 = vrcp.pop %v2112
      %v2149 = vrcp.pop %v2115
      %v2150 = vrcp.pop %v2118
      %v2151 = vmul.f32 %v1896, %v2119
      %v2152 = vmul.f32 %v1898, %v2119
      %v2153 = vmul.f32 %v1900, %v2120
      %v2154 = vmul.f32 %v1902, %v2120
      %v2155 = vmul.f32 %v1904, %v2121
      %v2156 = vmul.f32 %v1906, %v2121
      %v2157 = vmul.f32 %v1908, %v2122
      %v2158 = vmul.f32 %v1910, %v2122
      %v2159 = vmul.f32 %v1912, %v2123
      %v2160 = vmul.f32 %v1914, %v2123
      %v2161 = vmul.f32 %v1916, %v2124
      %v2162 = vmul.f32 %v1918, %v2124
      %v2163 = vmul.f32 %v1920, %v2125
      %v2164 = vmul.f32 %v1922, %v2125
      %v2165 = vmul.f32 %v1924, %v2126
      %v2166 = vmul.f32 %v1926, %v2126
      %v2167 = vmul.f32 %v1928, %v2127
      %v2168 = vmul.f32 %v1930, %v2127
      %v2169 = vmul.f32 %v1932, %v2128
      %v2170 = vmul.f32 %v1934, %v2128
      %v2171 = vmul.f32 %v1936, %v2129
      %v2172 = vmul.f32 %v1938, %v2129
      %v2173 = vmul.f32 %v1940, %v2130
      %v2174 = vmul.f32 %v1942, %v2130
      %v2175 = vmul.f32 %v1944, %v2131
      %v2176 = vmul.f32 %v1946, %v2131
      %v2177 = vmul.f32 %v1948, %v2132
      %v2178 = vmul.f32 %v1950, %v2132
      %v2179 = vmul.f32 %v1952, %v2133
      %v2180 = vmul.f32 %v1954, %v2133
      %v2181 = vmul.f32 %v1956, %v2134
      %v2182 = vmul.f32 %v1958, %v2134
      %v2183 = vmul.f32 %v1960, %v2135
      %v2184 = vmul.f32 %v1962, %v2135
      %v2185 = vmul.f32 %v1964, %v2136
      %v2186 = vmul.f32 %v1966, %v2136
      %v2187 = vmul.f32 %v1968, %v2137
      %v2188 = vmul.f32 %v1970, %v2137
      %v2189 = vmul.f32 %v1972, %v2138
      %v2190 = vmul.f32 %v1974, %v2138
      %v2191 = vmul.f32 %v1976, %v2139
      %v2192 = vmul.f32 %v1978, %v2139
      %v2193 = vmul.f32 %v1980, %v2140
      %v2194 = vmul.f32 %v1982, %v2140
      %v2195 = vmul.f32 %v1984, %v2141
      %v2196 = vmul.f32 %v1986, %v2141
      %v2197 = vmul.f32 %v1988, %v2142
      %v2198 = vmul.f32 %v1990, %v2142
      %v2199 = vmul.f32 %v1992, %v2143
      %v2200 = vmul.f32 %v1994, %v2143
      %v2201 = vmul.f32 %v1996, %v2144
      %v2202 = vmul.f32 %v1998, %v2144
      %v2203 = vmul.f32 %v2000, %v2145
      %v2204 = vmul.f32 %v2002, %v2145
      %v2205 = vmul.f32 %v2004, %v2146
      %v2206 = vmul.f32 %v2006, %v2146
      %v2207 = vmul.f32 %v2008, %v2147
      %v2208 = vmul.f32 %v2010, %v2147
      %v2209 = vmul.f32 %v2012, %v2148
      %v2210 = vmul.f32 %v2014, %v2148
      %v2211 = vmul.f32 %v2016, %v2149
      %v2212 = vmul.f32 %v2018, %v2149
      %v2213 = vmul.f32 %v2020, %v2150
      %v2214 = vmul.f32 %v2022, %v2150
      %2215 = vrot.lane.b32.xlu0 %v1032, 64
      %v2216 = vpop.permute.xlu0 %2215
      %2217 = vrot.lane.b32.xlu0 %v1037, 64
      %v2218 = vpop.permute.xlu0 %2217
      %2219 = vrot.lane.b32.xlu0 %v1042, 64
      %v2220 = vpop.permute.xlu0 %2219
      %2221 = vrot.lane.b32.xlu0 %v1047, 64
      %v2222 = vpop.permute.xlu0 %2221
      %2223 = vrot.lane.b32.xlu0 %v1052, 64
      %v2224 = vpop.permute.xlu0 %2223
      %2225 = vrot.lane.b32.xlu0 %v1057, 64
      %v2226 = vpop.permute.xlu0 %2225
      %2227 = vrot.lane.b32.xlu0 %v1062, 64
      %v2228 = vpop.permute.xlu0 %2227
      %2229 = vrot.lane.b32.xlu0 %v1067, 64
      %v2230 = vpop.permute.xlu0 %2229
      %2231 = vrot.lane.b32.xlu0 %v1072, 64
      %v2232 = vpop.permute.xlu0 %2231
      %2233 = vrot.lane.b32.xlu0 %v1077, 64
      %v2234 = vpop.permute.xlu0 %2233
      %2235 = vrot.lane.b32.xlu0 %v1082, 64
      %v2236 = vpop.permute.xlu0 %2235
      %2237 = vrot.lane.b32.xlu0 %v1087, 64
      %v2238 = vpop.permute.xlu0 %2237
      %2239 = vrot.lane.b32.xlu0 %v1092, 64
      %v2240 = vpop.permute.xlu0 %2239
      %2241 = vrot.lane.b32.xlu0 %v1097, 64
      %v2242 = vpop.permute.xlu0 %2241
      %2243 = vrot.lane.b32.xlu0 %v1102, 64
      %v2244 = vpop.permute.xlu0 %2243
      %2245 = vrot.lane.b32.xlu0 %v1107, 64
      %v2246 = vpop.permute.xlu0 %2245
      %2247 = vrot.lane.b32.xlu0 %v1112, 64
      %v2248 = vpop.permute.xlu0 %2247
      %2249 = vrot.lane.b32.xlu0 %v1117, 64
      %v2250 = vpop.permute.xlu0 %2249
      %2251 = vrot.lane.b32.xlu0 %v1122, 64
      %v2252 = vpop.permute.xlu0 %2251
      %2253 = vrot.lane.b32.xlu0 %v1127, 64
      %v2254 = vpop.permute.xlu0 %2253
      %2255 = vrot.lane.b32.xlu0 %v1132, 64
      %v2256 = vpop.permute.xlu0 %2255
      %2257 = vrot.lane.b32.xlu0 %v1137, 64
      %v2258 = vpop.permute.xlu0 %2257
      %2259 = vrot.lane.b32.xlu0 %v1142, 64
      %v2260 = vpop.permute.xlu0 %2259
      %2261 = vrot.lane.b32.xlu0 %v1147, 64
      %v2262 = vpop.permute.xlu0 %2261
      %2263 = vrot.lane.b32.xlu0 %v1152, 64
      %v2264 = vpop.permute.xlu0 %2263
      %2265 = vrot.lane.b32.xlu0 %v1157, 64
      %v2266 = vpop.permute.xlu0 %2265
      %2267 = vrot.lane.b32.xlu0 %v1162, 64
      %v2268 = vpop.permute.xlu0 %2267
      %2269 = vrot.lane.b32.xlu0 %v1167, 64
      %v2270 = vpop.permute.xlu0 %2269
      %2271 = vrot.lane.b32.xlu0 %v1172, 64
      %v2272 = vpop.permute.xlu0 %2271
      %2273 = vrot.lane.b32.xlu0 %v1177, 64
      %v2274 = vpop.permute.xlu0 %2273
      %2275 = vrot.lane.b32.xlu0 %v1182, 64
      %v2276 = vpop.permute.xlu0 %2275
      %2277 = vrot.lane.b32.xlu0 %v1187, 64
      %v2278 = vpop.permute.xlu0 %2277
      %2311 = vmatprep.subr.mxu0 0.0
      %2312 = vmatpush1.msra.mxu0 %v2246
      %2313 = vmatprep.subr.mxu0 0.0
      %2314 = vmatpush1.msra.mxu0 %v2244
      %2315 = vmatprep.subr.mxu0 0.0
      %2316 = vmatpush1.msra.mxu0 %v2242
      %2317 = vmatprep.subr.mxu0 0.0
      %2318 = vmatpush1.msra.mxu0 %v2240
      %2319 = vmatprep.subr.mxu0 0.0
      %2320 = vmatpush1.msra.mxu0 %v2238
      %2321 = vmatprep.subr.mxu0 0.0
      %2322 = vmatpush1.msra.mxu0 %v2236
      %2323 = vmatprep.subr.mxu0 0.0
      %2324 = vmatpush1.msra.mxu0 %v2234
      %2325 = vmatprep.subr.mxu0 0.0
      %2326 = vmatpush1.msra.mxu0 %v2232
      %2327 = vmatprep.subr.mxu0 0.0
      %2328 = vmatpush1.msra.mxu0 %v2230
      %2329 = vmatprep.subr.mxu0 0.0
      %2330 = vmatpush1.msra.mxu0 %v2228
      %2331 = vmatprep.subr.mxu0 0.0
      %2332 = vmatpush1.msra.mxu0 %v2226
      %2333 = vmatprep.subr.mxu0 0.0
      %2334 = vmatpush1.msra.mxu0 %v2224
      %2335 = vmatprep.subr.mxu0 0.0
      %2336 = vmatpush1.msra.mxu0 %v2222
      %2337 = vmatprep.subr.mxu0 0.0
      %2338 = vmatpush1.msra.mxu0 %v2220
      %2339 = vmatprep.subr.mxu0 0.0
      %2340 = vmatpush1.msra.mxu0 %v2218
      %2341 = vmatprep.subr.mxu0 0.0
      %2342 = vmatpush1.msra.mxu0 %v2216
      %2343 = vmatprep.subr.mxu0 0.0
      %2344 = vmatpush2.msra.mxu0 %v2278
      %2345 = vmatprep.subr.mxu0 0.0
      %2346 = vmatpush2.msra.mxu0 %v2276
      %2347 = vmatprep.subr.mxu0 0.0
      %2348 = vmatpush2.msra.mxu0 %v2274
      %2349 = vmatprep.subr.mxu0 0.0
      %2350 = vmatpush2.msra.mxu0 %v2272
      %2351 = vmatprep.subr.mxu0 0.0
      %2352 = vmatpush2.msra.mxu0 %v2270
      %2353 = vmatprep.subr.mxu0 0.0
      %2354 = vmatpush2.msra.mxu0 %v2268
      %2355 = vmatprep.subr.mxu0 0.0
      %2356 = vmatpush2.msra.mxu0 %v2266
      %2357 = vmatprep.subr.mxu0 0.0
      %2358 = vmatpush2.msra.mxu0 %v2264
      %2359 = vmatprep.subr.mxu0 0.0
      %2360 = vmatpush2.msra.mxu0 %v2262
      %2361 = vmatprep.subr.mxu0 0.0
      %2362 = vmatpush2.msra.mxu0 %v2260
      %2363 = vmatprep.subr.mxu0 0.0
      %2364 = vmatpush2.msra.mxu0 %v2258
      %2365 = vmatprep.subr.mxu0 0.0
      %2366 = vmatpush2.msra.mxu0 %v2256
      %2367 = vmatprep.subr.mxu0 0.0
      %2368 = vmatpush2.msra.mxu0 %v2254
      %2369 = vmatprep.subr.mxu0 0.0
      %2370 = vmatpush2.msra.mxu0 %v2252
      %2371 = vmatprep.subr.mxu0 0.0
      %2372 = vmatpush2.msra.mxu0 %v2250
      %2373 = vmatprep.subr.mxu0 0.0
      %2374 = vmatpush2.msra.mxu0 %v2248
      %2375 = vmatprep.mubr.f32.mxu0 %v2152
      %2376 = vmatmul.mubr.f32.gmra.mxu0 %v2151
      %v2377 = vpop.f32.mrf.mxu0
      %v2378 = vadd.f32 0.0, %v2377
      %v2379 = vpop.f32.mrf.mxu0
      %2380 = vmatprep.mubr.f32.mxu0 %v2154
      %2381 = vmatmul.mubr.f32.gmra.mxu0 %v2153
      %v2382 = vpop.f32.mrf.mxu0
      %v2383 = vadd.f32 0.0, %v2382
      %v2384 = vpop.f32.mrf.mxu0
      %2385 = vmatprep.mubr.f32.mxu0 %v2156
      %2386 = vmatmul.mubr.f32.gmra.mxu0 %v2155
      %v2387 = vpop.f32.mrf.mxu0
      %v2388 = vadd.f32 0.0, %v2387
      %v2389 = vpop.f32.mrf.mxu0
      %2390 = vmatprep.mubr.f32.mxu0 %v2158
      %2391 = vmatmul.mubr.f32.gmra.mxu0 %v2157
      %v2392 = vpop.f32.mrf.mxu0
      %v2393 = vadd.f32 0.0, %v2392
      %v2394 = vpop.f32.mrf.mxu0
      %2395 = vmatprep.mubr.f32.mxu0 %v2160
      %2396 = vmatmul.mubr.f32.gmra.mxu0 %v2159
      %v2397 = vpop.f32.mrf.mxu0
      %v2398 = vadd.f32 0.0, %v2397
      %v2399 = vpop.f32.mrf.mxu0
      %2400 = vmatprep.mubr.f32.mxu0 %v2162
      %2401 = vmatmul.mubr.f32.gmra.mxu0 %v2161
      %v2402 = vpop.f32.mrf.mxu0
      %v2403 = vadd.f32 0.0, %v2402
      %v2404 = vpop.f32.mrf.mxu0
      %2405 = vmatprep.mubr.f32.mxu0 %v2164
      %2406 = vmatmul.mubr.f32.gmra.mxu0 %v2163
      %v2407 = vpop.f32.mrf.mxu0
      %v2408 = vadd.f32 0.0, %v2407
      %v2409 = vpop.f32.mrf.mxu0
      %2410 = vmatprep.mubr.f32.mxu0 %v2166
      %2411 = vmatmul.mubr.f32.gmra.mxu0 %v2165
      %v2412 = vpop.f32.mrf.mxu0
      %v2413 = vadd.f32 0.0, %v2412
      %v2414 = vpop.f32.mrf.mxu0
      %2415 = vmatprep.mubr.f32.mxu0 %v2168
      %2416 = vmatmul.mubr.f32.gmra.mxu0 %v2167
      %v2417 = vpop.f32.mrf.mxu0
      %v2418 = vadd.f32 0.0, %v2417
      %v2419 = vpop.f32.mrf.mxu0
      %2420 = vmatprep.mubr.f32.mxu0 %v2170
      %2421 = vmatmul.mubr.f32.gmra.mxu0 %v2169
      %v2422 = vpop.f32.mrf.mxu0
      %v2423 = vadd.f32 0.0, %v2422
      %v2424 = vpop.f32.mrf.mxu0
      %2425 = vmatprep.mubr.f32.mxu0 %v2172
      %2426 = vmatmul.mubr.f32.gmra.mxu0 %v2171
      %v2427 = vpop.f32.mrf.mxu0
      %v2428 = vadd.f32 0.0, %v2427
      %v2429 = vpop.f32.mrf.mxu0
      %2430 = vmatprep.mubr.f32.mxu0 %v2174
      %2431 = vmatmul.mubr.f32.gmra.mxu0 %v2173
      %v2432 = vpop.f32.mrf.mxu0
      %v2433 = vadd.f32 0.0, %v2432
      %v2434 = vpop.f32.mrf.mxu0
      %2435 = vmatprep.mubr.f32.mxu0 %v2176
      %2436 = vmatmul.mubr.f32.gmra.mxu0 %v2175
      %v2437 = vpop.f32.mrf.mxu0
      %v2438 = vadd.f32 0.0, %v2437
      %v2439 = vpop.f32.mrf.mxu0
      %2440 = vmatprep.mubr.f32.mxu0 %v2178
      %2441 = vmatmul.mubr.f32.gmra.mxu0 %v2177
      %v2442 = vpop.f32.mrf.mxu0
      %v2443 = vadd.f32 0.0, %v2442
      %v2444 = vpop.f32.mrf.mxu0
      %2445 = vmatprep.mubr.f32.mxu0 %v2180
      %2446 = vmatmul.mubr.f32.gmra.mxu0 %v2179
      %v2447 = vpop.f32.mrf.mxu0
      %v2448 = vadd.f32 0.0, %v2447
      %v2449 = vpop.f32.mrf.mxu0
      %2450 = vmatprep.mubr.f32.mxu0 %v2182
      %2451 = vmatmul.mubr.f32.gmra.mxu0 %v2181
      %v2452 = vpop.f32.mrf.mxu0
      %v2453 = vadd.f32 0.0, %v2452
      %v2454 = vpop.f32.mrf.mxu0
      %2455 = vmatprep.mubr.f32.mxu0 %v2184
      %2456 = vmatmul.mubr.f32.gmra.mxu0 %v2183
      %v2457 = vpop.f32.mrf.mxu0
      %v2458 = vadd.f32 0.0, %v2457
      %v2459 = vpop.f32.mrf.mxu0
      %2460 = vmatprep.mubr.f32.mxu0 %v2186
      %2461 = vmatmul.mubr.f32.gmra.mxu0 %v2185
      %v2462 = vpop.f32.mrf.mxu0
      %v2463 = vadd.f32 0.0, %v2462
      %v2464 = vpop.f32.mrf.mxu0
      %2465 = vmatprep.mubr.f32.mxu0 %v2188
      %2466 = vmatmul.mubr.f32.gmra.mxu0 %v2187
      %v2467 = vpop.f32.mrf.mxu0
      %v2468 = vadd.f32 0.0, %v2467
      %v2469 = vpop.f32.mrf.mxu0
      %2470 = vmatprep.mubr.f32.mxu0 %v2190
      %2471 = vmatmul.mubr.f32.gmra.mxu0 %v2189
      %v2472 = vpop.f32.mrf.mxu0
      %v2473 = vadd.f32 0.0, %v2472
      %v2474 = vpop.f32.mrf.mxu0
      %2475 = vmatprep.mubr.f32.mxu0 %v2192
      %2476 = vmatmul.mubr.f32.gmra.mxu0 %v2191
      %v2477 = vpop.f32.mrf.mxu0
      %v2478 = vadd.f32 0.0, %v2477
      %v2479 = vpop.f32.mrf.mxu0
      %2480 = vmatprep.mubr.f32.mxu0 %v2194
      %2481 = vmatmul.mubr.f32.gmra.mxu0 %v2193
      %v2482 = vpop.f32.mrf.mxu0
      %v2483 = vadd.f32 0.0, %v2482
      %v2484 = vpop.f32.mrf.mxu0
      %2485 = vmatprep.mubr.f32.mxu0 %v2196
      %2486 = vmatmul.mubr.f32.gmra.mxu0 %v2195
      %v2487 = vpop.f32.mrf.mxu0
      %v2488 = vadd.f32 0.0, %v2487
      %v2489 = vpop.f32.mrf.mxu0
      %2490 = vmatprep.mubr.f32.mxu0 %v2198
      %2491 = vmatmul.mubr.f32.gmra.mxu0 %v2197
      %v2492 = vpop.f32.mrf.mxu0
      %v2493 = vadd.f32 0.0, %v2492
      %v2494 = vpop.f32.mrf.mxu0
      %2495 = vmatprep.mubr.f32.mxu0 %v2200
      %2496 = vmatmul.mubr.f32.gmra.mxu0 %v2199
      %v2497 = vpop.f32.mrf.mxu0
      %v2498 = vadd.f32 0.0, %v2497
      %v2499 = vpop.f32.mrf.mxu0
      %2500 = vmatprep.mubr.f32.mxu0 %v2202
      %2501 = vmatmul.mubr.f32.gmra.mxu0 %v2201
      %v2502 = vpop.f32.mrf.mxu0
      %v2503 = vadd.f32 0.0, %v2502
      %v2504 = vpop.f32.mrf.mxu0
      %2505 = vmatprep.mubr.f32.mxu0 %v2204
      %2506 = vmatmul.mubr.f32.gmra.mxu0 %v2203
      %v2507 = vpop.f32.mrf.mxu0
      %v2508 = vadd.f32 0.0, %v2507
      %v2509 = vpop.f32.mrf.mxu0
      %2510 = vmatprep.mubr.f32.mxu0 %v2206
      %2511 = vmatmul.mubr.f32.gmra.mxu0 %v2205
      %v2512 = vpop.f32.mrf.mxu0
      %v2513 = vadd.f32 0.0, %v2512
      %v2514 = vpop.f32.mrf.mxu0
      %2515 = vmatprep.mubr.f32.mxu0 %v2208
      %2516 = vmatmul.mubr.f32.gmra.mxu0 %v2207
      %v2517 = vpop.f32.mrf.mxu0
      %v2518 = vadd.f32 0.0, %v2517
      %v2519 = vpop.f32.mrf.mxu0
      %2520 = vmatprep.mubr.f32.mxu0 %v2210
      %2521 = vmatmul.mubr.f32.gmra.mxu0 %v2209
      %v2522 = vpop.f32.mrf.mxu0
      %v2523 = vadd.f32 0.0, %v2522
      %v2524 = vpop.f32.mrf.mxu0
      %2525 = vmatprep.mubr.f32.mxu0 %v2212
      %2526 = vmatmul.mubr.f32.gmra.mxu0 %v2211
      %v2527 = vpop.f32.mrf.mxu0
      %v2528 = vadd.f32 0.0, %v2527
      %v2529 = vpop.f32.mrf.mxu0
      %2530 = vmatprep.mubr.f32.mxu0 %v2214
      %2531 = vmatmul.mubr.f32.gmra.mxu0 %v2213
      %v2532 = vpop.f32.mrf.mxu0
      %v2533 = vadd.f32 0.0, %v2532
      %v2534 = vpop.f32.mrf.mxu0
      %2535 = vdwg.mxu0
      %v2536 = vld [vmem:[%s4] sm:$0xff]
      %v2537 = vld [vmem:[%s4 + $0x8] sm:$0xff]
      %v2538 = vld [vmem:[%s4 + $0x10] sm:$0xff]
      %v2539 = vld [vmem:[%s4 + $0x18] sm:$0xff]
      %v2540 = vld [vmem:[%s5] sm:$0x1]
      %v2542 = vlaneseq
      %v2543 = vshrl.u32 %v2542, 7
      %v2544 = vsub.s32 0, %v2543
      %v2545 = vrot.slane %v2540, %v2544
      %v2548 = vsel %vm536, %v2378, 0
      %v2551 = vsel %vm536, %v2383, 0
      %v2554 = vsel %vm536, %v2388, 0
      %v2557 = vsel %vm536, %v2393, 0
      %v2560 = vsel %vm536, %v2398, 0
      %v2563 = vsel %vm536, %v2403, 0
      %v2566 = vsel %vm536, %v2408, 0
      %v2569 = vsel %vm536, %v2413, 0
      %v2572 = vsel %vm536, %v2418, 0
      %v2575 = vsel %vm536, %v2423, 0
      %v2578 = vsel %vm536, %v2428, 0
      %v2581 = vsel %vm536, %v2433, 0
      %v2584 = vsel %vm536, %v2438, 0
      %v2587 = vsel %vm536, %v2443, 0
      %v2590 = vsel %vm536, %v2448, 0
      %v2593 = vsel %vm536, %v2453, 0
      %v2596 = vsel %vm536, %v2458, 0
      %v2599 = vsel %vm536, %v2463, 0
      %v2602 = vsel %vm536, %v2468, 0
      %v2605 = vsel %vm536, %v2473, 0
      %v2608 = vsel %vm536, %v2478, 0
      %v2611 = vsel %vm536, %v2483, 0
      %v2614 = vsel %vm536, %v2488, 0
      %v2617 = vsel %vm536, %v2493, 0
      %v2620 = vsel %vm536, %v2498, 0
      %v2623 = vsel %vm536, %v2503, 0
      %v2626 = vsel %vm536, %v2508, 0
      %v2629 = vsel %vm536, %v2513, 0
      %v2632 = vsel %vm536, %v2518, 0
      %v2635 = vsel %vm536, %v2523, 0
      %v2638 = vsel %vm536, %v2528, 0
      %v2641 = vsel %vm536, %v2533, 0
      %2643 = vmatprep.subr.mxu0 0.0
      %2644 = vmatpush1.msra.mxu0 0.0
      %2645 = vmatprep.subr.mxu0 0.0
      %2646 = vmatpush1.msra.mxu0 0.0
      %2647 = vmatprep.subr.mxu0 0.0
      %2648 = vmatpush1.msra.mxu0 0.0
      %2649 = vmatprep.subr.mxu0 0.0
      %2650 = vmatpush1.msra.mxu0 0.0
      %2651 = vmatprep.subr.mxu0 0.0
      %2652 = vmatpush1.msra.mxu0 0.0
      %2653 = vmatprep.subr.mxu0 0.0
      %2654 = vmatpush1.msra.mxu0 0.0
      %2655 = vmatprep.subr.mxu0 0.0
      %2656 = vmatpush1.msra.mxu0 0.0
      %2657 = vmatprep.subr.mxu0 0.0
      %2658 = vmatpush1.msra.mxu0 0.0
      %2659 = vmatprep.subr.mxu0 0.0
      %2660 = vmatpush1.msra.mxu0 0.0
      %2661 = vmatprep.subr.mxu0 0.0
      %2662 = vmatpush1.msra.mxu0 0.0
      %2663 = vmatprep.subr.mxu0 0.0
      %2664 = vmatpush1.msra.mxu0 0.0
      %2665 = vmatprep.subr.mxu0 0.0
      %2666 = vmatpush1.msra.mxu0 0.0
      %2667 = vmatprep.subr.mxu0 0.0
      %2668 = vmatpush1.msra.mxu0 %v2539
      %2669 = vmatprep.subr.mxu0 0.0
      %2670 = vmatpush1.msra.mxu0 %v2538
      %2671 = vmatprep.subr.mxu0 0.0
      %2672 = vmatpush1.msra.mxu0 %v2537
      %2673 = vmatprep.subr.mxu0 0.0
      %2674 = vmatpush1.msra.mxu0 %v2536
      %2675 = vmatprep.subr.mxu0 0.0
      %2676 = vmatpush2.msra.mxu0 0.0
      %2677 = vmatprep.subr.mxu0 0.0
      %2678 = vmatpush2.msra.mxu0 0.0
      %2679 = vmatprep.subr.mxu0 0.0
      %2680 = vmatpush2.msra.mxu0 0.0
      %2681 = vmatprep.subr.mxu0 0.0
      %2682 = vmatpush2.msra.mxu0 0.0
      %2683 = vmatprep.subr.mxu0 0.0
      %2684 = vmatpush2.msra.mxu0 0.0
      %2685 = vmatprep.subr.mxu0 0.0
      %2686 = vmatpush2.msra.mxu0 0.0
      %2687 = vmatprep.subr.mxu0 0.0
      %2688 = vmatpush2.msra.mxu0 0.0
      %2689 = vmatprep.subr.mxu0 0.0
      %2690 = vmatpush2.msra.mxu0 0.0
      %2691 = vmatprep.subr.mxu0 0.0
      %2692 = vmatpush2.msra.mxu0 0.0
      %2693 = vmatprep.subr.mxu0 0.0
      %2694 = vmatpush2.msra.mxu0 0.0
      %2695 = vmatprep.subr.mxu0 0.0
      %2696 = vmatpush2.msra.mxu0 0.0
      %2697 = vmatprep.subr.mxu0 0.0
      %2698 = vmatpush2.msra.mxu0 0.0
      %2699 = vmatprep.subr.mxu0 0.0
      %2700 = vmatpush2.msra.mxu0 0.0
      %2701 = vmatprep.subr.mxu0 0.0
      %2702 = vmatpush2.msra.mxu0 0.0
      %2703 = vmatprep.subr.mxu0 0.0
      %2704 = vmatpush2.msra.mxu0 0.0
      %2705 = vmatprep.subr.mxu0 0.0
      %2706 = vmatpush2.msra.mxu0 0.0
      %2707 = vmatprep.mubr.f32.mxu0 0.0
      %2708 = vmatmul.mubr.f32.gmra.mxu0 %v2548
      %v2709 = vpop.f32.mrf.mxu0
      %v2710 = vadd.f32 %v2545, %v2709
      %v2711 = vpop.f32.mrf.mxu0
      %2712 = vmatprep.mubr.f32.mxu0 0.0
      %2713 = vmatmul.mubr.f32.gmra.mxu0 %v2551
      %v2714 = vpop.f32.mrf.mxu0
      %v2715 = vadd.f32 %v2545, %v2714
      %v2716 = vpop.f32.mrf.mxu0
      %2717 = vmatprep.mubr.f32.mxu0 0.0
      %2718 = vmatmul.mubr.f32.gmra.mxu0 %v2554
      %v2719 = vpop.f32.mrf.mxu0
      %v2720 = vadd.f32 %v2545, %v2719
      %v2721 = vpop.f32.mrf.mxu0
      %2722 = vmatprep.mubr.f32.mxu0 0.0
      %2723 = vmatmul.mubr.f32.gmra.mxu0 %v2557
      %v2724 = vpop.f32.mrf.mxu0
      %v2725 = vadd.f32 %v2545, %v2724
      %v2726 = vpop.f32.mrf.mxu0
      %2727 = vmatprep.mubr.f32.mxu0 0.0
      %2728 = vmatmul.mubr.f32.gmra.mxu0 %v2560
      %v2729 = vpop.f32.mrf.mxu0
      %v2730 = vadd.f32 %v2545, %v2729
      %v2731 = vpop.f32.mrf.mxu0
      %2732 = vmatprep.mubr.f32.mxu0 0.0
      %2733 = vmatmul.mubr.f32.gmra.mxu0 %v2563
      %v2734 = vpop.f32.mrf.mxu0
      %v2735 = vadd.f32 %v2545, %v2734
      %v2736 = vpop.f32.mrf.mxu0
      %2737 = vmatprep.mubr.f32.mxu0 0.0
      %2738 = vmatmul.mubr.f32.gmra.mxu0 %v2566
      %v2739 = vpop.f32.mrf.mxu0
      %v2740 = vadd.f32 %v2545, %v2739
      %v2741 = vpop.f32.mrf.mxu0
      %2742 = vmatprep.mubr.f32.mxu0 0.0
      %2743 = vmatmul.mubr.f32.gmra.mxu0 %v2569
      %v2744 = vpop.f32.mrf.mxu0
      %v2745 = vadd.f32 %v2545, %v2744
      %v2746 = vpop.f32.mrf.mxu0
      %2747 = vmatprep.mubr.f32.mxu0 0.0
      %2748 = vmatmul.mubr.f32.gmra.mxu0 %v2572
      %v2749 = vpop.f32.mrf.mxu0
      %v2750 = vadd.f32 %v2545, %v2749
      %v2751 = vpop.f32.mrf.mxu0
      %2752 = vmatprep.mubr.f32.mxu0 0.0
      %2753 = vmatmul.mubr.f32.gmra.mxu0 %v2575
      %v2754 = vpop.f32.mrf.mxu0
      %v2755 = vadd.f32 %v2545, %v2754
      %v2756 = vpop.f32.mrf.mxu0
      %2757 = vmatprep.mubr.f32.mxu0 0.0
      %2758 = vmatmul.mubr.f32.gmra.mxu0 %v2578
      %v2759 = vpop.f32.mrf.mxu0
      %v2760 = vadd.f32 %v2545, %v2759
      %v2761 = vpop.f32.mrf.mxu0
      %2762 = vmatprep.mubr.f32.mxu0 0.0
      %2763 = vmatmul.mubr.f32.gmra.mxu0 %v2581
      %v2764 = vpop.f32.mrf.mxu0
      %v2765 = vadd.f32 %v2545, %v2764
      %v2766 = vpop.f32.mrf.mxu0
      %2767 = vmatprep.mubr.f32.mxu0 0.0
      %2768 = vmatmul.mubr.f32.gmra.mxu0 %v2584
      %v2769 = vpop.f32.mrf.mxu0
      %v2770 = vadd.f32 %v2545, %v2769
      %v2771 = vpop.f32.mrf.mxu0
      %2772 = vmatprep.mubr.f32.mxu0 0.0
      %2773 = vmatmul.mubr.f32.gmra.mxu0 %v2587
      %v2774 = vpop.f32.mrf.mxu0
      %v2775 = vadd.f32 %v2545, %v2774
      %v2776 = vpop.f32.mrf.mxu0
      %2777 = vmatprep.mubr.f32.mxu0 0.0
      %2778 = vmatmul.mubr.f32.gmra.mxu0 %v2590
      %v2779 = vpop.f32.mrf.mxu0
      %v2780 = vadd.f32 %v2545, %v2779
      %v2781 = vpop.f32.mrf.mxu0
      %2782 = vmatprep.mubr.f32.mxu0 0.0
      %2783 = vmatmul.mubr.f32.gmra.mxu0 %v2593
      %v2784 = vpop.f32.mrf.mxu0
      %v2785 = vadd.f32 %v2545, %v2784
      %v2786 = vpop.f32.mrf.mxu0
      %2787 = vmatprep.mubr.f32.mxu0 0.0
      %2788 = vmatmul.mubr.f32.gmra.mxu0 %v2596
      %v2789 = vpop.f32.mrf.mxu0
      %v2790 = vadd.f32 %v2545, %v2789
      %v2791 = vpop.f32.mrf.mxu0
      %2792 = vmatprep.mubr.f32.mxu0 0.0
      %2793 = vmatmul.mubr.f32.gmra.mxu0 %v2599
      %v2794 = vpop.f32.mrf.mxu0
      %v2795 = vadd.f32 %v2545, %v2794
      %v2796 = vpop.f32.mrf.mxu0
      %2797 = vmatprep.mubr.f32.mxu0 0.0
      %2798 = vmatmul.mubr.f32.gmra.mxu0 %v2602
      %v2799 = vpop.f32.mrf.mxu0
      %v2800 = vadd.f32 %v2545, %v2799
      %v2801 = vpop.f32.mrf.mxu0
      %2802 = vmatprep.mubr.f32.mxu0 0.0
      %2803 = vmatmul.mubr.f32.gmra.mxu0 %v2605
      %v2804 = vpop.f32.mrf.mxu0
      %v2805 = vadd.f32 %v2545, %v2804
      %v2806 = vpop.f32.mrf.mxu0
      %2807 = vmatprep.mubr.f32.mxu0 0.0
      %2808 = vmatmul.mubr.f32.gmra.mxu0 %v2608
      %v2809 = vpop.f32.mrf.mxu0
      %v2810 = vadd.f32 %v2545, %v2809
      %v2811 = vpop.f32.mrf.mxu0
      %2812 = vmatprep.mubr.f32.mxu0 0.0
      %2813 = vmatmul.mubr.f32.gmra.mxu0 %v2611
      %v2814 = vpop.f32.mrf.mxu0
      %v2815 = vadd.f32 %v2545, %v2814
      %v2816 = vpop.f32.mrf.mxu0
      %2817 = vmatprep.mubr.f32.mxu0 0.0
      %2818 = vmatmul.mubr.f32.gmra.mxu0 %v2614
      %v2819 = vpop.f32.mrf.mxu0
      %v2820 = vadd.f32 %v2545, %v2819
      %v2821 = vpop.f32.mrf.mxu0
      %2822 = vmatprep.mubr.f32.mxu0 0.0
      %2823 = vmatmul.mubr.f32.gmra.mxu0 %v2617
      %v2824 = vpop.f32.mrf.mxu0
      %v2825 = vadd.f32 %v2545, %v2824
      %v2826 = vpop.f32.mrf.mxu0
      %2827 = vmatprep.mubr.f32.mxu0 0.0
      %2828 = vmatmul.mubr.f32.gmra.mxu0 %v2620
      %v2829 = vpop.f32.mrf.mxu0
      %v2830 = vadd.f32 %v2545, %v2829
      %v2831 = vpop.f32.mrf.mxu0
      %2832 = vmatprep.mubr.f32.mxu0 0.0
      %2833 = vmatmul.mubr.f32.gmra.mxu0 %v2623
      %v2834 = vpop.f32.mrf.mxu0
      %v2835 = vadd.f32 %v2545, %v2834
      %v2836 = vpop.f32.mrf.mxu0
      %2837 = vmatprep.mubr.f32.mxu0 0.0
      %2838 = vmatmul.mubr.f32.gmra.mxu0 %v2626
      %v2839 = vpop.f32.mrf.mxu0
      %v2840 = vadd.f32 %v2545, %v2839
      %v2841 = vpop.f32.mrf.mxu0
      %2842 = vmatprep.mubr.f32.mxu0 0.0
      %2843 = vmatmul.mubr.f32.gmra.mxu0 %v2629
      %v2844 = vpop.f32.mrf.mxu0
      %v2845 = vadd.f32 %v2545, %v2844
      %v2846 = vpop.f32.mrf.mxu0
      %2847 = vmatprep.mubr.f32.mxu0 0.0
      %2848 = vmatmul.mubr.f32.gmra.mxu0 %v2632
      %v2849 = vpop.f32.mrf.mxu0
      %v2850 = vadd.f32 %v2545, %v2849
      %v2851 = vpop.f32.mrf.mxu0
      %2852 = vmatprep.mubr.f32.mxu0 0.0
      %2853 = vmatmul.mubr.f32.gmra.mxu0 %v2635
      %v2854 = vpop.f32.mrf.mxu0
      %v2855 = vadd.f32 %v2545, %v2854
      %v2856 = vpop.f32.mrf.mxu0
      %2857 = vmatprep.mubr.f32.mxu0 0.0
      %2858 = vmatmul.mubr.f32.gmra.mxu0 %v2638
      %v2859 = vpop.f32.mrf.mxu0
      %v2860 = vadd.f32 %v2545, %v2859
      %v2861 = vpop.f32.mrf.mxu0
      %2862 = vmatprep.mubr.f32.mxu0 0.0
      %2863 = vmatmul.mubr.f32.gmra.mxu0 %v2641
      %v2864 = vpop.f32.mrf.mxu0
      %v2865 = vadd.f32 %v2545, %v2864
      %v2866 = vpop.f32.mrf.mxu0
      %2867 = vdwg.mxu0
      %v2868 = vsel %vm536, %v2710, 0.0
      %2869 = vadd.xlane.f32.xlu0 %v2868
      %v2870 = vpop.xlane.xlu0 %2869
      %v2871 = vsel %vm536, %v2715, 0.0
      %2872 = vadd.xlane.f32.xlu0 %v2871
      %v2873 = vpop.xlane.xlu0 %2872
      %v2874 = vsel %vm536, %v2720, 0.0
      %2875 = vadd.xlane.f32.xlu0 %v2874
      %v2876 = vpop.xlane.xlu0 %2875
      %v2877 = vsel %vm536, %v2725, 0.0
      %2878 = vadd.xlane.f32.xlu0 %v2877
      %v2879 = vpop.xlane.xlu0 %2878
      %v2880 = vsel %vm536, %v2730, 0.0
      %2881 = vadd.xlane.f32.xlu0 %v2880
      %v2882 = vpop.xlane.xlu0 %2881
      %v2883 = vsel %vm536, %v2735, 0.0
      %2884 = vadd.xlane.f32.xlu0 %v2883
      %v2885 = vpop.xlane.xlu0 %2884
      %v2886 = vsel %vm536, %v2740, 0.0
      %2887 = vadd.xlane.f32.xlu0 %v2886
      %v2888 = vpop.xlane.xlu0 %2887
      %v2889 = vsel %vm536, %v2745, 0.0
      %2890 = vadd.xlane.f32.xlu0 %v2889
      %v2891 = vpop.xlane.xlu0 %2890
      %v2892 = vsel %vm536, %v2750, 0.0
      %2893 = vadd.xlane.f32.xlu0 %v2892
      %v2894 = vpop.xlane.xlu0 %2893
      %v2895 = vsel %vm536, %v2755, 0.0
      %2896 = vadd.xlane.f32.xlu0 %v2895
      %v2897 = vpop.xlane.xlu0 %2896
      %v2898 = vsel %vm536, %v2760, 0.0
      %2899 = vadd.xlane.f32.xlu0 %v2898
      %v2900 = vpop.xlane.xlu0 %2899
      %v2901 = vsel %vm536, %v2765, 0.0
      %2902 = vadd.xlane.f32.xlu0 %v2901
      %v2903 = vpop.xlane.xlu0 %2902
      %v2904 = vsel %vm536, %v2770, 0.0
      %2905 = vadd.xlane.f32.xlu0 %v2904
      %v2906 = vpop.xlane.xlu0 %2905
      %v2907 = vsel %vm536, %v2775, 0.0
      %2908 = vadd.xlane.f32.xlu0 %v2907
      %v2909 = vpop.xlane.xlu0 %2908
      %v2910 = vsel %vm536, %v2780, 0.0
      %2911 = vadd.xlane.f32.xlu0 %v2910
      %v2912 = vpop.xlane.xlu0 %2911
      %v2913 = vsel %vm536, %v2785, 0.0
      %2914 = vadd.xlane.f32.xlu0 %v2913
      %v2915 = vpop.xlane.xlu0 %2914
      %v2916 = vsel %vm536, %v2790, 0.0
      %2917 = vadd.xlane.f32.xlu0 %v2916
      %v2918 = vpop.xlane.xlu0 %2917
      %v2919 = vsel %vm536, %v2795, 0.0
      %2920 = vadd.xlane.f32.xlu0 %v2919
      %v2921 = vpop.xlane.xlu0 %2920
      %v2922 = vsel %vm536, %v2800, 0.0
      %2923 = vadd.xlane.f32.xlu0 %v2922
      %v2924 = vpop.xlane.xlu0 %2923
      %v2925 = vsel %vm536, %v2805, 0.0
      %2926 = vadd.xlane.f32.xlu0 %v2925
      %v2927 = vpop.xlane.xlu0 %2926
      %v2928 = vsel %vm536, %v2810, 0.0
      %2929 = vadd.xlane.f32.xlu0 %v2928
      %v2930 = vpop.xlane.xlu0 %2929
      %v2931 = vsel %vm536, %v2815, 0.0
      %2932 = vadd.xlane.f32.xlu0 %v2931
      %v2933 = vpop.xlane.xlu0 %2932
      %v2934 = vsel %vm536, %v2820, 0.0
      %2935 = vadd.xlane.f32.xlu0 %v2934
      %v2936 = vpop.xlane.xlu0 %2935
      %v2937 = vsel %vm536, %v2825, 0.0
      %2938 = vadd.xlane.f32.xlu0 %v2937
      %v2939 = vpop.xlane.xlu0 %2938
      %v2940 = vsel %vm536, %v2830, 0.0
      %2941 = vadd.xlane.f32.xlu0 %v2940
      %v2942 = vpop.xlane.xlu0 %2941
      %v2943 = vsel %vm536, %v2835, 0.0
      %2944 = vadd.xlane.f32.xlu0 %v2943
      %v2945 = vpop.xlane.xlu0 %2944
      %v2946 = vsel %vm536, %v2840, 0.0
      %2947 = vadd.xlane.f32.xlu0 %v2946
      %v2948 = vpop.xlane.xlu0 %2947
      %v2949 = vsel %vm536, %v2845, 0.0
      %2950 = vadd.xlane.f32.xlu0 %v2949
      %v2951 = vpop.xlane.xlu0 %2950
      %v2952 = vsel %vm536, %v2850, 0.0
      %2953 = vadd.xlane.f32.xlu0 %v2952
      %v2954 = vpop.xlane.xlu0 %2953
      %v2955 = vsel %vm536, %v2855, 0.0
      %2956 = vadd.xlane.f32.xlu0 %v2955
      %v2957 = vpop.xlane.xlu0 %2956
      %v2958 = vsel %vm536, %v2860, 0.0
      %2959 = vadd.xlane.f32.xlu0 %v2958
      %v2960 = vpop.xlane.xlu0 %2959
      %v2961 = vsel %vm536, %v2865, 0.0
      %2962 = vadd.xlane.f32.xlu0 %v2961
      %v2963 = vpop.xlane.xlu0 %2962
      %v2964 = vrcp.pop 32.0
      %v2965 = vmul.f32 %v2870, %v2964
      %v2966 = vmul.f32 %v2873, %v2964
      %v2967 = vmul.f32 %v2876, %v2964
      %v2968 = vmul.f32 %v2879, %v2964
      %v2969 = vmul.f32 %v2882, %v2964
      %v2970 = vmul.f32 %v2885, %v2964
      %v2971 = vmul.f32 %v2888, %v2964
      %v2972 = vmul.f32 %v2891, %v2964
      %v2973 = vmul.f32 %v2894, %v2964
      %v2974 = vmul.f32 %v2897, %v2964
      %v2975 = vmul.f32 %v2900, %v2964
      %v2976 = vmul.f32 %v2903, %v2964
      %v2977 = vmul.f32 %v2906, %v2964
      %v2978 = vmul.f32 %v2909, %v2964
      %v2979 = vmul.f32 %v2912, %v2964
      %v2980 = vmul.f32 %v2915, %v2964
      %v2981 = vmul.f32 %v2918, %v2964
      %v2982 = vmul.f32 %v2921, %v2964
      %v2983 = vmul.f32 %v2924, %v2964
      %v2984 = vmul.f32 %v2927, %v2964
      %v2985 = vmul.f32 %v2930, %v2964
      %v2986 = vmul.f32 %v2933, %v2964
      %v2987 = vmul.f32 %v2936, %v2964
      %v2988 = vmul.f32 %v2939, %v2964
      %v2989 = vmul.f32 %v2942, %v2964
      %v2990 = vmul.f32 %v2945, %v2964
      %v2991 = vmul.f32 %v2948, %v2964
      %v2992 = vmul.f32 %v2951, %v2964
      %v2993 = vmul.f32 %v2954, %v2964
      %v2994 = vmul.f32 %v2957, %v2964
      %v2995 = vmul.f32 %v2960, %v2964
      %v2996 = vmul.f32 %v2963, %v2964
      %2997 = vmatprep.subr.mxu0 0.0
      %2998 = vmatpush1.msra.mxu0 %v2980
      %2999 = vmatprep.subr.mxu0 0.0
      %3000 = vmatpush1.msra.mxu0 %v2979
      %3001 = vmatprep.subr.mxu0 0.0
      %3002 = vmatpush1.msra.mxu0 %v2978
      %3003 = vmatprep.subr.mxu0 0.0
      %3004 = vmatpush1.msra.mxu0 %v2977
      %3005 = vmatprep.subr.mxu0 0.0
      %3006 = vmatpush1.msra.mxu0 %v2976
      %3007 = vmatprep.subr.mxu0 0.0
      %3008 = vmatpush1.msra.mxu0 %v2975
      %3009 = vmatprep.subr.mxu0 0.0
      %3010 = vmatpush1.msra.mxu0 %v2974
      %3011 = vmatprep.subr.mxu0 0.0
      %3012 = vmatpush1.msra.mxu0 %v2973
      %3013 = vmatprep.subr.mxu0 0.0
      %3014 = vmatpush1.msra.mxu0 %v2972
      %3015 = vmatprep.subr.mxu0 0.0
      %3016 = vmatpush1.msra.mxu0 %v2971
      %3017 = vmatprep.subr.mxu0 0.0
      %3018 = vmatpush1.msra.mxu0 %v2970
      %3019 = vmatprep.subr.mxu0 0.0
      %3020 = vmatpush1.msra.mxu0 %v2969
      %3021 = vmatprep.subr.mxu0 0.0
      %3022 = vmatpush1.msra.mxu0 %v2968
      %3023 = vmatprep.subr.mxu0 0.0
      %3024 = vmatpush1.msra.mxu0 %v2967
      %3025 = vmatprep.subr.mxu0 0.0
      %3026 = vmatpush1.msra.mxu0 %v2966
      %3027 = vmatprep.subr.mxu0 0.0
      %3028 = vmatpush1.msra.mxu0 %v2965
      %3029 = vmatprep.subr.mxu0 0.0
      %3030 = vmatpush2.msra.mxu0 %v2996
      %3031 = vmatprep.subr.mxu0 0.0
      %3032 = vmatpush2.msra.mxu0 %v2995
      %3033 = vmatprep.subr.mxu0 0.0
      %3034 = vmatpush2.msra.mxu0 %v2994
      %3035 = vmatprep.subr.mxu0 0.0
      %3036 = vmatpush2.msra.mxu0 %v2993
      %3037 = vmatprep.subr.mxu0 0.0
      %3038 = vmatpush2.msra.mxu0 %v2992
      %3039 = vmatprep.subr.mxu0 0.0
      %3040 = vmatpush2.msra.mxu0 %v2991
      %3041 = vmatprep.subr.mxu0 0.0
      %3042 = vmatpush2.msra.mxu0 %v2990
      %3043 = vmatprep.subr.mxu0 0.0
      %3044 = vmatpush2.msra.mxu0 %v2989
      %3045 = vmatprep.subr.mxu0 0.0
      %3046 = vmatpush2.msra.mxu0 %v2988
      %3047 = vmatprep.subr.mxu0 0.0
      %3048 = vmatpush2.msra.mxu0 %v2987
      %3049 = vmatprep.subr.mxu0 0.0
      %3050 = vmatpush2.msra.mxu0 %v2986
      %3051 = vmatprep.subr.mxu0 0.0
      %3052 = vmatpush2.msra.mxu0 %v2985
      %3053 = vmatprep.subr.mxu0 0.0
      %3054 = vmatpush2.msra.mxu0 %v2984
      %3055 = vmatprep.subr.mxu0 0.0
      %3056 = vmatpush2.msra.mxu0 %v2983
      %3057 = vmatprep.subr.mxu0 0.0
      %3058 = vmatpush2.msra.mxu0 %v2982
      %3059 = vmatprep.subr.mxu0 0.0
      %3060 = vmatpush2.msra.mxu0 %v2981
      %3061 = vmatprep.mubr.f32.mxu0 %v2152
      %3062 = vmatmul.mubr.f32.gmra.mxu0 %v2151
      %v3063 = vpop.f32.mrf.mxu0
      %v3064 = vadd.f32 0.0, %v3063
      %v3065 = vpop.f32.mrf.mxu0
      %3066 = vmatprep.mubr.f32.mxu0 %v2154
      %3067 = vmatmul.mubr.f32.gmra.mxu0 %v2153
      %v3068 = vpop.f32.mrf.mxu0
      %v3069 = vadd.f32 0.0, %v3068
      %v3070 = vpop.f32.mrf.mxu0
      %3071 = vmatprep.mubr.f32.mxu0 %v2156
      %3072 = vmatmul.mubr.f32.gmra.mxu0 %v2155
      %v3073 = vpop.f32.mrf.mxu0
      %v3074 = vadd.f32 0.0, %v3073
      %v3075 = vpop.f32.mrf.mxu0
      %3076 = vmatprep.mubr.f32.mxu0 %v2158
      %3077 = vmatmul.mubr.f32.gmra.mxu0 %v2157
      %v3078 = vpop.f32.mrf.mxu0
      %v3079 = vadd.f32 0.0, %v3078
      %v3080 = vpop.f32.mrf.mxu0
      %3081 = vmatprep.mubr.f32.mxu0 %v2160
      %3082 = vmatmul.mubr.f32.gmra.mxu0 %v2159
      %v3083 = vpop.f32.mrf.mxu0
      %v3084 = vadd.f32 0.0, %v3083
      %v3085 = vpop.f32.mrf.mxu0
      %3086 = vmatprep.mubr.f32.mxu0 %v2162
      %3087 = vmatmul.mubr.f32.gmra.mxu0 %v2161
      %v3088 = vpop.f32.mrf.mxu0
      %v3089 = vadd.f32 0.0, %v3088
      %v3090 = vpop.f32.mrf.mxu0
      %3091 = vmatprep.mubr.f32.mxu0 %v2164
      %3092 = vmatmul.mubr.f32.gmra.mxu0 %v2163
      %v3093 = vpop.f32.mrf.mxu0
      %v3094 = vadd.f32 0.0, %v3093
      %v3095 = vpop.f32.mrf.mxu0
      %3096 = vmatprep.mubr.f32.mxu0 %v2166
      %3097 = vmatmul.mubr.f32.gmra.mxu0 %v2165
      %v3098 = vpop.f32.mrf.mxu0
      %v3099 = vadd.f32 0.0, %v3098
      %v3100 = vpop.f32.mrf.mxu0
      %3101 = vmatprep.mubr.f32.mxu0 %v2168
      %3102 = vmatmul.mubr.f32.gmra.mxu0 %v2167
      %v3103 = vpop.f32.mrf.mxu0
      %v3104 = vadd.f32 0.0, %v3103
      %v3105 = vpop.f32.mrf.mxu0
      %3106 = vmatprep.mubr.f32.mxu0 %v2170
      %3107 = vmatmul.mubr.f32.gmra.mxu0 %v2169
      %v3108 = vpop.f32.mrf.mxu0
      %v3109 = vadd.f32 0.0, %v3108
      %v3110 = vpop.f32.mrf.mxu0
      %3111 = vmatprep.mubr.f32.mxu0 %v2172
      %3112 = vmatmul.mubr.f32.gmra.mxu0 %v2171
      %v3113 = vpop.f32.mrf.mxu0
      %v3114 = vadd.f32 0.0, %v3113
      %v3115 = vpop.f32.mrf.mxu0
      %3116 = vmatprep.mubr.f32.mxu0 %v2174
      %3117 = vmatmul.mubr.f32.gmra.mxu0 %v2173
      %v3118 = vpop.f32.mrf.mxu0
      %v3119 = vadd.f32 0.0, %v3118
      %v3120 = vpop.f32.mrf.mxu0
      %3121 = vmatprep.mubr.f32.mxu0 %v2176
      %3122 = vmatmul.mubr.f32.gmra.mxu0 %v2175
      %v3123 = vpop.f32.mrf.mxu0
      %v3124 = vadd.f32 0.0, %v3123
      %v3125 = vpop.f32.mrf.mxu0
      %3126 = vmatprep.mubr.f32.mxu0 %v2178
      %3127 = vmatmul.mubr.f32.gmra.mxu0 %v2177
      %v3128 = vpop.f32.mrf.mxu0
      %v3129 = vadd.f32 0.0, %v3128
      %v3130 = vpop.f32.mrf.mxu0
      %3131 = vmatprep.mubr.f32.mxu0 %v2180
      %3132 = vmatmul.mubr.f32.gmra.mxu0 %v2179
      %v3133 = vpop.f32.mrf.mxu0
      %v3134 = vadd.f32 0.0, %v3133
      %v3135 = vpop.f32.mrf.mxu0
      %3136 = vmatprep.mubr.f32.mxu0 %v2182
      %3137 = vmatmul.mubr.f32.gmra.mxu0 %v2181
      %v3138 = vpop.f32.mrf.mxu0
      %v3139 = vadd.f32 0.0, %v3138
      %v3140 = vpop.f32.mrf.mxu0
      %3141 = vmatprep.mubr.f32.mxu0 %v2184
      %3142 = vmatmul.mubr.f32.gmra.mxu0 %v2183
      %v3143 = vpop.f32.mrf.mxu0
      %v3144 = vadd.f32 0.0, %v3143
      %v3145 = vpop.f32.mrf.mxu0
      %3146 = vmatprep.mubr.f32.mxu0 %v2186
      %3147 = vmatmul.mubr.f32.gmra.mxu0 %v2185
      %v3148 = vpop.f32.mrf.mxu0
      %v3149 = vadd.f32 0.0, %v3148
      %v3150 = vpop.f32.mrf.mxu0
      %3151 = vmatprep.mubr.f32.mxu0 %v2188
      %3152 = vmatmul.mubr.f32.gmra.mxu0 %v2187
      %v3153 = vpop.f32.mrf.mxu0
      %v3154 = vadd.f32 0.0, %v3153
      %v3155 = vpop.f32.mrf.mxu0
      %3156 = vmatprep.mubr.f32.mxu0 %v2190
      %3157 = vmatmul.mubr.f32.gmra.mxu0 %v2189
      %v3158 = vpop.f32.mrf.mxu0
      %v3159 = vadd.f32 0.0, %v3158
      %v3160 = vpop.f32.mrf.mxu0
      %3161 = vmatprep.mubr.f32.mxu0 %v2192
      %3162 = vmatmul.mubr.f32.gmra.mxu0 %v2191
      %v3163 = vpop.f32.mrf.mxu0
      %v3164 = vadd.f32 0.0, %v3163
      %v3165 = vpop.f32.mrf.mxu0
      %3166 = vmatprep.mubr.f32.mxu0 %v2194
      %3167 = vmatmul.mubr.f32.gmra.mxu0 %v2193
      %v3168 = vpop.f32.mrf.mxu0
      %v3169 = vadd.f32 0.0, %v3168
      %v3170 = vpop.f32.mrf.mxu0
      %3171 = vmatprep.mubr.f32.mxu0 %v2196
      %3172 = vmatmul.mubr.f32.gmra.mxu0 %v2195
      %v3173 = vpop.f32.mrf.mxu0
      %v3174 = vadd.f32 0.0, %v3173
      %v3175 = vpop.f32.mrf.mxu0
      %3176 = vmatprep.mubr.f32.mxu0 %v2198
      %3177 = vmatmul.mubr.f32.gmra.mxu0 %v2197
      %v3178 = vpop.f32.mrf.mxu0
      %v3179 = vadd.f32 0.0, %v3178
      %v3180 = vpop.f32.mrf.mxu0
      %3181 = vmatprep.mubr.f32.mxu0 %v2200
      %3182 = vmatmul.mubr.f32.gmra.mxu0 %v2199
      %v3183 = vpop.f32.mrf.mxu0
      %v3184 = vadd.f32 0.0, %v3183
      %v3185 = vpop.f32.mrf.mxu0
      %3186 = vmatprep.mubr.f32.mxu0 %v2202
      %3187 = vmatmul.mubr.f32.gmra.mxu0 %v2201
      %v3188 = vpop.f32.mrf.mxu0
      %v3189 = vadd.f32 0.0, %v3188
      %v3190 = vpop.f32.mrf.mxu0
      %3191 = vmatprep.mubr.f32.mxu0 %v2204
      %3192 = vmatmul.mubr.f32.gmra.mxu0 %v2203
      %v3193 = vpop.f32.mrf.mxu0
      %v3194 = vadd.f32 0.0, %v3193
      %v3195 = vpop.f32.mrf.mxu0
      %3196 = vmatprep.mubr.f32.mxu0 %v2206
      %3197 = vmatmul.mubr.f32.gmra.mxu0 %v2205
      %v3198 = vpop.f32.mrf.mxu0
      %v3199 = vadd.f32 0.0, %v3198
      %v3200 = vpop.f32.mrf.mxu0
      %3201 = vmatprep.mubr.f32.mxu0 %v2208
      %3202 = vmatmul.mubr.f32.gmra.mxu0 %v2207
      %v3203 = vpop.f32.mrf.mxu0
      %v3204 = vadd.f32 0.0, %v3203
      %v3205 = vpop.f32.mrf.mxu0
      %3206 = vmatprep.mubr.f32.mxu0 %v2210
      %3207 = vmatmul.mubr.f32.gmra.mxu0 %v2209
      %v3208 = vpop.f32.mrf.mxu0
      %v3209 = vadd.f32 0.0, %v3208
      %v3210 = vpop.f32.mrf.mxu0
      %3211 = vmatprep.mubr.f32.mxu0 %v2212
      %3212 = vmatmul.mubr.f32.gmra.mxu0 %v2211
      %v3213 = vpop.f32.mrf.mxu0
      %v3214 = vadd.f32 0.0, %v3213
      %v3215 = vpop.f32.mrf.mxu0
      %3216 = vmatprep.mubr.f32.mxu0 %v2214
      %3217 = vmatmul.mubr.f32.gmra.mxu0 %v2213
      %v3218 = vpop.f32.mrf.mxu0
      %v3219 = vadd.f32 0.0, %v3218
      %v3220 = vpop.f32.mrf.mxu0
      %3221 = vdwg.mxu0
      %3222 = vxpose.xlu0.b32.start [1/16] %v3064, 128
      %3223 = vxpose.xlu0.b32.cont [2/16] %v3069, 128
      %3224 = vxpose.xlu0.b32.cont [3/16] %v3074, 128
      %3225 = vxpose.xlu0.b32.cont [4/16] %v3079, 128
      %3226 = vxpose.xlu0.b32.cont [5/16] %v3084, 128
      %3227 = vxpose.xlu0.b32.cont [6/16] %v3089, 128
      %3228 = vxpose.xlu0.b32.cont [7/16] %v3094, 128
      %3229 = vxpose.xlu0.b32.cont [8/16] %v3099, 128
      %3230 = vxpose.xlu0.b32.cont [9/16] %v3104, 128
      %3231 = vxpose.xlu0.b32.cont [10/16] %v3109, 128
      %3232 = vxpose.xlu0.b32.cont [11/16] %v3114, 128
      %3233 = vxpose.xlu0.b32.cont [12/16] %v3119, 128
      %3234 = vxpose.xlu0.b32.cont [13/16] %v3124, 128
      %3235 = vxpose.xlu0.b32.cont [14/16] %v3129, 128
      %3236 = vxpose.xlu0.b32.cont [15/16] %v3134, 128
      %3237 = vxpose.xlu0.b32.end [16/16] %v3139, 128
      %v3238 = vpop.trf.xlu0
      %v3239 = vpop.trf.xlu0
      %v3240 = vpop.trf.xlu0
      %v3241 = vpop.trf.xlu0
      %v3242 = vpop.trf.xlu0
      %v3243 = vpop.trf.xlu0
      %v3244 = vpop.trf.xlu0
      %v3245 = vpop.trf.xlu0
      %v3246 = vpop.trf.xlu0
      %v3247 = vpop.trf.xlu0
      %v3248 = vpop.trf.xlu0
      %v3249 = vpop.trf.xlu0
      %v3250 = vpop.trf.xlu0
      %v3251 = vpop.trf.xlu0
      %v3252 = vpop.trf.xlu0
      %v3253 = vpop.trf.xlu0
      %3254 = vxpose.xlu0.b32.start [1/16] %v3144, 128
      %3255 = vxpose.xlu0.b32.cont [2/16] %v3149, 128
      %3256 = vxpose.xlu0.b32.cont [3/16] %v3154, 128
      %3257 = vxpose.xlu0.b32.cont [4/16] %v3159, 128
      %3258 = vxpose.xlu0.b32.cont [5/16] %v3164, 128
      %3259 = vxpose.xlu0.b32.cont [6/16] %v3169, 128
      %3260 = vxpose.xlu0.b32.cont [7/16] %v3174, 128
      %3261 = vxpose.xlu0.b32.cont [8/16] %v3179, 128
      %3262 = vxpose.xlu0.b32.cont [9/16] %v3184, 128
      %3263 = vxpose.xlu0.b32.cont [10/16] %v3189, 128
      %3264 = vxpose.xlu0.b32.cont [11/16] %v3194, 128
      %3265 = vxpose.xlu0.b32.cont [12/16] %v3199, 128
      %3266 = vxpose.xlu0.b32.cont [13/16] %v3204, 128
      %3267 = vxpose.xlu0.b32.cont [14/16] %v3209, 128
      %3268 = vxpose.xlu0.b32.cont [15/16] %v3214, 128
      %3269 = vxpose.xlu0.b32.end [16/16] %v3219, 128
      %v3270 = vpop.trf.xlu0
      %v3271 = vpop.trf.xlu0
      %v3272 = vpop.trf.xlu0
      %v3273 = vpop.trf.xlu0
      %v3274 = vpop.trf.xlu0
      %v3275 = vpop.trf.xlu0
      %v3276 = vpop.trf.xlu0
      %v3277 = vpop.trf.xlu0
      %v3278 = vpop.trf.xlu0
      %v3279 = vpop.trf.xlu0
      %v3280 = vpop.trf.xlu0
      %v3281 = vpop.trf.xlu0
      %v3282 = vpop.trf.xlu0
      %v3283 = vpop.trf.xlu0
      %v3284 = vpop.trf.xlu0
      %v3285 = vpop.trf.xlu0
      %v3286 = vld [vmem:[%s6] sm:$0x3]
      %v3288 = vlaneseq
      %v3289 = vshrl.u32 %v3288, 7
      %v3290 = vsub.s32 0, %v3289
      %v3291 = vrot.slane %v3286, %v3290
      %v3292 = vlaneseq
      %v3293 = vshrl.u32 %v3292, 7
      %v3294 = vsub.s32 1, %v3293
      %v3295 = vrot.slane %v3286, %v3294
      %v3298 = vadd.f32 %v3238, %v3291
      %v3299 = vadd.f32 %v3270, %v3295
      %v3302 = vcombine.low %v3298, %v3299
      %v3304 = vunpack.c.l.s4 1966171168
      %v3305 = vunpack.c.0.s8 %v3304
      %v3306 = vlaneseq
      %v3307 = vshrl.u32 %v3306, 7
      %v3308 = vsub.s32 %v3305, %v3307
      %v3309 = vrot.slane %v3302, %v3308
      %v3311 = vunpack.c.l.s4 1966171168
      %v3312 = vunpack.c.0.s8 %v3311
      %v3313 = vlaneseq
      %v3314 = vshrl.u32 %v3313, 7
      %v3315 = vsub.s32 %v3312, %v3314
      %v3316 = vrot.slane %v3309, %v3315
      %v3318 = vlaneseq
      %vm3319 = vcmp.ge.s32.totalorder %v3318, 0
      %vm3320 = vcmp.lt.s32.totalorder %v3318, 256
      %vm3321 = vmand %vm3319, %vm3320
      %3322 = vst.msk [vmem:[%s305] sm:$0x3] %vm3321, %v3316
      %p3323 = scmp.lt.s32.totalorder %s19, 1
      %s3324 = scalar_select %p3323, %s19, 1
      %s3325 = smul.addr %s3324, 2
      %s3326 = scalar_lea.vmem %s8, %s3325
      // Predicated region
      $region53: #{custom_attention.1} parent=51 // pred_check
        %p3327 = pneg %p210
      $region54: #{custom_attention.1} parent=51 // pred_check_branch
        %3329 = sbr.rel (%p3327) target = $region56
      $region55: #{custom_attention.1} parent=51 // pred_region
        _
      $region56: #{custom_attention.1} parent=51 // pred_fallthru
        _
    $region52: #{custom_attention.1} parent=5 // pred_fallthru
      _
    %p3330 = scmp.le.s32.totalorder 2, %s14
    // Predicated region
    $region57: #{custom_attention.1} parent=5 // pred_check
      %p3331 = pneg %p3330
    $region58: #{custom_attention.1} parent=5 // pred_check_branch
      %3333 = sbr.rel (%p3331) target = $region60
    $region59: #{custom_attention.1} parent=5 // pred_region
      %s3334 = ssub.s32 %s14, 2
      // Predicated region
      $region61: #{custom_attention.1} parent=59 // pred_check
        %p3335 = pneg %p216
      $region62: #{custom_attention.1} parent=59 // pred_check_branch
        %3337 = sbr.rel (%p3335) target = $region64
      $region63: #{custom_attention.1} parent=59 // pred_region
        %p3338 = scmp.lt.s32.totalorder %s20, 1
        %s3339 = scalar_select %p3338, %s20, 1
        %s3340 = smul.addr %s3339, 2
        %s3341 = scalar_lea.vmem %s8, %s3340
      $region64: #{custom_attention.1} parent=59 // pred_fallthru
        _
    $region60: #{custom_attention.1} parent=5 // pred_fallthru
      _
  $region6: #{custom_attention.1} parent=0 // loop_footer
    %s18 = sadd.s32 1, %s14
  $region7: #{custom_attention.1} parent=0 // loop_footer_branch
    %13 = sbr.rel target = $region3
  $region8: #{custom_attention.1} parent=0 // loop_exit
    _

</llo_original>
